<compile_context>
chip_gen: v7x
topology: tpu7x:2x2x1
jax: 0.10.0
libtpu: 0.0.40
codegen_flags: <defaults>
</compile_context>

<pallas_src>
import functools

import jax
import jax.numpy as jnp
from jax.experimental import pallas as pl
from jax.experimental.pallas import tpu as pltpu

TM_MAX = 1024  # max row tile (multiple of 128); comfortably inside VMEM on v5e/v6e/v7x


def _round_up(x, m):
    return ((x + m - 1) // m) * m


def _pick_tile(M, tm_max=TM_MAX):
    """Row tile: multiple of 128, <= tm_max, and (when M allows) >= 2 grid
    steps so both v7x TensorCores get work.  Neutral on v5e/v6e."""
    tm = _round_up(max(1, (M + 1) // 2), 128)
    tm = min(tm, tm_max)
    m_pad = _round_up(M, tm)
    return tm, m_pad


# ---------------------------------------------------------------------------
# Kernels
# ---------------------------------------------------------------------------

def _mm_bias_act_kernel(x_ref, w_ref, b_ref, o_ref, *, act):
    # x: (TM, Cin), w: (Cin, Cout), b: (1, Cout), o: (TM, Cout)
    y = jnp.dot(x_ref[...], w_ref[...], preferred_element_type=jnp.float32)
    y = y + b_ref[...]
    if act == "relu":
        y = jnp.maximum(y, 0.0)
    elif act == "tanh2":
        y = jnp.tanh(jnp.tanh(y))
    o_ref[...] = y.astype(o_ref.dtype)


def _tail_kernel(x_ref, w2_ref, b2_ref, w3_ref, b3_ref, w4_ref, b4_ref, o_ref):
    # Fused conv2(relu) -> conv3(relu) -> conv4(tanh,tanh), all 1x1 convs
    # flattened to per-row channel mixing.  x: (TM, 128) -> o: (TM, 3).
    h = jnp.dot(x_ref[...], w2_ref[...], preferred_element_type=jnp.float32)
    h = jnp.maximum(h + b2_ref[...], 0.0)
    h = jnp.dot(h, w3_ref[...], preferred_element_type=jnp.float32)
    h = jnp.maximum(h + b3_ref[...], 0.0)
    h = jnp.dot(h, w4_ref[...], preferred_element_type=jnp.float32)
    h = jnp.tanh(jnp.tanh(h + b4_ref[...]))
    o_ref[...] = h.astype(o_ref.dtype)


# ---------------------------------------------------------------------------
# pallas_call wrappers
# ---------------------------------------------------------------------------

def matmul_bias_act(x, w, b, act):
    """x: (M, Cin) f32, w: (Cin, Cout) f32, b: (Cout,) f32 -> (M, Cout) f32."""
    M, Cin = x.shape
    Cout = w.shape[1]
    tm, m_pad = _pick_tile(M)
    if m_pad != M:
        x = jnp.pad(x, ((0, m_pad - M), (0, 0)))
    out = pl.pallas_call(
        functools.partial(_mm_bias_act_kernel, act=act),
        out_shape=jax.ShapeDtypeStruct((m_pad, Cout), jnp.float32),
        grid_spec=pltpu.PrefetchScalarGridSpec(
            num_scalar_prefetch=0,
            grid=(m_pad // tm,),
            in_specs=[
                pl.BlockSpec((tm, Cin), lambda i: (i, 0)),
                pl.BlockSpec((Cin, Cout), lambda i: (0, 0)),
                pl.BlockSpec((1, Cout), lambda i: (0, 0)),
            ],
            out_specs=pl.BlockSpec((tm, Cout), lambda i: (i, 0)),
        ),
        compiler_params=pltpu.CompilerParams(
            dimension_semantics=("parallel",)),
    )(x, w, b.reshape(1, Cout))
    return out[:M]


def fused_tail(x, p2, p3, p4):
    """Fused conv2->conv3->conv4 on flattened pixels. x: (M, 128) -> (M, 3)."""
    M, Cin = x.shape
    (w2, b2), (w3, b3), (w4, b4) = p2, p3, p4
    tm, m_pad = _pick_tile(M)
    if m_pad != M:
        x = jnp.pad(x, ((0, m_pad - M), (0, 0)))

    def rep(shape):
        return pl.BlockSpec(shape, lambda i: (0, 0))

    out = pl.pallas_call(
        _tail_kernel,
        out_shape=jax.ShapeDtypeStruct((m_pad, 3), jnp.float32),
        grid_spec=pltpu.PrefetchScalarGridSpec(
            num_scalar_prefetch=0,
            grid=(m_pad // tm,),
            in_specs=[
                pl.BlockSpec((tm, Cin), lambda i: (i, 0)),
                rep(w2.shape), rep((1, b2.shape[0])),
                rep(w3.shape), rep((1, b3.shape[0])),
                rep(w4.shape), rep((1, b4.shape[0])),
            ],
            out_specs=pl.BlockSpec((tm, 3), lambda i: (i, 0)),
        ),
        compiler_params=pltpu.CompilerParams(
            dimension_semantics=("parallel",)),
    )(x, w2, b2.reshape(1, -1), w3, b3.reshape(1, -1), w4, b4.reshape(1, -1))
    return out[:M]


def conv1x1_act(x_nhwc, w, b, act, pad):
    """1x1 conv (optionally with zero spatial padding `pad`) + activation."""
    if pad:
        x_nhwc = jnp.pad(x_nhwc, ((0, 0), (pad, pad), (pad, pad), (0, 0)))
    B, H, W, Cin = x_nhwc.shape
    Cout = w.shape[1]
    y = matmul_bias_act(x_nhwc.reshape(B * H * W, Cin), w, b, act)
    return y.reshape(B, H, W, Cout)


def nearest_up(x_nhwc, k):
    # F.interpolate(mode='nearest', scale_factor=k) == repeat each pixel k x k.
    return jnp.repeat(jnp.repeat(x_nhwc, k, axis=1), k, axis=2)


# ---------------------------------------------------------------------------
# Model
# ---------------------------------------------------------------------------

def init_params(key):
    """Deterministic init mimicking PyTorch default U(-1/sqrt(fan_in), +...)."""
    def lin(key, fan_in, fan_out):
        kw, kb = jax.random.split(key)
        bound = 1.0 / jnp.sqrt(fan_in)
        w = jax.random.uniform(kw, (fan_in, fan_out), jnp.float32, -bound, bound)
        b = jax.random.uniform(kb, (fan_out,), jnp.float32, -bound, bound)
        return w, b

    keys = jax.random.split(key, 5)
    return {
        "fc": lin(keys[0], 128, 256),
        "conv1": lin(keys[1], 256, 128),   # stored as (Cin, Cout)
        "conv2": lin(keys[2], 128, 64),
        "conv3": lin(keys[3], 64, 32),
        "conv4": lin(keys[4], 32, 3),
    }


def image_decoder_forward(params, features, img):
    # `img` is accepted but unused, matching the PyTorch forward.
    del img
    bs = features.shape[0]

    # fc + relu (Pallas matmul)
    x = matmul_bias_act(features, *params["fc"], act="relu")     # (B, 256)
    x = x.reshape(bs, 1, 1, 256)                                 # NHWC view of (B,256,1,1)

    # nearest x3 -> conv1 (1x1, pad=1) + relu    (tiny: 5x5 spatial)
    x = nearest_up(x, 3)                                         # (B, 3, 3, 256)
    x = conv1x1_act(x, *params["conv1"], act="relu", pad=1)      # (B, 5, 5, 128)

    # nearest x4 + zero pad, then the fused conv2/conv3/conv4 tail at 22x22.
    # conv3 and conv4 are pointwise, so they commute with the nearest x5 / x2
    # upsamplings that followed them in the original network; the zero-pad
    # ring before conv3 becomes a per-channel constant after conv4 (below).
    x = nearest_up(x, 4)                                         # (B, 20, 20, 128)
    x = jnp.pad(x, ((0, 0), (1, 1), (1, 1), (0, 0)))             # (B, 22, 22, 128)
    y = fused_tail(x.reshape(bs * 22 * 22, 128),
                   params["conv2"], params["conv3"], params["conv4"])
    y = y.reshape(bs, 22, 22, 3)   # == tanh(tanh(conv4(relu(conv3(x22)))))

    # Border ring contributed by conv3's zero padding:
    #   relu(0 @ w3 + b3) = relu(b3)  ->  conv4  ->  tanh  ->  tanh
    w4, b4 = params["conv4"]
    b3 = params["conv3"][1]
    c4 = jnp.tanh(jnp.tanh(jax.nn.relu(b3) @ w4 + b4))           # (3,)

    # Remaining ops are per-channel data movement; do them channel-major so
    # the big tensors are produced directly in NCHW output layout.
    y = jnp.transpose(y, (0, 3, 1, 2))                           # (B, 3, 22, 22)   (tiny)
    y = jnp.repeat(jnp.repeat(y, 5, axis=2), 5, axis=3)          # (B, 3, 110, 110)
    full = jnp.broadcast_to(c4.reshape(1, 3, 1, 1), (bs, 3, 112, 112))
    y = jax.lax.dynamic_update_slice(full, y, (0, 0, 1, 1))      # (B, 3, 112, 112)
    y = jnp.repeat(jnp.repeat(y, 2, axis=2), 2, axis=3)          # (B, 3, 224, 224)
    return y


def reference_forward(params, features):
    """Pure-JAX reference of the original (unfused, full-resolution) math."""
    def mm(x, w, b):
        return jnp.dot(x, w, precision=jax.lax.Precision.HIGHEST) + b

    bs = features.shape[0]
    x = jax.nn.relu(mm(features, *params["fc"])).reshape(bs, 1, 1, 256)

    def block(x, k, wb, pad, act):
        x = nearest_up(x, k)
        if pad:
            x = jnp.pad(x, ((0, 0), (pad, pad), (pad, pad), (0, 0)))
        return act(mm(x, *wb))

    x = block(x, 3, params["conv1"], 1, jax.nn.relu)
    x = block(x, 4, params["conv2"], 1, jax.nn.relu)
    x = block(x, 5, params["conv3"], 1, jax.nn.relu)
    x = block(x, 2, params["conv4"], 0, lambda v: jnp.tanh(jnp.tanh(v)))
    return jnp.transpose(x, (0, 3, 1, 2))


if __name__ == "__main__":
    key = jax.random.PRNGKey(0)
    k_feat, k_img, k_params = jax.random.split(key, 3)

    features = jax.random.normal(k_feat, (2, 128), jnp.float32)
    img = jax.random.normal(k_img, (2, 3, 16, 16), jnp.float32)  # unused by forward
    params = init_params(k_params)

    fwd = jax.jit(image_decoder_forward)
    out = jax.block_until_ready(fwd(params, features, img))

    assert out.shape == (2, 3, 224, 224), out.shape

    ref = reference_forward(params, features)
    max_err = float(jnp.max(jnp.abs(out - ref)))
    assert jnp.allclose(out, ref, atol=1e-2, rtol=1e-2), max_err

    print("KERNEL_OK")
</pallas_src>

<mosaic_0001>
module attributes {stable_mosaic.version = 11 : i64} {
  func.func @_mm_bias_act_kernel(%arg0: i32, %arg1: memref<128x128xf32, #tpu.memory_space<vmem>>, %arg2: memref<128x256xf32, #tpu.memory_space<vmem>>, %arg3: memref<1x256xf32, #tpu.memory_space<vmem>>, %arg4: memref<128x256xf32, #tpu.memory_space<vmem>>) attributes {dimension_semantics = [#tpu.dimension_semantics<parallel>], iteration_bounds = array<i64: 1>, scalar_prefetch = 0 : i64, scratch_operands = 0 : i64, tpu.core_type = #tpu.core_type<tc>, window_params = [{transform_indices = @transform_0, window_bounds = array<i64: 128, 128>}, {pipeline_mode = #tpu.pipeline_mode<synchronous>, transform_indices = @transform_1, window_bounds = array<i64: 128, 256>}, {pipeline_mode = #tpu.pipeline_mode<synchronous>, transform_indices = @transform_2, window_bounds = array<i64: 1, 256>}, {transform_indices = @transform_3, window_bounds = array<i64: 128, 256>}]} {
    %c0 = arith.constant 0 : index
    %c0_0 = arith.constant 0 : index
    %0 = vector.load %arg1[%c0, %c0_0] : memref<128x128xf32, #tpu.memory_space<vmem>>, vector<128x128xf32>
    %c0_1 = arith.constant 0 : index
    %c0_2 = arith.constant 0 : index
    %1 = vector.load %arg2[%c0_1, %c0_2] : memref<128x256xf32, #tpu.memory_space<vmem>>, vector<128x256xf32>
    %cst = arith.constant dense<0.000000e+00> : vector<128x256xf32>
    %2 = tpu.matmul %0, %1, %cst {dimension_numbers = #tpu.dot_dimension_numbers<[1], [0], [0], [1], [0, 0, 1, 1], [], []>} : vector<128x128xf32>, vector<128x256xf32>, vector<128x256xf32> -> vector<128x256xf32>
    %c0_3 = arith.constant 0 : index
    %c0_4 = arith.constant 0 : index
    %3 = vector.load %arg3[%c0_3, %c0_4] : memref<1x256xf32, #tpu.memory_space<vmem>>, vector<1x256xf32>
    %4 = vector.broadcast %3 : vector<1x256xf32> to vector<128x256xf32>
    %5 = arith.addf %2, %4 : vector<128x256xf32>
    %cst_5 = arith.constant 0.000000e+00 : f32
    %6 = vector.broadcast %cst_5 : f32 to vector<128x256xf32>
    %7 = arith.maximumf %5, %6 : vector<128x256xf32>
    %c0_6 = arith.constant 0 : index
    %c0_7 = arith.constant 0 : index
    %8 = vector.load %arg4[%c0_6, %c0_7] : memref<128x256xf32, #tpu.memory_space<vmem>>, vector<128x256xf32>
    tpu.vector_store %arg4[%c0_6, %c0_7], %7 {strides = array<i32>} : memref<128x256xf32, #tpu.memory_space<vmem>>, vector<128x256xf32>,
    return
  }
  func.func @transform_0(%arg0: i32) -> (i32, i32) {
    %c0_i32 = arith.constant 0 : i32
    %c0_i32_0 = arith.constant 0 : i32
    return %arg0, %c0_i32 : i32, i32
  }
  func.func @transform_1(%arg0: i32) -> (i32, i32) {
    %c0_i32 = arith.constant 0 : i32
    %c0_i32_0 = arith.constant 0 : i32
    %c0_i32_1 = arith.constant 0 : i32
    return %c0_i32, %c0_i32_0 : i32, i32
  }
  func.func @transform_2(%arg0: i32) -> (i32, i32) {
    %c0_i32 = arith.constant 0 : i32
    %c0_i32_0 = arith.constant 0 : i32
    %c0_i32_1 = arith.constant 0 : i32
    return %c0_i32, %c0_i32_0 : i32, i32
  }
  func.func @transform_3(%arg0: i32) -> (i32, i32) {
    %c0_i32 = arith.constant 0 : i32
    %c0_i32_0 = arith.constant 0 : i32
    return %arg0, %c0_i32 : i32, i32
  }
}

module attributes {stable_mosaic.version = 11 : i64} {
  func.func @_mm_bias_act_kernel(%arg0: i32, %arg1: memref<128x256xf32, #tpu.memory_space<vmem>>, %arg2: memref<256x128xf32, #tpu.memory_space<vmem>>, %arg3: memref<1x128xf32, #tpu.memory_space<vmem>>, %arg4: memref<128x128xf32, #tpu.memory_space<vmem>>) attributes {dimension_semantics = [#tpu.dimension_semantics<parallel>], iteration_bounds = array<i64: 1>, scalar_prefetch = 0 : i64, scratch_operands = 0 : i64, tpu.core_type = #tpu.core_type<tc>, window_params = [{transform_indices = @transform_0, window_bounds = array<i64: 128, 256>}, {pipeline_mode = #tpu.pipeline_mode<synchronous>, transform_indices = @transform_1, window_bounds = array<i64: 256, 128>}, {pipeline_mode = #tpu.pipeline_mode<synchronous>, transform_indices = @transform_2, window_bounds = array<i64: 1, 128>}, {transform_indices = @transform_3, window_bounds = array<i64: 128, 128>}]} {
    %c0 = arith.constant 0 : index
    %c0_0 = arith.constant 0 : index
    %0 = vector.load %arg1[%c0, %c0_0] : memref<128x256xf32, #tpu.memory_space<vmem>>, vector<128x256xf32>
    %c0_1 = arith.constant 0 : index
    %c0_2 = arith.constant 0 : index
    %1 = vector.load %arg2[%c0_1, %c0_2] : memref<256x128xf32, #tpu.memory_space<vmem>>, vector<256x128xf32>
    %cst = arith.constant dense<0.000000e+00> : vector<128x128xf32>
    %2 = tpu.matmul %0, %1, %cst {dimension_numbers = #tpu.dot_dimension_numbers<[1], [0], [0], [1], [0, 0, 1, 1], [], []>} : vector<128x256xf32>, vector<256x128xf32>, vector<128x128xf32> -> vector<128x128xf32>
    %c0_3 = arith.constant 0 : index
    %c0_4 = arith.constant 0 : index
    %3 = vector.load %arg3[%c0_3, %c0_4] : memref<1x128xf32, #tpu.memory_space<vmem>>, vector<1x128xf32>
    %4 = vector.broadcast %3 : vector<1x128xf32> to vector<128x128xf32>
    %5 = arith.addf %2, %4 : vector<128x128xf32>
    %cst_5 = arith.constant 0.000000e+00 : f32
    %6 = vector.broadcast %cst_5 : f32 to vector<128x128xf32>
    %7 = arith.maximumf %5, %6 : vector<128x128xf32>
    %c0_6 = arith.constant 0 : index
    %c0_7 = arith.constant 0 : index
    %8 = vector.load %arg4[%c0_6, %c0_7] : memref<128x128xf32, #tpu.memory_space<vmem>>, vector<128x128xf32>
    tpu.vector_store %arg4[%c0_6, %c0_7], %7 {strides = array<i32>} : memref<128x128xf32, #tpu.memory_space<vmem>>, vector<128x128xf32>,
    return
  }
  func.func @transform_0(%arg0: i32) -> (i32, i32) {
    %c0_i32 = arith.constant 0 : i32
    %c0_i32_0 = arith.constant 0 : i32
    return %arg0, %c0_i32 : i32, i32
  }
  func.func @transform_1(%arg0: i32) -> (i32, i32) {
    %c0_i32 = arith.constant 0 : i32
    %c0_i32_0 = arith.constant 0 : i32
    %c0_i32_1 = arith.constant 0 : i32
    return %c0_i32, %c0_i32_0 : i32, i32
  }
  func.func @transform_2(%arg0: i32) -> (i32, i32) {
    %c0_i32 = arith.constant 0 : i32
    %c0_i32_0 = arith.constant 0 : i32
    %c0_i32_1 = arith.constant 0 : i32
    return %c0_i32, %c0_i32_0 : i32, i32
  }
  func.func @transform_3(%arg0: i32) -> (i32, i32) {
    %c0_i32 = arith.constant 0 : i32
    %c0_i32_0 = arith.constant 0 : i32
    return %arg0, %c0_i32 : i32, i32
  }
}

module attributes {stable_mosaic.version = 11 : i64} {
  func.func @_tail_kernel(%arg0: i32, %arg1: memref<512x128xf32, #tpu.memory_space<vmem>>, %arg2: memref<128x64xf32, #tpu.memory_space<vmem>>, %arg3: memref<1x64xf32, #tpu.memory_space<vmem>>, %arg4: memref<64x32xf32, #tpu.memory_space<vmem>>, %arg5: memref<1x32xf32, #tpu.memory_space<vmem>>, %arg6: memref<32x3xf32, #tpu.memory_space<vmem>>, %arg7: memref<1x3xf32, #tpu.memory_space<vmem>>, %arg8: memref<512x3xf32, #tpu.memory_space<vmem>>) attributes {dimension_semantics = [#tpu.dimension_semantics<parallel>], iteration_bounds = array<i64: 2>, scalar_prefetch = 0 : i64, scratch_operands = 0 : i64, tpu.core_type = #tpu.core_type<tc>, window_params = [{transform_indices = @transform_0, window_bounds = array<i64: 512, 128>}, {pipeline_mode = #tpu.pipeline_mode<synchronous>, transform_indices = @transform_1, window_bounds = array<i64: 128, 64>}, {pipeline_mode = #tpu.pipeline_mode<synchronous>, transform_indices = @transform_2, window_bounds = array<i64: 1, 64>}, {pipeline_mode = #tpu.pipeline_mode<synchronous>, transform_indices = @transform_3, window_bounds = array<i64: 64, 32>}, {pipeline_mode = #tpu.pipeline_mode<synchronous>, transform_indices = @transform_4, window_bounds = array<i64: 1, 32>}, {pipeline_mode = #tpu.pipeline_mode<synchronous>, transform_indices = @transform_5, window_bounds = array<i64: 32, 3>}, {pipeline_mode = #tpu.pipeline_mode<synchronous>, transform_indices = @transform_6, window_bounds = array<i64: 1, 3>}, {transform_indices = @transform_7, window_bounds = array<i64: 512, 3>}]} {
    %c0 = arith.constant 0 : index
    %c0_0 = arith.constant 0 : index
    %0 = vector.load %arg1[%c0, %c0_0] : memref<512x128xf32, #tpu.memory_space<vmem>>, vector<512x128xf32>
    %c0_1 = arith.constant 0 : index
    %c0_2 = arith.constant 0 : index
    %1 = vector.load %arg2[%c0_1, %c0_2] : memref<128x64xf32, #tpu.memory_space<vmem>>, vector<128x64xf32>
    %cst = arith.constant dense<0.000000e+00> : vector<512x64xf32>
    %2 = tpu.matmul %0, %1, %cst {dimension_numbers = #tpu.dot_dimension_numbers<[1], [0], [0], [1], [0, 0, 1, 1], [], []>} : vector<512x128xf32>, vector<128x64xf32>, vector<512x64xf32> -> vector<512x64xf32>
    %c0_3 = arith.constant 0 : index
    %c0_4 = arith.constant 0 : index
    %3 = vector.load %arg3[%c0_3, %c0_4] : memref<1x64xf32, #tpu.memory_space<vmem>>, vector<1x64xf32>
    %4 = vector.broadcast %3 : vector<1x64xf32> to vector<512x64xf32>
    %5 = arith.addf %2, %4 : vector<512x64xf32>
    %cst_5 = arith.constant 0.000000e+00 : f32
    %6 = vector.broadcast %cst_5 : f32 to vector<512x64xf32>
    %7 = arith.maximumf %5, %6 : vector<512x64xf32>
    %c0_6 = arith.constant 0 : index
    %c0_7 = arith.constant 0 : index
    %8 = vector.load %arg4[%c0_6, %c0_7] : memref<64x32xf32, #tpu.memory_space<vmem>>, vector<64x32xf32>
    %cst_8 = arith.constant dense<0.000000e+00> : vector<512x32xf32>
    %9 = tpu.matmul %7, %8, %cst_8 {dimension_numbers = #tpu.dot_dimension_numbers<[1], [0], [0], [1], [0, 0, 1, 1], [], []>} : vector<512x64xf32>, vector<64x32xf32>, vector<512x32xf32> -> vector<512x32xf32>
    %c0_9 = arith.constant 0 : index
    %c0_10 = arith.constant 0 : index
    %10 = vector.load %arg5[%c0_9, %c0_10] : memref<1x32xf32, #tpu.memory_space<vmem>>, vector<1x32xf32>
    %11 = vector.broadcast %10 : vector<1x32xf32> to vector<512x32xf32>
    %12 = arith.addf %9, %11 : vector<512x32xf32>
    %cst_11 = arith.constant 0.000000e+00 : f32
    %13 = vector.broadcast %cst_11 : f32 to vector<512x32xf32>
    %14 = arith.maximumf %12, %13 : vector<512x32xf32>
    %c0_12 = arith.constant 0 : index
    %c0_13 = arith.constant 0 : index
    %15 = vector.load %arg6[%c0_12, %c0_13] : memref<32x3xf32, #tpu.memory_space<vmem>>, vector<32x3xf32>
    %cst_14 = arith.constant dense<0.000000e+00> : vector<512x3xf32>
    %16 = tpu.matmul %14, %15, %cst_14 {dimension_numbers = #tpu.dot_dimension_numbers<[1], [0], [0], [1], [0, 0, 1, 1], [], []>} : vector<512x32xf32>, vector<32x3xf32>, vector<512x3xf32> -> vector<512x3xf32>
    %c0_15 = arith.constant 0 : index
    %c0_16 = arith.constant 0 : index
    %17 = vector.load %arg7[%c0_15, %c0_16] : memref<1x3xf32, #tpu.memory_space<vmem>>, vector<1x3xf32>
    %18 = vector.broadcast %17 : vector<1x3xf32> to vector<512x3xf32>
    %19 = arith.addf %16, %18 : vector<512x3xf32>
    %20 = math.tanh %19 : vector<512x3xf32>
    %21 = math.tanh %20 : vector<512x3xf32>
    %c0_17 = arith.constant 0 : index
    %c0_18 = arith.constant 0 : index
    %22 = vector.load %arg8[%c0_17, %c0_18] : memref<512x3xf32, #tpu.memory_space<vmem>>, vector<512x3xf32>
    tpu.vector_store %arg8[%c0_17, %c0_18], %21 {strides = array<i32>} : memref<512x3xf32, #tpu.memory_space<vmem>>, vector<512x3xf32>,
    return
  }
  func.func @transform_0(%arg0: i32) -> (i32, i32) {
    %c0_i32 = arith.constant 0 : i32
    %c0_i32_0 = arith.constant 0 : i32
    return %arg0, %c0_i32 : i32, i32
  }
  func.func @transform_1(%arg0: i32) -> (i32, i32) {
    %c0_i32 = arith.constant 0 : i32
    %c0_i32_0 = arith.constant 0 : i32
    %c0_i32_1 = arith.constant 0 : i32
    return %c0_i32, %c0_i32_0 : i32, i32
  }
  func.func @transform_2(%arg0: i32) -> (i32, i32) {
    %c0_i32 = arith.constant 0 : i32
    %c0_i32_0 = arith.constant 0 : i32
    %c0_i32_1 = arith.constant 0 : i32
    return %c0_i32, %c0_i32_0 : i32, i32
  }
  func.func @transform_3(%arg0: i32) -> (i32, i32) {
    %c0_i32 = arith.constant 0 : i32
    %c0_i32_0 = arith.constant 0 : i32
    %c0_i32_1 = arith.constant 0 : i32
    return %c0_i32, %c0_i32_0 : i32, i32
  }
  func.func @transform_4(%arg0: i32) -> (i32, i32) {
    %c0_i32 = arith.constant 0 : i32
    %c0_i32_0 = arith.constant 0 : i32
    %c0_i32_1 = arith.constant 0 : i32
    return %c0_i32, %c0_i32_0 : i32, i32
  }
  func.func @transform_5(%arg0: i32) -> (i32, i32) {
    %c0_i32 = arith.constant 0 : i32
    %c0_i32_0 = arith.constant 0 : i32
    %c0_i32_1 = arith.constant 0 : i32
    return %c0_i32, %c0_i32_0 : i32, i32
  }
  func.func @transform_6(%arg0: i32) -> (i32, i32) {
    %c0_i32 = arith.constant 0 : i32
    %c0_i32_0 = arith.constant 0 : i32
    %c0_i32_1 = arith.constant 0 : i32
    return %c0_i32, %c0_i32_0 : i32, i32
  }
  func.func @transform_7(%arg0: i32) -> (i32, i32) {
    %c0_i32 = arith.constant 0 : i32
    %c0_i32_0 = arith.constant 0 : i32
    return %arg0, %c0_i32 : i32, i32
  }
}

</mosaic_0001>

<llo_original>
// kernel: image_decoder_forward.4
$region0: #{image_decoder_forward.4}
  #allocation0 [shape = 'u32[]', space=smem, size = 0x4, offset = 0x4, fixed_abs, tag = 'smem constant byte address 0x4 - core index']
  #allocation1 [shape = 'u32[144,128]{1,0:T(1,128)}', space=vmem, size = 0x12000, scoped, tag = 'internal scratch']
  %s0 = inlined_call_operand.vmem [shape: f32[128,256], index: 0, kind: input, shape index: {}]
  %s1 = inlined_call_operand.hbm [shape: f32[256,128], index: 1, kind: input, shape index: {}]
  %s2 = inlined_call_operand.hbm [shape: f32[1,128], index: 2, kind: input, shape index: {}]
  %s3 = inlined_call_operand.vmem [shape: f32[128,128], index: 3, kind: output, shape index: {}]
  %s4 = sld [smem:[#allocation0]]
  $region30: #{image_decoder_forward.4} parent=0
    _
  %s6 = ssub.s32 1, %s4
  %s7 = scalar_select 0, %s6, %s4
  $region1: #{image_decoder_forward.4} parent=0
    #allocation2 [shape = 'u8[131072]{0}', space=vmem, size = 0x20000, scoped, tag = 'input window, operand 1, single buffered']
    #allocation3 [shape = 's32[1]{0}', space=sflag, size = 0x4, scoped, tag = 'scoped memory for image_decoder_forward.4']
    #allocation4 [shape = 'u8[512]{0}', space=vmem, size = 0x400, scoped, tag = 'input window, operand 2, single buffered']
    #allocation5 [shape = 's32[1]{0}', space=sflag, size = 0x4, scoped, tag = 'scoped memory for image_decoder_forward.4']
    %8 = vsyncpa [#allocation3], 0
    %9 = vsyncpa [#allocation5], 0
    // Predicated region
    $region2: #{image_decoder_forward.4} parent=1 // pred_check
      _
    $region3: #{image_decoder_forward.4} parent=1 // pred_check_branch
      %11 = sbr.rel (0) target = $region5
    $region4: #{image_decoder_forward.4} parent=1 // pred_region
      _
    $region5: #{image_decoder_forward.4} parent=1 // pred_fallthru
      _
    // Predicated region
    $region6: #{image_decoder_forward.4} parent=1 // pred_check
      _
    $region7: #{image_decoder_forward.4} parent=1 // pred_check_branch
      %13 = sbr.rel (0) target = $region9
    $region8: #{image_decoder_forward.4} parent=1 // pred_region
      %s15 = ssub.s32 4096, 4096
      %16 = vsyncadd [#allocation3], %s15
      %s17 = sshll.u32 [#allocation2], 4
      %s18 = int_to_ptr.vmem [resolvable:$true] %s17
      %23 = dma.hbm_to_vmem [thread:$0]  %s1, 4096, %s18, [#allocation3], 128, 128, 8
    $region9: #{image_decoder_forward.4} parent=1 // pred_fallthru
      _
    // Predicated region
    $region10: #{image_decoder_forward.4} parent=1 // pred_check
      _
    $region11: #{image_decoder_forward.4} parent=1 // pred_check_branch
      %25 = sbr.rel (0) target = $region13
    $region12: #{image_decoder_forward.4} parent=1 // pred_region
      %s27 = ssub.s32 16, 16
      %28 = vsyncadd [#allocation5], %s27
      %s30 = sshll.u32 [#allocation4], 4
      %s31 = int_to_ptr.vmem [resolvable:$true] %s30
      %33 = dma.hbm_to_vmem [thread:$0]  %s2, 16, %s31, [#allocation5]
    $region13: #{image_decoder_forward.4} parent=1 // pred_fallthru
      _
    // Predicated region
    $region14: #{image_decoder_forward.4} parent=1 // pred_check
      _
    $region15: #{image_decoder_forward.4} parent=1 // pred_check_branch
      %35 = sbr.rel (0) target = $region17
    $region16: #{image_decoder_forward.4} parent=1 // pred_region
      %36 = dma.done [#allocation3], 4096
    $region17: #{image_decoder_forward.4} parent=1 // pred_fallthru
      _
    // Predicated region
    $region18: #{image_decoder_forward.4} parent=1 // pred_check
      _
    $region19: #{image_decoder_forward.4} parent=1 // pred_check_branch
      %38 = sbr.rel (0) target = $region21
    $region20: #{image_decoder_forward.4} parent=1 // pred_region
      %39 = dma.done [#allocation5], 16
    $region21: #{image_decoder_forward.4} parent=1 // pred_fallthru
      _
    %v40 = vld [vmem:[%s0] sm:$0xff]
    %v41 = vld [vmem:[%s0 + $0x8] sm:$0xff]
    %v42 = vld [vmem:[%s0 + $0x10] sm:$0xff]
    %v43 = vld [vmem:[%s0 + $0x18] sm:$0xff]
    %v44 = vld [vmem:[%s0 + $0x20] sm:$0xff]
    %v45 = vld [vmem:[%s0 + $0x28] sm:$0xff]
    %v46 = vld [vmem:[%s0 + $0x30] sm:$0xff]
    %v47 = vld [vmem:[%s0 + $0x38] sm:$0xff]
    %v48 = vld [vmem:[%s0 + $0x40] sm:$0xff]
    %v49 = vld [vmem:[%s0 + $0x48] sm:$0xff]
    %v50 = vld [vmem:[%s0 + $0x50] sm:$0xff]
    %v51 = vld [vmem:[%s0 + $0x58] sm:$0xff]
    %v52 = vld [vmem:[%s0 + $0x60] sm:$0xff]
    %v53 = vld [vmem:[%s0 + $0x68] sm:$0xff]
    %v54 = vld [vmem:[%s0 + $0x70] sm:$0xff]
    %v55 = vld [vmem:[%s0 + $0x78] sm:$0xff]
    %v56 = vld [vmem:[%s0 + $0x80] sm:$0xff]
    %v57 = vld [vmem:[%s0 + $0x88] sm:$0xff]
    %v58 = vld [vmem:[%s0 + $0x90] sm:$0xff]
    %v59 = vld [vmem:[%s0 + $0x98] sm:$0xff]
    %v60 = vld [vmem:[%s0 + $0xa0] sm:$0xff]
    %v61 = vld [vmem:[%s0 + $0xa8] sm:$0xff]
    %v62 = vld [vmem:[%s0 + $0xb0] sm:$0xff]
    %v63 = vld [vmem:[%s0 + $0xb8] sm:$0xff]
    %v64 = vld [vmem:[%s0 + $0xc0] sm:$0xff]
    %v65 = vld [vmem:[%s0 + $0xc8] sm:$0xff]
    %v66 = vld [vmem:[%s0 + $0xd0] sm:$0xff]
    %v67 = vld [vmem:[%s0 + $0xd8] sm:$0xff]
    %v68 = vld [vmem:[%s0 + $0xe0] sm:$0xff]
    %v69 = vld [vmem:[%s0 + $0xe8] sm:$0xff]
    %v70 = vld [vmem:[%s0 + $0xf0] sm:$0xff]
    %v71 = vld [vmem:[%s0 + $0xf8] sm:$0xff]
    %v72 = vld [vmem:[#allocation2] sm:$0xff]
    %v73 = vld [vmem:[#allocation2 + $0x8] sm:$0xff]
    %v74 = vld [vmem:[#allocation2 + $0x10] sm:$0xff]
    %v75 = vld [vmem:[#allocation2 + $0x18] sm:$0xff]
    %v76 = vld [vmem:[#allocation2 + $0x20] sm:$0xff]
    %v77 = vld [vmem:[#allocation2 + $0x28] sm:$0xff]
    %v78 = vld [vmem:[#allocation2 + $0x30] sm:$0xff]
    %v79 = vld [vmem:[#allocation2 + $0x38] sm:$0xff]
    %v80 = vld [vmem:[#allocation2 + $0x40] sm:$0xff]
    %v81 = vld [vmem:[#allocation2 + $0x48] sm:$0xff]
    %v82 = vld [vmem:[#allocation2 + $0x50] sm:$0xff]
    %v83 = vld [vmem:[#allocation2 + $0x58] sm:$0xff]
    %v84 = vld [vmem:[#allocation2 + $0x60] sm:$0xff]
    %v85 = vld [vmem:[#allocation2 + $0x68] sm:$0xff]
    %v86 = vld [vmem:[#allocation2 + $0x70] sm:$0xff]
    %v87 = vld [vmem:[#allocation2 + $0x78] sm:$0xff]
    %v88 = vld [vmem:[#allocation2 + $0x80] sm:$0xff]
    %v89 = vld [vmem:[#allocation2 + $0x88] sm:$0xff]
    %v90 = vld [vmem:[#allocation2 + $0x90] sm:$0xff]
    %v91 = vld [vmem:[#allocation2 + $0x98] sm:$0xff]
    %v92 = vld [vmem:[#allocation2 + $0xa0] sm:$0xff]
    %v93 = vld [vmem:[#allocation2 + $0xa8] sm:$0xff]
    %v94 = vld [vmem:[#allocation2 + $0xb0] sm:$0xff]
    %v95 = vld [vmem:[#allocation2 + $0xb8] sm:$0xff]
    %v96 = vld [vmem:[#allocation2 + $0xc0] sm:$0xff]
    %v97 = vld [vmem:[#allocation2 + $0xc8] sm:$0xff]
    %v98 = vld [vmem:[#allocation2 + $0xd0] sm:$0xff]
    %v99 = vld [vmem:[#allocation2 + $0xd8] sm:$0xff]
    %v100 = vld [vmem:[#allocation2 + $0xe0] sm:$0xff]
    %v101 = vld [vmem:[#allocation2 + $0xe8] sm:$0xff]
    %v102 = vld [vmem:[#allocation2 + $0xf0] sm:$0xff]
    %v103 = vld [vmem:[#allocation2 + $0xf8] sm:$0xff]
    %v104 = vld [vmem:[#allocation4] sm:$0x1]
    %v106 = vlaneseq
    %v107 = vshrl.u32 %v106, 7
    %v108 = vsub.s32 0, %v107
    %v109 = vrot.slane %v104, %v108
    %111 = vmatprep.subr.mxu0 0.0
    %112 = vmatpush1.msra.mxu0 %v72
    %113 = vmatprep.subr.mxu0 0.0
    %114 = vmatpush1.msra.mxu0 %v73
    %115 = vmatprep.subr.mxu0 0.0
    %116 = vmatpush1.msra.mxu0 %v74
    %117 = vmatprep.subr.mxu0 0.0
    %118 = vmatpush1.msra.mxu0 %v75
    %119 = vmatprep.subr.mxu0 0.0
    %120 = vmatpush1.msra.mxu0 %v76
    %121 = vmatprep.subr.mxu0 0.0
    %122 = vmatpush1.msra.mxu0 %v77
    %123 = vmatprep.subr.mxu0 0.0
    %124 = vmatpush1.msra.mxu0 %v78
    %125 = vmatprep.subr.mxu0 0.0
    %126 = vmatpush1.msra.mxu0 %v79
    %127 = vmatprep.subr.mxu0 0.0
    %128 = vmatpush1.msra.mxu0 %v80
    %129 = vmatprep.subr.mxu0 0.0
    %130 = vmatpush1.msra.mxu0 %v81
    %131 = vmatprep.subr.mxu0 0.0
    %132 = vmatpush1.msra.mxu0 %v82
    %133 = vmatprep.subr.mxu0 0.0
    %134 = vmatpush1.msra.mxu0 %v83
    %135 = vmatprep.subr.mxu0 0.0
    %136 = vmatpush1.msra.mxu0 %v84
    %137 = vmatprep.subr.mxu0 0.0
    %138 = vmatpush1.msra.mxu0 %v85
    %139 = vmatprep.subr.mxu0 0.0
    %140 = vmatpush1.msra.mxu0 %v86
    %141 = vmatprep.subr.mxu0 0.0
    %142 = vmatpush1.msra.mxu0 %v87
    %143 = vmatprep.subr.mxu0 0.0
    %144 = vmatpush1.msra.mxu0 %v88
    %145 = vmatprep.subr.mxu0 0.0
    %146 = vmatpush1.msra.mxu0 %v89
    %147 = vmatprep.subr.mxu0 0.0
    %148 = vmatpush1.msra.mxu0 %v90
    %149 = vmatprep.subr.mxu0 0.0
    %150 = vmatpush1.msra.mxu0 %v91
    %151 = vmatprep.subr.mxu0 0.0
    %152 = vmatpush1.msra.mxu0 %v92
    %153 = vmatprep.subr.mxu0 0.0
    %154 = vmatpush1.msra.mxu0 %v93
    %155 = vmatprep.subr.mxu0 0.0
    %156 = vmatpush1.msra.mxu0 %v94
    %157 = vmatprep.subr.mxu0 0.0
    %158 = vmatpush1.msra.mxu0 %v95
    %159 = vmatprep.subr.mxu0 0.0
    %160 = vmatpush1.msra.mxu0 %v96
    %161 = vmatprep.subr.mxu0 0.0
    %162 = vmatpush1.msra.mxu0 %v97
    %163 = vmatprep.subr.mxu0 0.0
    %164 = vmatpush1.msra.mxu0 %v98
    %165 = vmatprep.subr.mxu0 0.0
    %166 = vmatpush1.msra.mxu0 %v99
    %167 = vmatprep.subr.mxu0 0.0
    %168 = vmatpush1.msra.mxu0 %v100
    %169 = vmatprep.subr.mxu0 0.0
    %170 = vmatpush1.msra.mxu0 %v101
    %171 = vmatprep.subr.mxu0 0.0
    %172 = vmatpush1.msra.mxu0 %v102
    %173 = vmatprep.subr.mxu0 0.0
    %174 = vmatpush1.msra.mxu0 %v103
    %175 = vmatprep.mubr.f32.mxu0 %v41
    %176 = vmatmul.mubr.f32.gmra.mrb[0].mxu0 %v40
    %v177 = vpop.f32.mrb[0].mxu0
    %v178 = vadd.f32 %v109, %v177
    %v179 = vpop.f32.mrb[0].mxu0
    %180 = vmatprep.mubr.f32.mxu0 %v43
    %181 = vmatmul.mubr.f32.gmra.mrb[0].mxu0 %v42
    %v182 = vpop.f32.mrb[0].mxu0
    %v183 = vadd.f32 %v109, %v182
    %v184 = vpop.f32.mrb[0].mxu0
    %185 = vmatprep.mubr.f32.mxu0 %v45
    %186 = vmatmul.mubr.f32.gmra.mrb[0].mxu0 %v44
    %v187 = vpop.f32.mrb[0].mxu0
    %v188 = vadd.f32 %v109, %v187
    %v189 = vpop.f32.mrb[0].mxu0
    %190 = vmatprep.mubr.f32.mxu0 %v47
    %191 = vmatmul.mubr.f32.gmra.mrb[0].mxu0 %v46
    %v192 = vpop.f32.mrb[0].mxu0
    %v193 = vadd.f32 %v109, %v192
    %v194 = vpop.f32.mrb[0].mxu0
    %195 = vmatprep.mubr.f32.mxu0 %v49
    %196 = vmatmul.mubr.f32.gmra.mrb[0].mxu0 %v48
    %v197 = vpop.f32.mrb[0].mxu0
    %v198 = vadd.f32 %v109, %v197
    %v199 = vpop.f32.mrb[0].mxu0
    %200 = vmatprep.mubr.f32.mxu0 %v51
    %201 = vmatmul.mubr.f32.gmra.mrb[0].mxu0 %v50
    %v202 = vpop.f32.mrb[0].mxu0
    %v203 = vadd.f32 %v109, %v202
    %v204 = vpop.f32.mrb[0].mxu0
    %205 = vmatprep.mubr.f32.mxu0 %v53
    %206 = vmatmul.mubr.f32.gmra.mrb[0].mxu0 %v52
    %v207 = vpop.f32.mrb[0].mxu0
    %v208 = vadd.f32 %v109, %v207
    %v209 = vpop.f32.mrb[0].mxu0
    %210 = vmatprep.mubr.f32.mxu0 %v55
    %211 = vmatmul.mubr.f32.gmra.mrb[0].mxu0 %v54
    %v212 = vpop.f32.mrb[0].mxu0
    %v213 = vadd.f32 %v109, %v212
    %v214 = vpop.f32.mrb[0].mxu0
    %215 = vmatprep.mubr.f32.mxu0 %v57
    %216 = vmatmul.mubr.f32.gmra.mrb[0].mxu0 %v56
    %v217 = vpop.f32.mrb[0].mxu0
    %v218 = vadd.f32 %v109, %v217
    %v219 = vpop.f32.mrb[0].mxu0
    %220 = vmatprep.mubr.f32.mxu0 %v59
    %221 = vmatmul.mubr.f32.gmra.mrb[0].mxu0 %v58
    %v222 = vpop.f32.mrb[0].mxu0
    %v223 = vadd.f32 %v109, %v222
    %v224 = vpop.f32.mrb[0].mxu0
    %225 = vmatprep.mubr.f32.mxu0 %v61
    %226 = vmatmul.mubr.f32.gmra.mrb[0].mxu0 %v60
    %v227 = vpop.f32.mrb[0].mxu0
    %v228 = vadd.f32 %v109, %v227
    %v229 = vpop.f32.mrb[0].mxu0
    %230 = vmatprep.mubr.f32.mxu0 %v63
    %231 = vmatmul.mubr.f32.gmra.mrb[0].mxu0 %v62
    %v232 = vpop.f32.mrb[0].mxu0
    %v233 = vadd.f32 %v109, %v232
    %v234 = vpop.f32.mrb[0].mxu0
    %235 = vmatprep.mubr.f32.mxu0 %v65
    %236 = vmatmul.mubr.f32.gmra.mrb[0].mxu0 %v64
    %v237 = vpop.f32.mrb[0].mxu0
    %v238 = vadd.f32 %v109, %v237
    %v239 = vpop.f32.mrb[0].mxu0
    %240 = vmatprep.mubr.f32.mxu0 %v67
    %241 = vmatmul.mubr.f32.gmra.mrb[0].mxu0 %v66
    %v242 = vpop.f32.mrb[0].mxu0
    %v243 = vadd.f32 %v109, %v242
    %v244 = vpop.f32.mrb[0].mxu0
    %245 = vmatprep.mubr.f32.mxu0 %v69
    %246 = vmatmul.mubr.f32.gmra.mrb[0].mxu0 %v68
    %v247 = vpop.f32.mrb[0].mxu0
    %v248 = vadd.f32 %v109, %v247
    %v249 = vpop.f32.mrb[0].mxu0
    %250 = vmatprep.mubr.f32.mxu0 %v71
    %251 = vmatmul.mubr.f32.gmra.mrb[0].mxu0 %v70
    %v252 = vpop.f32.mrb[0].mxu0
    %v253 = vadd.f32 %v109, %v252
    %v254 = vpop.f32.mrb[0].mxu0
    %255 = vdwg.mxu0
    %v256 = vmax.f32 %v178, 0.0
    %v257 = vmax.f32 %v183, 0.0
    %v258 = vmax.f32 %v188, 0.0
    %v259 = vmax.f32 %v193, 0.0
    %v260 = vmax.f32 %v198, 0.0
    %v261 = vmax.f32 %v203, 0.0
    %v262 = vmax.f32 %v208, 0.0
    %v263 = vmax.f32 %v213, 0.0
    %v264 = vmax.f32 %v218, 0.0
    %v265 = vmax.f32 %v223, 0.0
    %v266 = vmax.f32 %v228, 0.0
    %v267 = vmax.f32 %v233, 0.0
    %v268 = vmax.f32 %v238, 0.0
    %v269 = vmax.f32 %v243, 0.0
    %v270 = vmax.f32 %v248, 0.0
    %v271 = vmax.f32 %v253, 0.0
    %272 = vst [vmem:[%s3] sm:$0xff] %v256
    %273 = vst [vmem:[%s3 + $0x8] sm:$0xff] %v257
    %274 = vst [vmem:[%s3 + $0x10] sm:$0xff] %v258
    %275 = vst [vmem:[%s3 + $0x18] sm:$0xff] %v259
    %276 = vst [vmem:[%s3 + $0x20] sm:$0xff] %v260
    %277 = vst [vmem:[%s3 + $0x28] sm:$0xff] %v261
    %278 = vst [vmem:[%s3 + $0x30] sm:$0xff] %v262
    %279 = vst [vmem:[%s3 + $0x38] sm:$0xff] %v263
    %280 = vst [vmem:[%s3 + $0x40] sm:$0xff] %v264
    %281 = vst [vmem:[%s3 + $0x48] sm:$0xff] %v265
    %282 = vst [vmem:[%s3 + $0x50] sm:$0xff] %v266
    %283 = vst [vmem:[%s3 + $0x58] sm:$0xff] %v267
    %284 = vst [vmem:[%s3 + $0x60] sm:$0xff] %v268
    %285 = vst [vmem:[%s3 + $0x68] sm:$0xff] %v269
    %286 = vst [vmem:[%s3 + $0x70] sm:$0xff] %v270
    %287 = vst [vmem:[%s3 + $0x78] sm:$0xff] %v271
    // Predicated region
    $region22: #{image_decoder_forward.4} parent=1 // pred_check
      _
    $region23: #{image_decoder_forward.4} parent=1 // pred_check_branch
      %289 = sbr.rel (0) target = $region25
    $region24: #{image_decoder_forward.4} parent=1 // pred_region
      _
    $region25: #{image_decoder_forward.4} parent=1 // pred_fallthru
      _
    // Predicated region
    $region26: #{image_decoder_forward.4} parent=1 // pred_check
      _
    $region27: #{image_decoder_forward.4} parent=1 // pred_check_branch
      %291 = sbr.rel (0) target = $region29
    $region28: #{image_decoder_forward.4} parent=1 // pred_region
      _
    $region29: #{image_decoder_forward.4} parent=1 // pred_fallthru
      _
    %292 = vsyncpa [#allocation3], 1
    %293 = vsyncpa [#allocation5], 1

// kernel: image_decoder_forward.3
$region0: #{image_decoder_forward.3}
  #allocation0 [shape = 'u32[]', space=smem, size = 0x4, offset = 0x4, fixed_abs, tag = 'smem constant byte address 0x4 - core index']
  #allocation1 [shape = 'u32[144,128]{1,0:T(1,128)}', space=vmem, size = 0x12000, scoped, tag = 'internal scratch']
  %s0 = inlined_call_operand.vmem [shape: f32[128,128], index: 0, kind: input, shape index: {}]
  %s1 = inlined_call_operand.hbm [shape: f32[128,256], index: 1, kind: input, shape index: {}]
  %s2 = inlined_call_operand.hbm [shape: f32[1,256], index: 2, kind: input, shape index: {}]
  %s3 = inlined_call_operand.vmem [shape: f32[128,256], index: 3, kind: output, shape index: {}]
  %s4 = sld [smem:[#allocation0]]
  $region30: #{image_decoder_forward.3} parent=0
    _
  %s6 = ssub.s32 1, %s4
  %s7 = scalar_select 0, %s6, %s4
  $region1: #{image_decoder_forward.3} parent=0
    #allocation2 [shape = 'u8[131072]{0}', space=vmem, size = 0x20000, scoped, tag = 'input window, operand 1, single buffered']
    #allocation3 [shape = 's32[1]{0}', space=sflag, size = 0x4, scoped, tag = 'scoped memory for image_decoder_forward.3']
    #allocation4 [shape = 'u8[1024]{0}', space=vmem, size = 0x400, scoped, tag = 'input window, operand 2, single buffered']
    #allocation5 [shape = 's32[1]{0}', space=sflag, size = 0x4, scoped, tag = 'scoped memory for image_decoder_forward.3']
    %8 = vsyncpa [#allocation3], 0
    %9 = vsyncpa [#allocation5], 0
    // Predicated region
    $region2: #{image_decoder_forward.3} parent=1 // pred_check
      _
    $region3: #{image_decoder_forward.3} parent=1 // pred_check_branch
      %11 = sbr.rel (0) target = $region5
    $region4: #{image_decoder_forward.3} parent=1 // pred_region
      _
    $region5: #{image_decoder_forward.3} parent=1 // pred_fallthru
      _
    // Predicated region
    $region6: #{image_decoder_forward.3} parent=1 // pred_check
      _
    $region7: #{image_decoder_forward.3} parent=1 // pred_check_branch
      %13 = sbr.rel (0) target = $region9
    $region8: #{image_decoder_forward.3} parent=1 // pred_region
      %s15 = ssub.s32 4096, 4096
      %16 = vsyncadd [#allocation3], %s15
      %s17 = sshll.u32 [#allocation2], 4
      %s18 = int_to_ptr.vmem [resolvable:$true] %s17
      %23 = dma.hbm_to_vmem [thread:$0]  %s1, 4096, %s18, [#allocation3], 256, 256, 16
    $region9: #{image_decoder_forward.3} parent=1 // pred_fallthru
      _
    // Predicated region
    $region10: #{image_decoder_forward.3} parent=1 // pred_check
      _
    $region11: #{image_decoder_forward.3} parent=1 // pred_check_branch
      %25 = sbr.rel (0) target = $region13
    $region12: #{image_decoder_forward.3} parent=1 // pred_region
      %s27 = ssub.s32 32, 32
      %28 = vsyncadd [#allocation5], %s27
      %s30 = sshll.u32 [#allocation4], 4
      %s31 = int_to_ptr.vmem [resolvable:$true] %s30
      %33 = dma.hbm_to_vmem [thread:$0]  %s2, 32, %s31, [#allocation5]
    $region13: #{image_decoder_forward.3} parent=1 // pred_fallthru
      _
    // Predicated region
    $region14: #{image_decoder_forward.3} parent=1 // pred_check
      _
    $region15: #{image_decoder_forward.3} parent=1 // pred_check_branch
      %35 = sbr.rel (0) target = $region17
    $region16: #{image_decoder_forward.3} parent=1 // pred_region
      %36 = dma.done [#allocation3], 4096
    $region17: #{image_decoder_forward.3} parent=1 // pred_fallthru
      _
    // Predicated region
    $region18: #{image_decoder_forward.3} parent=1 // pred_check
      _
    $region19: #{image_decoder_forward.3} parent=1 // pred_check_branch
      %38 = sbr.rel (0) target = $region21
    $region20: #{image_decoder_forward.3} parent=1 // pred_region
      %39 = dma.done [#allocation5], 32
    $region21: #{image_decoder_forward.3} parent=1 // pred_fallthru
      _
    %v40 = vld [vmem:[%s0] sm:$0xff]
    %v41 = vld [vmem:[%s0 + $0x8] sm:$0xff]
    %v42 = vld [vmem:[%s0 + $0x10] sm:$0xff]
    %v43 = vld [vmem:[%s0 + $0x18] sm:$0xff]
    %v44 = vld [vmem:[%s0 + $0x20] sm:$0xff]
    %v45 = vld [vmem:[%s0 + $0x28] sm:$0xff]
    %v46 = vld [vmem:[%s0 + $0x30] sm:$0xff]
    %v47 = vld [vmem:[%s0 + $0x38] sm:$0xff]
    %v48 = vld [vmem:[%s0 + $0x40] sm:$0xff]
    %v49 = vld [vmem:[%s0 + $0x48] sm:$0xff]
    %v50 = vld [vmem:[%s0 + $0x50] sm:$0xff]
    %v51 = vld [vmem:[%s0 + $0x58] sm:$0xff]
    %v52 = vld [vmem:[%s0 + $0x60] sm:$0xff]
    %v53 = vld [vmem:[%s0 + $0x68] sm:$0xff]
    %v54 = vld [vmem:[%s0 + $0x70] sm:$0xff]
    %v55 = vld [vmem:[%s0 + $0x78] sm:$0xff]
    %v56 = vld [vmem:[#allocation2] sm:$0xff]
    %v57 = vld [vmem:[#allocation2 + $0x8] sm:$0xff]
    %v58 = vld [vmem:[#allocation2 + $0x10] sm:$0xff]
    %v59 = vld [vmem:[#allocation2 + $0x18] sm:$0xff]
    %v60 = vld [vmem:[#allocation2 + $0x20] sm:$0xff]
    %v61 = vld [vmem:[#allocation2 + $0x28] sm:$0xff]
    %v62 = vld [vmem:[#allocation2 + $0x30] sm:$0xff]
    %v63 = vld [vmem:[#allocation2 + $0x38] sm:$0xff]
    %v64 = vld [vmem:[#allocation2 + $0x40] sm:$0xff]
    %v65 = vld [vmem:[#allocation2 + $0x48] sm:$0xff]
    %v66 = vld [vmem:[#allocation2 + $0x50] sm:$0xff]
    %v67 = vld [vmem:[#allocation2 + $0x58] sm:$0xff]
    %v68 = vld [vmem:[#allocation2 + $0x60] sm:$0xff]
    %v69 = vld [vmem:[#allocation2 + $0x68] sm:$0xff]
    %v70 = vld [vmem:[#allocation2 + $0x70] sm:$0xff]
    %v71 = vld [vmem:[#allocation2 + $0x78] sm:$0xff]
    %v72 = vld [vmem:[#allocation2 + $0x80] sm:$0xff]
    %v73 = vld [vmem:[#allocation2 + $0x88] sm:$0xff]
    %v74 = vld [vmem:[#allocation2 + $0x90] sm:$0xff]
    %v75 = vld [vmem:[#allocation2 + $0x98] sm:$0xff]
    %v76 = vld [vmem:[#allocation2 + $0xa0] sm:$0xff]
    %v77 = vld [vmem:[#allocation2 + $0xa8] sm:$0xff]
    %v78 = vld [vmem:[#allocation2 + $0xb0] sm:$0xff]
    %v79 = vld [vmem:[#allocation2 + $0xb8] sm:$0xff]
    %v80 = vld [vmem:[#allocation2 + $0xc0] sm:$0xff]
    %v81 = vld [vmem:[#allocation2 + $0xc8] sm:$0xff]
    %v82 = vld [vmem:[#allocation2 + $0xd0] sm:$0xff]
    %v83 = vld [vmem:[#allocation2 + $0xd8] sm:$0xff]
    %v84 = vld [vmem:[#allocation2 + $0xe0] sm:$0xff]
    %v85 = vld [vmem:[#allocation2 + $0xe8] sm:$0xff]
    %v86 = vld [vmem:[#allocation2 + $0xf0] sm:$0xff]
    %v87 = vld [vmem:[#allocation2 + $0xf8] sm:$0xff]
    %v88 = vld [vmem:[#allocation4] sm:$0x3]
    %v90 = vlaneseq
    %v91 = vshrl.u32 %v90, 7
    %v92 = vsub.s32 0, %v91
    %v93 = vrot.slane %v88, %v92
    %v94 = vlaneseq
    %v95 = vshrl.u32 %v94, 7
    %v96 = vsub.s32 1, %v95
    %v97 = vrot.slane %v88, %v96
    %100 = vmatprep.subr.mxu0 %v57
    %101 = vmatpush1.msra.mxu0 %v56
    %102 = vmatprep.subr.mxu0 %v59
    %103 = vmatpush1.msra.mxu0 %v58
    %104 = vmatprep.subr.mxu0 %v61
    %105 = vmatpush1.msra.mxu0 %v60
    %106 = vmatprep.subr.mxu0 %v63
    %107 = vmatpush1.msra.mxu0 %v62
    %108 = vmatprep.subr.mxu0 %v65
    %109 = vmatpush1.msra.mxu0 %v64
    %110 = vmatprep.subr.mxu0 %v67
    %111 = vmatpush1.msra.mxu0 %v66
    %112 = vmatprep.subr.mxu0 %v69
    %113 = vmatpush1.msra.mxu0 %v68
    %114 = vmatprep.subr.mxu0 %v71
    %115 = vmatpush1.msra.mxu0 %v70
    %116 = vmatprep.subr.mxu0 %v73
    %117 = vmatpush1.msra.mxu0 %v72
    %118 = vmatprep.subr.mxu0 %v75
    %119 = vmatpush1.msra.mxu0 %v74
    %120 = vmatprep.subr.mxu0 %v77
    %121 = vmatpush1.msra.mxu0 %v76
    %122 = vmatprep.subr.mxu0 %v79
    %123 = vmatpush1.msra.mxu0 %v78
    %124 = vmatprep.subr.mxu0 %v81
    %125 = vmatpush1.msra.mxu0 %v80
    %126 = vmatprep.subr.mxu0 %v83
    %127 = vmatpush1.msra.mxu0 %v82
    %128 = vmatprep.subr.mxu0 %v85
    %129 = vmatpush1.msra.mxu0 %v84
    %130 = vmatprep.subr.mxu0 %v87
    %131 = vmatpush1.msra.mxu0 %v86
    %132 = vmatprep.subr.mxu0 0.0
    %133 = vmatpush1.msra.mxu0 0.0
    %134 = vmatprep.subr.mxu0 0.0
    %135 = vmatpush1.msra.mxu0 0.0
    %136 = vmatprep.subr.mxu0 0.0
    %137 = vmatpush1.msra.mxu0 0.0
    %138 = vmatprep.subr.mxu0 0.0
    %139 = vmatpush1.msra.mxu0 0.0
    %140 = vmatprep.subr.mxu0 0.0
    %141 = vmatpush1.msra.mxu0 0.0
    %142 = vmatprep.subr.mxu0 0.0
    %143 = vmatpush1.msra.mxu0 0.0
    %144 = vmatprep.subr.mxu0 0.0
    %145 = vmatpush1.msra.mxu0 0.0
    %146 = vmatprep.subr.mxu0 0.0
    %147 = vmatpush1.msra.mxu0 0.0
    %148 = vmatprep.subr.mxu0 0.0
    %149 = vmatpush1.msra.mxu0 0.0
    %150 = vmatprep.subr.mxu0 0.0
    %151 = vmatpush1.msra.mxu0 0.0
    %152 = vmatprep.subr.mxu0 0.0
    %153 = vmatpush1.msra.mxu0 0.0
    %154 = vmatprep.subr.mxu0 0.0
    %155 = vmatpush1.msra.mxu0 0.0
    %156 = vmatprep.subr.mxu0 0.0
    %157 = vmatpush1.msra.mxu0 0.0
    %158 = vmatprep.subr.mxu0 0.0
    %159 = vmatpush1.msra.mxu0 0.0
    %160 = vmatprep.subr.mxu0 0.0
    %161 = vmatpush1.msra.mxu0 0.0
    %162 = vmatprep.subr.mxu0 0.0
    %163 = vmatpush1.msra.mxu0 0.0
    %164 = vmatprep.mubr.f32.mxu0 0.0
    %165 = vmatmul.mubr.f32.gmra.mrb[0].mxu0 %v40
    %v166 = vpop.f32.mrb[0].mxu0
    %v167 = vadd.f32 %v93, %v166
    %v168 = vpop.f32.mrb[0].mxu0
    %v169 = vadd.f32 %v97, %v168
    %170 = vmatprep.mubr.f32.mxu0 0.0
    %171 = vmatmul.mubr.f32.gmra.mrb[0].mxu0 %v41
    %v172 = vpop.f32.mrb[0].mxu0
    %v173 = vadd.f32 %v93, %v172
    %v174 = vpop.f32.mrb[0].mxu0
    %v175 = vadd.f32 %v97, %v174
    %176 = vmatprep.mubr.f32.mxu0 0.0
    %177 = vmatmul.mubr.f32.gmra.mrb[0].mxu0 %v42
    %v178 = vpop.f32.mrb[0].mxu0
    %v179 = vadd.f32 %v93, %v178
    %v180 = vpop.f32.mrb[0].mxu0
    %v181 = vadd.f32 %v97, %v180
    %182 = vmatprep.mubr.f32.mxu0 0.0
    %183 = vmatmul.mubr.f32.gmra.mrb[0].mxu0 %v43
    %v184 = vpop.f32.mrb[0].mxu0
    %v185 = vadd.f32 %v93, %v184
    %v186 = vpop.f32.mrb[0].mxu0
    %v187 = vadd.f32 %v97, %v186
    %188 = vmatprep.mubr.f32.mxu0 0.0
    %189 = vmatmul.mubr.f32.gmra.mrb[0].mxu0 %v44
    %v190 = vpop.f32.mrb[0].mxu0
    %v191 = vadd.f32 %v93, %v190
    %v192 = vpop.f32.mrb[0].mxu0
    %v193 = vadd.f32 %v97, %v192
    %194 = vmatprep.mubr.f32.mxu0 0.0
    %195 = vmatmul.mubr.f32.gmra.mrb[0].mxu0 %v45
    %v196 = vpop.f32.mrb[0].mxu0
    %v197 = vadd.f32 %v93, %v196
    %v198 = vpop.f32.mrb[0].mxu0
    %v199 = vadd.f32 %v97, %v198
    %200 = vmatprep.mubr.f32.mxu0 0.0
    %201 = vmatmul.mubr.f32.gmra.mrb[0].mxu0 %v46
    %v202 = vpop.f32.mrb[0].mxu0
    %v203 = vadd.f32 %v93, %v202
    %v204 = vpop.f32.mrb[0].mxu0
    %v205 = vadd.f32 %v97, %v204
    %206 = vmatprep.mubr.f32.mxu0 0.0
    %207 = vmatmul.mubr.f32.gmra.mrb[0].mxu0 %v47
    %v208 = vpop.f32.mrb[0].mxu0
    %v209 = vadd.f32 %v93, %v208
    %v210 = vpop.f32.mrb[0].mxu0
    %v211 = vadd.f32 %v97, %v210
    %212 = vmatprep.mubr.f32.mxu0 0.0
    %213 = vmatmul.mubr.f32.gmra.mrb[0].mxu0 %v48
    %v214 = vpop.f32.mrb[0].mxu0
    %v215 = vadd.f32 %v93, %v214
    %v216 = vpop.f32.mrb[0].mxu0
    %v217 = vadd.f32 %v97, %v216
    %218 = vmatprep.mubr.f32.mxu0 0.0
    %219 = vmatmul.mubr.f32.gmra.mrb[0].mxu0 %v49
    %v220 = vpop.f32.mrb[0].mxu0
    %v221 = vadd.f32 %v93, %v220
    %v222 = vpop.f32.mrb[0].mxu0
    %v223 = vadd.f32 %v97, %v222
    %224 = vmatprep.mubr.f32.mxu0 0.0
    %225 = vmatmul.mubr.f32.gmra.mrb[0].mxu0 %v50
    %v226 = vpop.f32.mrb[0].mxu0
    %v227 = vadd.f32 %v93, %v226
    %v228 = vpop.f32.mrb[0].mxu0
    %v229 = vadd.f32 %v97, %v228
    %230 = vmatprep.mubr.f32.mxu0 0.0
    %231 = vmatmul.mubr.f32.gmra.mrb[0].mxu0 %v51
    %v232 = vpop.f32.mrb[0].mxu0
    %v233 = vadd.f32 %v93, %v232
    %v234 = vpop.f32.mrb[0].mxu0
    %v235 = vadd.f32 %v97, %v234
    %236 = vmatprep.mubr.f32.mxu0 0.0
    %237 = vmatmul.mubr.f32.gmra.mrb[0].mxu0 %v52
    %v238 = vpop.f32.mrb[0].mxu0
    %v239 = vadd.f32 %v93, %v238
    %v240 = vpop.f32.mrb[0].mxu0
    %v241 = vadd.f32 %v97, %v240
    %242 = vmatprep.mubr.f32.mxu0 0.0
    %243 = vmatmul.mubr.f32.gmra.mrb[0].mxu0 %v53
    %v244 = vpop.f32.mrb[0].mxu0
    %v245 = vadd.f32 %v93, %v244
    %v246 = vpop.f32.mrb[0].mxu0
    %v247 = vadd.f32 %v97, %v246
    %248 = vmatprep.mubr.f32.mxu0 0.0
    %249 = vmatmul.mubr.f32.gmra.mrb[0].mxu0 %v54
    %v250 = vpop.f32.mrb[0].mxu0
    %v251 = vadd.f32 %v93, %v250
    %v252 = vpop.f32.mrb[0].mxu0
    %v253 = vadd.f32 %v97, %v252
    %254 = vmatprep.mubr.f32.mxu0 0.0
    %255 = vmatmul.mubr.f32.gmra.mrb[0].mxu0 %v55
    %v256 = vpop.f32.mrb[0].mxu0
    %v257 = vadd.f32 %v93, %v256
    %v258 = vpop.f32.mrb[0].mxu0
    %v259 = vadd.f32 %v97, %v258
    %260 = vdwg.mxu0
    %v261 = vmax.f32 %v167, 0.0
    %v262 = vmax.f32 %v169, 0.0
    %v263 = vmax.f32 %v173, 0.0
    %v264 = vmax.f32 %v175, 0.0
    %v265 = vmax.f32 %v179, 0.0
    %v266 = vmax.f32 %v181, 0.0
    %v267 = vmax.f32 %v185, 0.0
    %v268 = vmax.f32 %v187, 0.0
    %v269 = vmax.f32 %v191, 0.0
    %v270 = vmax.f32 %v193, 0.0
    %v271 = vmax.f32 %v197, 0.0
    %v272 = vmax.f32 %v199, 0.0
    %v273 = vmax.f32 %v203, 0.0
    %v274 = vmax.f32 %v205, 0.0
    %v275 = vmax.f32 %v209, 0.0
    %v276 = vmax.f32 %v211, 0.0
    %v277 = vmax.f32 %v215, 0.0
    %v278 = vmax.f32 %v217, 0.0
    %v279 = vmax.f32 %v221, 0.0
    %v280 = vmax.f32 %v223, 0.0
    %v281 = vmax.f32 %v227, 0.0
    %v282 = vmax.f32 %v229, 0.0
    %v283 = vmax.f32 %v233, 0.0
    %v284 = vmax.f32 %v235, 0.0
    %v285 = vmax.f32 %v239, 0.0
    %v286 = vmax.f32 %v241, 0.0
    %v287 = vmax.f32 %v245, 0.0
    %v288 = vmax.f32 %v247, 0.0
    %v289 = vmax.f32 %v251, 0.0
    %v290 = vmax.f32 %v253, 0.0
    %v291 = vmax.f32 %v257, 0.0
    %v292 = vmax.f32 %v259, 0.0
    %293 = vst [vmem:[%s3] sm:$0xff] %v261
    %294 = vst [vmem:[%s3 + $0x8] sm:$0xff] %v262
    %295 = vst [vmem:[%s3 + $0x10] sm:$0xff] %v263
    %296 = vst [vmem:[%s3 + $0x18] sm:$0xff] %v264
    %297 = vst [vmem:[%s3 + $0x20] sm:$0xff] %v265
    %298 = vst [vmem:[%s3 + $0x28] sm:$0xff] %v266
    %299 = vst [vmem:[%s3 + $0x30] sm:$0xff] %v267
    %300 = vst [vmem:[%s3 + $0x38] sm:$0xff] %v268
    %301 = vst [vmem:[%s3 + $0x40] sm:$0xff] %v269
    %302 = vst [vmem:[%s3 + $0x48] sm:$0xff] %v270
    %303 = vst [vmem:[%s3 + $0x50] sm:$0xff] %v271
    %304 = vst [vmem:[%s3 + $0x58] sm:$0xff] %v272
    %305 = vst [vmem:[%s3 + $0x60] sm:$0xff] %v273
    %306 = vst [vmem:[%s3 + $0x68] sm:$0xff] %v274
    %307 = vst [vmem:[%s3 + $0x70] sm:$0xff] %v275
    %308 = vst [vmem:[%s3 + $0x78] sm:$0xff] %v276
    %309 = vst [vmem:[%s3 + $0x80] sm:$0xff] %v277
    %310 = vst [vmem:[%s3 + $0x88] sm:$0xff] %v278
    %311 = vst [vmem:[%s3 + $0x90] sm:$0xff] %v279
    %312 = vst [vmem:[%s3 + $0x98] sm:$0xff] %v280
    %313 = vst [vmem:[%s3 + $0xa0] sm:$0xff] %v281
    %314 = vst [vmem:[%s3 + $0xa8] sm:$0xff] %v282
    %315 = vst [vmem:[%s3 + $0xb0] sm:$0xff] %v283
    %316 = vst [vmem:[%s3 + $0xb8] sm:$0xff] %v284
    %317 = vst [vmem:[%s3 + $0xc0] sm:$0xff] %v285
    %318 = vst [vmem:[%s3 + $0xc8] sm:$0xff] %v286
    %319 = vst [vmem:[%s3 + $0xd0] sm:$0xff] %v287
    %320 = vst [vmem:[%s3 + $0xd8] sm:$0xff] %v288
    %321 = vst [vmem:[%s3 + $0xe0] sm:$0xff] %v289
    %322 = vst [vmem:[%s3 + $0xe8] sm:$0xff] %v290
    %323 = vst [vmem:[%s3 + $0xf0] sm:$0xff] %v291
    %324 = vst [vmem:[%s3 + $0xf8] sm:$0xff] %v292
    // Predicated region
    $region22: #{image_decoder_forward.3} parent=1 // pred_check
      _
    $region23: #{image_decoder_forward.3} parent=1 // pred_check_branch
      %326 = sbr.rel (0) target = $region25
    $region24: #{image_decoder_forward.3} parent=1 // pred_region
      _
    $region25: #{image_decoder_forward.3} parent=1 // pred_fallthru
      _
    // Predicated region
    $region26: #{image_decoder_forward.3} parent=1 // pred_check
      _
    $region27: #{image_decoder_forward.3} parent=1 // pred_check_branch
      %328 = sbr.rel (0) target = $region29
    $region28: #{image_decoder_forward.3} parent=1 // pred_region
      _
    $region29: #{image_decoder_forward.3} parent=1 // pred_fallthru
      _
    %329 = vsyncpa [#allocation3], 1
    %330 = vsyncpa [#allocation5], 1

// kernel: image_decoder_forward.5
$region0: #{image_decoder_forward.5}
  #allocation0 [shape = 'u32[]', space=smem, size = 0x4, offset = 0x4, fixed_abs, tag = 'smem constant byte address 0x4 - core index']
  #allocation1 [shape = 'u32[144,128]{1,0:T(1,128)}', space=vmem, size = 0x12000, scoped, tag = 'internal scratch']
  %s0 = inlined_call_operand.vmem [shape: f32[1024,128], index: 0, kind: input, shape index: {}]
  %s1 = inlined_call_operand.vmem [shape: f32[128,64], index: 1, kind: input, shape index: {}]
  %s2 = inlined_call_operand.vmem [shape: f32[1,64], index: 2, kind: input, shape index: {}]
  %s3 = inlined_call_operand.vmem [shape: f32[64,32], index: 3, kind: input, shape index: {}]
  %s4 = inlined_call_operand.vmem [shape: f32[1,32], index: 4, kind: input, shape index: {}]
  %s5 = inlined_call_operand.vmem [shape: f32[32,3], index: 5, kind: input, shape index: {}]
  %s6 = inlined_call_operand.vmem [shape: f32[1,3], index: 6, kind: input, shape index: {}]
  %s7 = inlined_call_operand.vmem [shape: f32[1024,3], index: 7, kind: output, shape index: {}]
  %s8 = sld [smem:[#allocation0]]
  $region61: #{image_decoder_forward.5} parent=0
    _
  %s10 = ssub.s32 1, %s8
  %s11 = scalar_select 0, %s10, %s8
  loop: start=0, step=1, limit=4
  $region2: #{image_decoder_forward.5} parent=0 // loop_pre_header
    _
  $region3: #{image_decoder_forward.5} parent=0 // loop_header
    %s13 = sphi 0, %s17
    %p14 = scmp.ge.s32.totalorder %s13, 4
    %s23 = sphi 0, %s25
    %s26 = sphi 0, %s23
    %s27 = sphi 0, %s26
    %s43 = sphi 0, %s27
    %s47 = sphi 0, %s47
    %s49 = sphi 0, %s47
    %s50 = sphi 0, %s49
    %s64 = sphi 0, %s50
    %s68 = sphi 0, %s68
    %s70 = sphi 0, %s68
    %s71 = sphi 0, %s70
    %s85 = sphi 0, %s71
    %s89 = sphi 0, %s89
    %s91 = sphi 0, %s89
    %s92 = sphi 0, %s91
    %s106 = sphi 0, %s92
    %s110 = sphi 0, %s110
    %s112 = sphi 0, %s110
    %s113 = sphi 0, %s112
    %s127 = sphi 0, %s113
    %s131 = sphi 0, %s131
    %s133 = sphi 0, %s131
    %s134 = sphi 0, %s133
    %s148 = sphi 0, %s134
    %s152 = sphi 0, %s152
    %s154 = sphi 0, %s152
    %s155 = sphi 0, %s154
    %s169 = sphi 0, %s155
    %s175 = sphi 0, %s177
    %s178 = sphi 0, %s175
    %s179 = sphi 0, %s178
    %s195 = sphi 0, %s179
  $region4: #{image_decoder_forward.5} parent=0 // loop_header_branch
    %16 = sbr.rel (%p14) target = $region8
  $region5: #{image_decoder_forward.5} parent=0 // loop_body
    %s18 = ssub.s32 %s13, 1
    %s19 = ssub.s32 %s13, 2
    %s20 = sadd.s32 %s13, 1
    %s21 = ssub.s32 %s13, %s20
    %p22 = scmp.eq.s32.totalorder %s21, 0
    %s24 = sadd.s32 %s23, 1
    %s25 = scalar_select %p22, %s23, %s24
    %p28 = pneg %p22
    %p29 = scmp.eq.s32.totalorder %s13, 1
    %p30 = por %p28, %p29
    %p31 = scmp.ne.s32.totalorder %s23, %s26
    %p32 = scmp.eq.s32.totalorder %s13, 0
    %p33 = por %p31, %p32
    %p34 = scmp.ne.s32.totalorder %s23, %s26
    %p35 = scmp.eq.s32.totalorder %s18, 1
    %p36 = por %p34, %p35
    %p37 = scmp.ne.s32.totalorder %s26, %s27
    %p38 = scmp.eq.s32.totalorder %s18, 0
    %p39 = por %p37, %p38
    %p40 = scmp.ne.s32.totalorder %s26, %s27
    %p41 = scmp.eq.s32.totalorder %s19, 1
    %p42 = por %p40, %p41
    %p44 = scmp.ne.s32.totalorder %s27, %s43
    %p45 = scmp.eq.s32.totalorder %s19, 0
    %p46 = por %p44, %p45
    %s48 = sadd.s32 %s47, 1
    %p51 = scmp.eq.s32.totalorder %s13, 1
    %p52 = scmp.ne.s32.totalorder %s47, %s49
    %p53 = scmp.eq.s32.totalorder %s13, 0
    %p54 = por %p52, %p53
    %p55 = scmp.ne.s32.totalorder %s47, %s49
    %p56 = scmp.eq.s32.totalorder %s18, 1
    %p57 = por %p55, %p56
    %p58 = scmp.ne.s32.totalorder %s49, %s50
    %p59 = scmp.eq.s32.totalorder %s18, 0
    %p60 = por %p58, %p59
    %p61 = scmp.ne.s32.totalorder %s49, %s50
    %p62 = scmp.eq.s32.totalorder %s19, 1
    %p63 = por %p61, %p62
    %p65 = scmp.ne.s32.totalorder %s50, %s64
    %p66 = scmp.eq.s32.totalorder %s19, 0
    %p67 = por %p65, %p66
    %s69 = sadd.s32 %s68, 1
    %p72 = scmp.eq.s32.totalorder %s13, 1
    %p73 = scmp.ne.s32.totalorder %s68, %s70
    %p74 = scmp.eq.s32.totalorder %s13, 0
    %p75 = por %p73, %p74
    %p76 = scmp.ne.s32.totalorder %s68, %s70
    %p77 = scmp.eq.s32.totalorder %s18, 1
    %p78 = por %p76, %p77
    %p79 = scmp.ne.s32.totalorder %s70, %s71
    %p80 = scmp.eq.s32.totalorder %s18, 0
    %p81 = por %p79, %p80
    %p82 = scmp.ne.s32.totalorder %s70, %s71
    %p83 = scmp.eq.s32.totalorder %s19, 1
    %p84 = por %p82, %p83
    %p86 = scmp.ne.s32.totalorder %s71, %s85
    %p87 = scmp.eq.s32.totalorder %s19, 0
    %p88 = por %p86, %p87
    %s90 = sadd.s32 %s89, 1
    %p93 = scmp.eq.s32.totalorder %s13, 1
    %p94 = scmp.ne.s32.totalorder %s89, %s91
    %p95 = scmp.eq.s32.totalorder %s13, 0
    %p96 = por %p94, %p95
    %p97 = scmp.ne.s32.totalorder %s89, %s91
    %p98 = scmp.eq.s32.totalorder %s18, 1
    %p99 = por %p97, %p98
    %p100 = scmp.ne.s32.totalorder %s91, %s92
    %p101 = scmp.eq.s32.totalorder %s18, 0
    %p102 = por %p100, %p101
    %p103 = scmp.ne.s32.totalorder %s91, %s92
    %p104 = scmp.eq.s32.totalorder %s19, 1
    %p105 = por %p103, %p104
    %p107 = scmp.ne.s32.totalorder %s92, %s106
    %p108 = scmp.eq.s32.totalorder %s19, 0
    %p109 = por %p107, %p108
    %s111 = sadd.s32 %s110, 1
    %p114 = scmp.eq.s32.totalorder %s13, 1
    %p115 = scmp.ne.s32.totalorder %s110, %s112
    %p116 = scmp.eq.s32.totalorder %s13, 0
    %p117 = por %p115, %p116
    %p118 = scmp.ne.s32.totalorder %s110, %s112
    %p119 = scmp.eq.s32.totalorder %s18, 1
    %p120 = por %p118, %p119
    %p121 = scmp.ne.s32.totalorder %s112, %s113
    %p122 = scmp.eq.s32.totalorder %s18, 0
    %p123 = por %p121, %p122
    %p124 = scmp.ne.s32.totalorder %s112, %s113
    %p125 = scmp.eq.s32.totalorder %s19, 1
    %p126 = por %p124, %p125
    %p128 = scmp.ne.s32.totalorder %s113, %s127
    %p129 = scmp.eq.s32.totalorder %s19, 0
    %p130 = por %p128, %p129
    %s132 = sadd.s32 %s131, 1
    %p135 = scmp.eq.s32.totalorder %s13, 1
    %p136 = scmp.ne.s32.totalorder %s131, %s133
    %p137 = scmp.eq.s32.totalorder %s13, 0
    %p138 = por %p136, %p137
    %p139 = scmp.ne.s32.totalorder %s131, %s133
    %p140 = scmp.eq.s32.totalorder %s18, 1
    %p141 = por %p139, %p140
    %p142 = scmp.ne.s32.totalorder %s133, %s134
    %p143 = scmp.eq.s32.totalorder %s18, 0
    %p144 = por %p142, %p143
    %p145 = scmp.ne.s32.totalorder %s133, %s134
    %p146 = scmp.eq.s32.totalorder %s19, 1
    %p147 = por %p145, %p146
    %p149 = scmp.ne.s32.totalorder %s134, %s148
    %p150 = scmp.eq.s32.totalorder %s19, 0
    %p151 = por %p149, %p150
    %s153 = sadd.s32 %s152, 1
    %p156 = scmp.eq.s32.totalorder %s13, 1
    %p157 = scmp.ne.s32.totalorder %s152, %s154
    %p158 = scmp.eq.s32.totalorder %s13, 0
    %p159 = por %p157, %p158
    %p160 = scmp.ne.s32.totalorder %s152, %s154
    %p161 = scmp.eq.s32.totalorder %s18, 1
    %p162 = por %p160, %p161
    %p163 = scmp.ne.s32.totalorder %s154, %s155
    %p164 = scmp.eq.s32.totalorder %s18, 0
    %p165 = por %p163, %p164
    %p166 = scmp.ne.s32.totalorder %s154, %s155
    %p167 = scmp.eq.s32.totalorder %s19, 1
    %p168 = por %p166, %p167
    %p170 = scmp.ne.s32.totalorder %s155, %s169
    %p171 = scmp.eq.s32.totalorder %s19, 0
    %p172 = por %p170, %p171
    %s173 = ssub.s32 %s13, %s20
    %p174 = scmp.eq.s32.totalorder %s173, 0
    %s176 = sadd.s32 %s175, 1
    %s177 = scalar_select %p174, %s175, %s176
    %p180 = pneg %p174
    %p181 = scmp.eq.s32.totalorder %s13, 1
    %p182 = por %p180, %p181
    %p183 = scmp.ne.s32.totalorder %s175, %s178
    %p184 = scmp.eq.s32.totalorder %s13, 0
    %p185 = por %p183, %p184
    %p186 = scmp.ne.s32.totalorder %s175, %s178
    %p187 = scmp.eq.s32.totalorder %s18, 1
    %p188 = por %p186, %p187
    %p189 = scmp.ne.s32.totalorder %s178, %s179
    %p190 = scmp.eq.s32.totalorder %s18, 0
    %p191 = por %p189, %p190
    %p192 = scmp.ne.s32.totalorder %s178, %s179
    %p193 = scmp.eq.s32.totalorder %s19, 1
    %p194 = por %p192, %p193
    %p196 = scmp.ne.s32.totalorder %s179, %s195
    %p197 = scmp.eq.s32.totalorder %s19, 0
    %p198 = por %p196, %p197
    %p199 = scmp.le.s32.totalorder 1, %s13
    %p200 = scmp.lt.s32.totalorder %s13, 3
    %p201 = pnand %p199, %p200
    %p202 = pneg %p201
    // Predicated region
    $region9: #{image_decoder_forward.5} parent=5 // pred_check
      _
    $region10: #{image_decoder_forward.5} parent=5 // pred_check_branch
      %204 = sbr.rel (%p201) target = $region12
    $region11: #{image_decoder_forward.5} parent=5 // pred_region
      %s205 = ssub.s32 %s13, 1
      // Predicated region
      $region13: #{image_decoder_forward.5} parent=11 // pred_check
        %p206 = pneg %p60
      $region14: #{image_decoder_forward.5} parent=11 // pred_check_branch
        %208 = sbr.rel (%p206) target = $region16
      $region15: #{image_decoder_forward.5} parent=11 // pred_region
        _
      $region16: #{image_decoder_forward.5} parent=11 // pred_fallthru
        _
      // Predicated region
      $region17: #{image_decoder_forward.5} parent=11 // pred_check
        %p209 = pneg %p81
      $region18: #{image_decoder_forward.5} parent=11 // pred_check_branch
        %211 = sbr.rel (%p209) target = $region20
      $region19: #{image_decoder_forward.5} parent=11 // pred_region
        _
      $region20: #{image_decoder_forward.5} parent=11 // pred_fallthru
        _
      // Predicated region
      $region21: #{image_decoder_forward.5} parent=11 // pred_check
        %p212 = pneg %p102
      $region22: #{image_decoder_forward.5} parent=11 // pred_check_branch
        %214 = sbr.rel (%p212) target = $region24
      $region23: #{image_decoder_forward.5} parent=11 // pred_region
        _
      $region24: #{image_decoder_forward.5} parent=11 // pred_fallthru
        _
      // Predicated region
      $region25: #{image_decoder_forward.5} parent=11 // pred_check
        %p215 = pneg %p123
      $region26: #{image_decoder_forward.5} parent=11 // pred_check_branch
        %217 = sbr.rel (%p215) target = $region28
      $region27: #{image_decoder_forward.5} parent=11 // pred_region
        _
      $region28: #{image_decoder_forward.5} parent=11 // pred_fallthru
        _
      // Predicated region
      $region29: #{image_decoder_forward.5} parent=11 // pred_check
        %p218 = pneg %p144
      $region30: #{image_decoder_forward.5} parent=11 // pred_check_branch
        %220 = sbr.rel (%p218) target = $region32
      $region31: #{image_decoder_forward.5} parent=11 // pred_region
        _
      $region32: #{image_decoder_forward.5} parent=11 // pred_fallthru
        _
      // Predicated region
      $region33: #{image_decoder_forward.5} parent=11 // pred_check
        %p221 = pneg %p165
      $region34: #{image_decoder_forward.5} parent=11 // pred_check_branch
        %223 = sbr.rel (%p221) target = $region36
      $region35: #{image_decoder_forward.5} parent=11 // pred_region
        _
      $region36: #{image_decoder_forward.5} parent=11 // pred_fallthru
        _
    $region12: #{image_decoder_forward.5} parent=5 // pred_fallthru
      _
    %p224 = scmp.lt.s32.totalorder %s13, 2
    // Predicated region
    $region37: #{image_decoder_forward.5} parent=5 // pred_check
      %p225 = pneg %p224
    $region38: #{image_decoder_forward.5} parent=5 // pred_check_branch
      %227 = sbr.rel (%p225) target = $region40
    $region39: #{image_decoder_forward.5} parent=5 // pred_region
      // Predicated region
      $region41: #{image_decoder_forward.5} parent=39 // pred_check
        %p228 = pneg %p33
      $region42: #{image_decoder_forward.5} parent=39 // pred_check_branch
        %230 = sbr.rel (%p228) target = $region44
      $region43: #{image_decoder_forward.5} parent=39 // pred_region
        %s231 = smul.u32 64, %s13
        %p232 = scmp.lt.s32.totalorder %s231, 127
        %s233 = scalar_select %p232, %s231, 127
        %s234 = smul.addr %s233, 8
        %s235 = scalar_lea.vmem %s0, %s234
        %s236 = smul.u32 64, %s13
      $region44: #{image_decoder_forward.5} parent=39 // pred_fallthru
        _
    $region40: #{image_decoder_forward.5} parent=5 // pred_fallthru
      _
    %p237 = scmp.le.s32.totalorder 1, %s13
    %p238 = scmp.lt.s32.totalorder %s13, 3
    %p239 = pnand %p237, %p238
    %p240 = pneg %p239
    // Predicated region
    $region45: #{image_decoder_forward.5} parent=5 // pred_check
      _
    $region46: #{image_decoder_forward.5} parent=5 // pred_check_branch
      %242 = sbr.rel (%p239) target = $region48
    $region47: #{image_decoder_forward.5} parent=5 // pred_region
      %s243 = ssub.s32 %s13, 1
      %s244 = smul.u32 64, %s18
      %p245 = scmp.lt.s32.totalorder %s244, 127
      %s246 = scalar_select %p245, %s244, 127
      %s247 = smul.addr %s246, 8
      %s248 = scalar_lea.vmem %s0, %s247
      %p249 = pneg %p39
      %p250 = pneg %p36
      %p251 = pneg %p60
      %p252 = pneg %p57
      %p253 = pneg %p81
      %p254 = pneg %p78
      %p255 = pneg %p102
      %p256 = pneg %p99
      %p257 = pneg %p123
      %p258 = pneg %p120
      %p259 = pneg %p144
      %p260 = pneg %p141
      %p261 = pneg %p165
      %p262 = pneg %p162
      %p263 = pneg %p191
      %p264 = pneg %p188
      %s265 = smul.u32 64, %s18
      %p266 = scmp.lt.s32.totalorder %s265, 127
      %s267 = scalar_select %p266, %s265, 127
      %s268 = smul.addr %s267, 8
      %s269 = scalar_lea.vmem %s7, %s268
      %s270 = smul.u32 64, %s18
      %p271 = scmp.lt.s32.totalorder %s270, 127
      %s272 = scalar_select %p271, %s270, 127
      %s273 = smul.addr %s272, 8
      %s274 = scalar_lea.vmem %s0, %s273
      %s275 = smul.u32 64, %s18
      %s276 = smul.u32 64, %s18
      %p277 = scmp.lt.s32.totalorder %s276, 127
      %s278 = scalar_select %p277, %s276, 127
      %s279 = smul.addr %s278, 8
      %s280 = scalar_lea.vmem %s7, %s279
      %s281 = smul.u32 64, %s18
      %v282 = vld [vmem:[%s274] sm:$0xff]
      %v283 = vld [vmem:[%s274 + $0x8] sm:$0xff]
      %v284 = vld [vmem:[%s274 + $0x10] sm:$0xff]
      %v285 = vld [vmem:[%s274 + $0x18] sm:$0xff]
      %v286 = vld [vmem:[%s274 + $0x20] sm:$0xff]
      %v287 = vld [vmem:[%s274 + $0x28] sm:$0xff]
      %v288 = vld [vmem:[%s274 + $0x30] sm:$0xff]
      %v289 = vld [vmem:[%s274 + $0x38] sm:$0xff]
      %v290 = vld [vmem:[%s274 + $0x40] sm:$0xff]
      %v291 = vld [vmem:[%s274 + $0x48] sm:$0xff]
      %v292 = vld [vmem:[%s274 + $0x50] sm:$0xff]
      %v293 = vld [vmem:[%s274 + $0x58] sm:$0xff]
      %v294 = vld [vmem:[%s274 + $0x60] sm:$0xff]
      %v295 = vld [vmem:[%s274 + $0x68] sm:$0xff]
      %v296 = vld [vmem:[%s274 + $0x70] sm:$0xff]
      %v297 = vld [vmem:[%s274 + $0x78] sm:$0xff]
      %v298 = vld [vmem:[%s274 + $0x80] sm:$0xff]
      %v299 = vld [vmem:[%s274 + $0x88] sm:$0xff]
      %v300 = vld [vmem:[%s274 + $0x90] sm:$0xff]
      %v301 = vld [vmem:[%s274 + $0x98] sm:$0xff]
      %v302 = vld [vmem:[%s274 + $0xa0] sm:$0xff]
      %v303 = vld [vmem:[%s274 + $0xa8] sm:$0xff]
      %v304 = vld [vmem:[%s274 + $0xb0] sm:$0xff]
      %v305 = vld [vmem:[%s274 + $0xb8] sm:$0xff]
      %v306 = vld [vmem:[%s274 + $0xc0] sm:$0xff]
      %v307 = vld [vmem:[%s274 + $0xc8] sm:$0xff]
      %v308 = vld [vmem:[%s274 + $0xd0] sm:$0xff]
      %v309 = vld [vmem:[%s274 + $0xd8] sm:$0xff]
      %v310 = vld [vmem:[%s274 + $0xe0] sm:$0xff]
      %v311 = vld [vmem:[%s274 + $0xe8] sm:$0xff]
      %v312 = vld [vmem:[%s274 + $0xf0] sm:$0xff]
      %v313 = vld [vmem:[%s274 + $0xf8] sm:$0xff]
      %v314 = vld [vmem:[%s274 + $0x100] sm:$0xff]
      %v315 = vld [vmem:[%s274 + $0x108] sm:$0xff]
      %v316 = vld [vmem:[%s274 + $0x110] sm:$0xff]
      %v317 = vld [vmem:[%s274 + $0x118] sm:$0xff]
      %v318 = vld [vmem:[%s274 + $0x120] sm:$0xff]
      %v319 = vld [vmem:[%s274 + $0x128] sm:$0xff]
      %v320 = vld [vmem:[%s274 + $0x130] sm:$0xff]
      %v321 = vld [vmem:[%s274 + $0x138] sm:$0xff]
      %v322 = vld [vmem:[%s274 + $0x140] sm:$0xff]
      %v323 = vld [vmem:[%s274 + $0x148] sm:$0xff]
      %v324 = vld [vmem:[%s274 + $0x150] sm:$0xff]
      %v325 = vld [vmem:[%s274 + $0x158] sm:$0xff]
      %v326 = vld [vmem:[%s274 + $0x160] sm:$0xff]
      %v327 = vld [vmem:[%s274 + $0x168] sm:$0xff]
      %v328 = vld [vmem:[%s274 + $0x170] sm:$0xff]
      %v329 = vld [vmem:[%s274 + $0x178] sm:$0xff]
      %v330 = vld [vmem:[%s274 + $0x180] sm:$0xff]
      %v331 = vld [vmem:[%s274 + $0x188] sm:$0xff]
      %v332 = vld [vmem:[%s274 + $0x190] sm:$0xff]
      %v333 = vld [vmem:[%s274 + $0x198] sm:$0xff]
      %v334 = vld [vmem:[%s274 + $0x1a0] sm:$0xff]
      %v335 = vld [vmem:[%s274 + $0x1a8] sm:$0xff]
      %v336 = vld [vmem:[%s274 + $0x1b0] sm:$0xff]
      %v337 = vld [vmem:[%s274 + $0x1b8] sm:$0xff]
      %v338 = vld [vmem:[%s274 + $0x1c0] sm:$0xff]
      %v339 = vld [vmem:[%s274 + $0x1c8] sm:$0xff]
      %v340 = vld [vmem:[%s274 + $0x1d0] sm:$0xff]
      %v341 = vld [vmem:[%s274 + $0x1d8] sm:$0xff]
      %v342 = vld [vmem:[%s274 + $0x1e0] sm:$0xff]
      %v343 = vld [vmem:[%s274 + $0x1e8] sm:$0xff]
      %v344 = vld [vmem:[%s274 + $0x1f0] sm:$0xff]
      %v345 = vld [vmem:[%s274 + $0x1f8] sm:$0xff]
      %v346 = vld [vmem:[%s1] sm:$0xff]
      %v347 = vld [vmem:[%s1 + $0x8] sm:$0xff]
      %v348 = vld [vmem:[%s1 + $0x10] sm:$0xff]
      %v349 = vld [vmem:[%s1 + $0x18] sm:$0xff]
      %v350 = vld [vmem:[%s1 + $0x20] sm:$0xff]
      %v351 = vld [vmem:[%s1 + $0x28] sm:$0xff]
      %v352 = vld [vmem:[%s1 + $0x30] sm:$0xff]
      %v353 = vld [vmem:[%s1 + $0x38] sm:$0xff]
      %v354 = vld [vmem:[%s1 + $0x40] sm:$0xff]
      %v355 = vld [vmem:[%s1 + $0x48] sm:$0xff]
      %v356 = vld [vmem:[%s1 + $0x50] sm:$0xff]
      %v357 = vld [vmem:[%s1 + $0x58] sm:$0xff]
      %v358 = vld [vmem:[%s1 + $0x60] sm:$0xff]
      %v359 = vld [vmem:[%s1 + $0x68] sm:$0xff]
      %v360 = vld [vmem:[%s1 + $0x70] sm:$0xff]
      %v361 = vld [vmem:[%s1 + $0x78] sm:$0xff]
      %v362 = vld [vmem:[%s2] sm:$0x1]
      %v364 = vlaneseq
      %v365 = vshrl.u32 %v364, 7
      %v366 = vsub.s32 0, %v365
      %v367 = vrot.slane %v362, %v366
      %369 = vmatprep.subr.mxu0 0.0
      %370 = vmatpush1.msra.mxu0 %v346
      %371 = vmatprep.subr.mxu0 0.0
      %372 = vmatpush1.msra.mxu0 %v347
      %373 = vmatprep.subr.mxu0 0.0
      %374 = vmatpush1.msra.mxu0 %v348
      %375 = vmatprep.subr.mxu0 0.0
      %376 = vmatpush1.msra.mxu0 %v349
      %377 = vmatprep.subr.mxu0 0.0
      %378 = vmatpush1.msra.mxu0 %v350
      %379 = vmatprep.subr.mxu0 0.0
      %380 = vmatpush1.msra.mxu0 %v351
      %381 = vmatprep.subr.mxu0 0.0
      %382 = vmatpush1.msra.mxu0 %v352
      %383 = vmatprep.subr.mxu0 0.0
      %384 = vmatpush1.msra.mxu0 %v353
      %385 = vmatprep.subr.mxu0 0.0
      %386 = vmatpush1.msra.mxu0 %v354
      %387 = vmatprep.subr.mxu0 0.0
      %388 = vmatpush1.msra.mxu0 %v355
      %389 = vmatprep.subr.mxu0 0.0
      %390 = vmatpush1.msra.mxu0 %v356
      %391 = vmatprep.subr.mxu0 0.0
      %392 = vmatpush1.msra.mxu0 %v357
      %393 = vmatprep.subr.mxu0 0.0
      %394 = vmatpush1.msra.mxu0 %v358
      %395 = vmatprep.subr.mxu0 0.0
      %396 = vmatpush1.msra.mxu0 %v359
      %397 = vmatprep.subr.mxu0 0.0
      %398 = vmatpush1.msra.mxu0 %v360
      %399 = vmatprep.subr.mxu0 0.0
      %400 = vmatpush1.msra.mxu0 %v361
      %401 = vmatprep.subr.mxu0 0.0
      %402 = vmatpush1.msra.mxu0 0.0
      %403 = vmatprep.subr.mxu0 0.0
      %404 = vmatpush1.msra.mxu0 0.0
      %405 = vmatprep.subr.mxu0 0.0
      %406 = vmatpush1.msra.mxu0 0.0
      %407 = vmatprep.subr.mxu0 0.0
      %408 = vmatpush1.msra.mxu0 0.0
      %409 = vmatprep.subr.mxu0 0.0
      %410 = vmatpush1.msra.mxu0 0.0
      %411 = vmatprep.subr.mxu0 0.0
      %412 = vmatpush1.msra.mxu0 0.0
      %413 = vmatprep.subr.mxu0 0.0
      %414 = vmatpush1.msra.mxu0 0.0
      %415 = vmatprep.subr.mxu0 0.0
      %416 = vmatpush1.msra.mxu0 0.0
      %417 = vmatprep.subr.mxu0 0.0
      %418 = vmatpush1.msra.mxu0 0.0
      %419 = vmatprep.subr.mxu0 0.0
      %420 = vmatpush1.msra.mxu0 0.0
      %421 = vmatprep.subr.mxu0 0.0
      %422 = vmatpush1.msra.mxu0 0.0
      %423 = vmatprep.subr.mxu0 0.0
      %424 = vmatpush1.msra.mxu0 0.0
      %425 = vmatprep.subr.mxu0 0.0
      %426 = vmatpush1.msra.mxu0 0.0
      %427 = vmatprep.subr.mxu0 0.0
      %428 = vmatpush1.msra.mxu0 0.0
      %429 = vmatprep.subr.mxu0 0.0
      %430 = vmatpush1.msra.mxu0 0.0
      %431 = vmatprep.subr.mxu0 0.0
      %432 = vmatpush1.msra.mxu0 0.0
      %433 = vmatprep.mubr.f32.mxu0 0.0
      %434 = vmatmul.mubr.f32.gmra.mrb[0].mxu0 %v282
      %v435 = vpop.f32.mrb[0].mxu0
      %v436 = vadd.f32 %v367, %v435
      %v437 = vpop.f32.mrb[0].mxu0
      %438 = vmatprep.mubr.f32.mxu0 0.0
      %439 = vmatmul.mubr.f32.gmra.mrb[0].mxu0 %v283
      %v440 = vpop.f32.mrb[0].mxu0
      %v441 = vadd.f32 %v367, %v440
      %v442 = vpop.f32.mrb[0].mxu0
      %443 = vmatprep.mubr.f32.mxu0 0.0
      %444 = vmatmul.mubr.f32.gmra.mrb[0].mxu0 %v284
      %v445 = vpop.f32.mrb[0].mxu0
      %v446 = vadd.f32 %v367, %v445
      %v447 = vpop.f32.mrb[0].mxu0
      %448 = vmatprep.mubr.f32.mxu0 0.0
      %449 = vmatmul.mubr.f32.gmra.mrb[0].mxu0 %v285
      %v450 = vpop.f32.mrb[0].mxu0
      %v451 = vadd.f32 %v367, %v450
      %v452 = vpop.f32.mrb[0].mxu0
      %453 = vmatprep.mubr.f32.mxu0 0.0
      %454 = vmatmul.mubr.f32.gmra.mrb[0].mxu0 %v286
      %v455 = vpop.f32.mrb[0].mxu0
      %v456 = vadd.f32 %v367, %v455
      %v457 = vpop.f32.mrb[0].mxu0
      %458 = vmatprep.mubr.f32.mxu0 0.0
      %459 = vmatmul.mubr.f32.gmra.mrb[0].mxu0 %v287
      %v460 = vpop.f32.mrb[0].mxu0
      %v461 = vadd.f32 %v367, %v460
      %v462 = vpop.f32.mrb[0].mxu0
      %463 = vmatprep.mubr.f32.mxu0 0.0
      %464 = vmatmul.mubr.f32.gmra.mrb[0].mxu0 %v288
      %v465 = vpop.f32.mrb[0].mxu0
      %v466 = vadd.f32 %v367, %v465
      %v467 = vpop.f32.mrb[0].mxu0
      %468 = vmatprep.mubr.f32.mxu0 0.0
      %469 = vmatmul.mubr.f32.gmra.mrb[0].mxu0 %v289
      %v470 = vpop.f32.mrb[0].mxu0
      %v471 = vadd.f32 %v367, %v470
      %v472 = vpop.f32.mrb[0].mxu0
      %473 = vmatprep.mubr.f32.mxu0 0.0
      %474 = vmatmul.mubr.f32.gmra.mrb[0].mxu0 %v290
      %v475 = vpop.f32.mrb[0].mxu0
      %v476 = vadd.f32 %v367, %v475
      %v477 = vpop.f32.mrb[0].mxu0
      %478 = vmatprep.mubr.f32.mxu0 0.0
      %479 = vmatmul.mubr.f32.gmra.mrb[0].mxu0 %v291
      %v480 = vpop.f32.mrb[0].mxu0
      %v481 = vadd.f32 %v367, %v480
      %v482 = vpop.f32.mrb[0].mxu0
      %483 = vmatprep.mubr.f32.mxu0 0.0
      %484 = vmatmul.mubr.f32.gmra.mrb[0].mxu0 %v292
      %v485 = vpop.f32.mrb[0].mxu0
      %v486 = vadd.f32 %v367, %v485
      %v487 = vpop.f32.mrb[0].mxu0
      %488 = vmatprep.mubr.f32.mxu0 0.0
      %489 = vmatmul.mubr.f32.gmra.mrb[0].mxu0 %v293
      %v490 = vpop.f32.mrb[0].mxu0
      %v491 = vadd.f32 %v367, %v490
      %v492 = vpop.f32.mrb[0].mxu0
      %493 = vmatprep.mubr.f32.mxu0 0.0
      %494 = vmatmul.mubr.f32.gmra.mrb[0].mxu0 %v294
      %v495 = vpop.f32.mrb[0].mxu0
      %v496 = vadd.f32 %v367, %v495
      %v497 = vpop.f32.mrb[0].mxu0
      %498 = vmatprep.mubr.f32.mxu0 0.0
      %499 = vmatmul.mubr.f32.gmra.mrb[0].mxu0 %v295
      %v500 = vpop.f32.mrb[0].mxu0
      %v501 = vadd.f32 %v367, %v500
      %v502 = vpop.f32.mrb[0].mxu0
      %503 = vmatprep.mubr.f32.mxu0 0.0
      %504 = vmatmul.mubr.f32.gmra.mrb[0].mxu0 %v296
      %v505 = vpop.f32.mrb[0].mxu0
      %v506 = vadd.f32 %v367, %v505
      %v507 = vpop.f32.mrb[0].mxu0
      %508 = vmatprep.mubr.f32.mxu0 0.0
      %509 = vmatmul.mubr.f32.gmra.mrb[0].mxu0 %v297
      %v510 = vpop.f32.mrb[0].mxu0
      %v511 = vadd.f32 %v367, %v510
      %v512 = vpop.f32.mrb[0].mxu0
      %513 = vmatprep.mubr.f32.mxu0 0.0
      %514 = vmatmul.mubr.f32.gmra.mrb[0].mxu0 %v298
      %v515 = vpop.f32.mrb[0].mxu0
      %v516 = vadd.f32 %v367, %v515
      %v517 = vpop.f32.mrb[0].mxu0
      %518 = vmatprep.mubr.f32.mxu0 0.0
      %519 = vmatmul.mubr.f32.gmra.mrb[0].mxu0 %v299
      %v520 = vpop.f32.mrb[0].mxu0
      %v521 = vadd.f32 %v367, %v520
      %v522 = vpop.f32.mrb[0].mxu0
      %523 = vmatprep.mubr.f32.mxu0 0.0
      %524 = vmatmul.mubr.f32.gmra.mrb[0].mxu0 %v300
      %v525 = vpop.f32.mrb[0].mxu0
      %v526 = vadd.f32 %v367, %v525
      %v527 = vpop.f32.mrb[0].mxu0
      %528 = vmatprep.mubr.f32.mxu0 0.0
      %529 = vmatmul.mubr.f32.gmra.mrb[0].mxu0 %v301
      %v530 = vpop.f32.mrb[0].mxu0
      %v531 = vadd.f32 %v367, %v530
      %v532 = vpop.f32.mrb[0].mxu0
      %533 = vmatprep.mubr.f32.mxu0 0.0
      %534 = vmatmul.mubr.f32.gmra.mrb[0].mxu0 %v302
      %v535 = vpop.f32.mrb[0].mxu0
      %v536 = vadd.f32 %v367, %v535
      %v537 = vpop.f32.mrb[0].mxu0
      %538 = vmatprep.mubr.f32.mxu0 0.0
      %539 = vmatmul.mubr.f32.gmra.mrb[0].mxu0 %v303
      %v540 = vpop.f32.mrb[0].mxu0
      %v541 = vadd.f32 %v367, %v540
      %v542 = vpop.f32.mrb[0].mxu0
      %543 = vmatprep.mubr.f32.mxu0 0.0
      %544 = vmatmul.mubr.f32.gmra.mrb[0].mxu0 %v304
      %v545 = vpop.f32.mrb[0].mxu0
      %v546 = vadd.f32 %v367, %v545
      %v547 = vpop.f32.mrb[0].mxu0
      %548 = vmatprep.mubr.f32.mxu0 0.0
      %549 = vmatmul.mubr.f32.gmra.mrb[0].mxu0 %v305
      %v550 = vpop.f32.mrb[0].mxu0
      %v551 = vadd.f32 %v367, %v550
      %v552 = vpop.f32.mrb[0].mxu0
      %553 = vmatprep.mubr.f32.mxu0 0.0
      %554 = vmatmul.mubr.f32.gmra.mrb[0].mxu0 %v306
      %v555 = vpop.f32.mrb[0].mxu0
      %v556 = vadd.f32 %v367, %v555
      %v557 = vpop.f32.mrb[0].mxu0
      %558 = vmatprep.mubr.f32.mxu0 0.0
      %559 = vmatmul.mubr.f32.gmra.mrb[0].mxu0 %v307
      %v560 = vpop.f32.mrb[0].mxu0
      %v561 = vadd.f32 %v367, %v560
      %v562 = vpop.f32.mrb[0].mxu0
      %563 = vmatprep.mubr.f32.mxu0 0.0
      %564 = vmatmul.mubr.f32.gmra.mrb[0].mxu0 %v308
      %v565 = vpop.f32.mrb[0].mxu0
      %v566 = vadd.f32 %v367, %v565
      %v567 = vpop.f32.mrb[0].mxu0
      %568 = vmatprep.mubr.f32.mxu0 0.0
      %569 = vmatmul.mubr.f32.gmra.mrb[0].mxu0 %v309
      %v570 = vpop.f32.mrb[0].mxu0
      %v571 = vadd.f32 %v367, %v570
      %v572 = vpop.f32.mrb[0].mxu0
      %573 = vmatprep.mubr.f32.mxu0 0.0
      %574 = vmatmul.mubr.f32.gmra.mrb[0].mxu0 %v310
      %v575 = vpop.f32.mrb[0].mxu0
      %v576 = vadd.f32 %v367, %v575
      %v577 = vpop.f32.mrb[0].mxu0
      %578 = vmatprep.mubr.f32.mxu0 0.0
      %579 = vmatmul.mubr.f32.gmra.mrb[0].mxu0 %v311
      %v580 = vpop.f32.mrb[0].mxu0
      %v581 = vadd.f32 %v367, %v580
      %v582 = vpop.f32.mrb[0].mxu0
      %583 = vmatprep.mubr.f32.mxu0 0.0
      %584 = vmatmul.mubr.f32.gmra.mrb[0].mxu0 %v312
      %v585 = vpop.f32.mrb[0].mxu0
      %v586 = vadd.f32 %v367, %v585
      %v587 = vpop.f32.mrb[0].mxu0
      %588 = vmatprep.mubr.f32.mxu0 0.0
      %589 = vmatmul.mubr.f32.gmra.mrb[0].mxu0 %v313
      %v590 = vpop.f32.mrb[0].mxu0
      %v591 = vadd.f32 %v367, %v590
      %v592 = vpop.f32.mrb[0].mxu0
      %593 = vmatprep.mubr.f32.mxu0 0.0
      %594 = vmatmul.mubr.f32.gmra.mrb[0].mxu0 %v314
      %v595 = vpop.f32.mrb[0].mxu0
      %v596 = vadd.f32 %v367, %v595
      %v597 = vpop.f32.mrb[0].mxu0
      %598 = vmatprep.mubr.f32.mxu0 0.0
      %599 = vmatmul.mubr.f32.gmra.mrb[0].mxu0 %v315
      %v600 = vpop.f32.mrb[0].mxu0
      %v601 = vadd.f32 %v367, %v600
      %v602 = vpop.f32.mrb[0].mxu0
      %603 = vmatprep.mubr.f32.mxu0 0.0
      %604 = vmatmul.mubr.f32.gmra.mrb[0].mxu0 %v316
      %v605 = vpop.f32.mrb[0].mxu0
      %v606 = vadd.f32 %v367, %v605
      %v607 = vpop.f32.mrb[0].mxu0
      %608 = vmatprep.mubr.f32.mxu0 0.0
      %609 = vmatmul.mubr.f32.gmra.mrb[0].mxu0 %v317
      %v610 = vpop.f32.mrb[0].mxu0
      %v611 = vadd.f32 %v367, %v610
      %v612 = vpop.f32.mrb[0].mxu0
      %613 = vmatprep.mubr.f32.mxu0 0.0
      %614 = vmatmul.mubr.f32.gmra.mrb[0].mxu0 %v318
      %v615 = vpop.f32.mrb[0].mxu0
      %v616 = vadd.f32 %v367, %v615
      %v617 = vpop.f32.mrb[0].mxu0
      %618 = vmatprep.mubr.f32.mxu0 0.0
      %619 = vmatmul.mubr.f32.gmra.mrb[0].mxu0 %v319
      %v620 = vpop.f32.mrb[0].mxu0
      %v621 = vadd.f32 %v367, %v620
      %v622 = vpop.f32.mrb[0].mxu0
      %623 = vmatprep.mubr.f32.mxu0 0.0
      %624 = vmatmul.mubr.f32.gmra.mrb[0].mxu0 %v320
      %v625 = vpop.f32.mrb[0].mxu0
      %v626 = vadd.f32 %v367, %v625
      %v627 = vpop.f32.mrb[0].mxu0
      %628 = vmatprep.mubr.f32.mxu0 0.0
      %629 = vmatmul.mubr.f32.gmra.mrb[0].mxu0 %v321
      %v630 = vpop.f32.mrb[0].mxu0
      %v631 = vadd.f32 %v367, %v630
      %v632 = vpop.f32.mrb[0].mxu0
      %633 = vmatprep.mubr.f32.mxu0 0.0
      %634 = vmatmul.mubr.f32.gmra.mrb[0].mxu0 %v322
      %v635 = vpop.f32.mrb[0].mxu0
      %v636 = vadd.f32 %v367, %v635
      %v637 = vpop.f32.mrb[0].mxu0
      %638 = vmatprep.mubr.f32.mxu0 0.0
      %639 = vmatmul.mubr.f32.gmra.mrb[0].mxu0 %v323
      %v640 = vpop.f32.mrb[0].mxu0
      %v641 = vadd.f32 %v367, %v640
      %v642 = vpop.f32.mrb[0].mxu0
      %643 = vmatprep.mubr.f32.mxu0 0.0
      %644 = vmatmul.mubr.f32.gmra.mrb[0].mxu0 %v324
      %v645 = vpop.f32.mrb[0].mxu0
      %v646 = vadd.f32 %v367, %v645
      %v647 = vpop.f32.mrb[0].mxu0
      %648 = vmatprep.mubr.f32.mxu0 0.0
      %649 = vmatmul.mubr.f32.gmra.mrb[0].mxu0 %v325
      %v650 = vpop.f32.mrb[0].mxu0
      %v651 = vadd.f32 %v367, %v650
      %v652 = vpop.f32.mrb[0].mxu0
      %653 = vmatprep.mubr.f32.mxu0 0.0
      %654 = vmatmul.mubr.f32.gmra.mrb[0].mxu0 %v326
      %v655 = vpop.f32.mrb[0].mxu0
      %v656 = vadd.f32 %v367, %v655
      %v657 = vpop.f32.mrb[0].mxu0
      %658 = vmatprep.mubr.f32.mxu0 0.0
      %659 = vmatmul.mubr.f32.gmra.mrb[0].mxu0 %v327
      %v660 = vpop.f32.mrb[0].mxu0
      %v661 = vadd.f32 %v367, %v660
      %v662 = vpop.f32.mrb[0].mxu0
      %663 = vmatprep.mubr.f32.mxu0 0.0
      %664 = vmatmul.mubr.f32.gmra.mrb[0].mxu0 %v328
      %v665 = vpop.f32.mrb[0].mxu0
      %v666 = vadd.f32 %v367, %v665
      %v667 = vpop.f32.mrb[0].mxu0
      %668 = vmatprep.mubr.f32.mxu0 0.0
      %669 = vmatmul.mubr.f32.gmra.mrb[0].mxu0 %v329
      %v670 = vpop.f32.mrb[0].mxu0
      %v671 = vadd.f32 %v367, %v670
      %v672 = vpop.f32.mrb[0].mxu0
      %673 = vmatprep.mubr.f32.mxu0 0.0
      %674 = vmatmul.mubr.f32.gmra.mrb[0].mxu0 %v330
      %v675 = vpop.f32.mrb[0].mxu0
      %v676 = vadd.f32 %v367, %v675
      %v677 = vpop.f32.mrb[0].mxu0
      %678 = vmatprep.mubr.f32.mxu0 0.0
      %679 = vmatmul.mubr.f32.gmra.mrb[0].mxu0 %v331
      %v680 = vpop.f32.mrb[0].mxu0
      %v681 = vadd.f32 %v367, %v680
      %v682 = vpop.f32.mrb[0].mxu0
      %683 = vmatprep.mubr.f32.mxu0 0.0
      %684 = vmatmul.mubr.f32.gmra.mrb[0].mxu0 %v332
      %v685 = vpop.f32.mrb[0].mxu0
      %v686 = vadd.f32 %v367, %v685
      %v687 = vpop.f32.mrb[0].mxu0
      %688 = vmatprep.mubr.f32.mxu0 0.0
      %689 = vmatmul.mubr.f32.gmra.mrb[0].mxu0 %v333
      %v690 = vpop.f32.mrb[0].mxu0
      %v691 = vadd.f32 %v367, %v690
      %v692 = vpop.f32.mrb[0].mxu0
      %693 = vmatprep.mubr.f32.mxu0 0.0
      %694 = vmatmul.mubr.f32.gmra.mrb[0].mxu0 %v334
      %v695 = vpop.f32.mrb[0].mxu0
      %v696 = vadd.f32 %v367, %v695
      %v697 = vpop.f32.mrb[0].mxu0
      %698 = vmatprep.mubr.f32.mxu0 0.0
      %699 = vmatmul.mubr.f32.gmra.mrb[0].mxu0 %v335
      %v700 = vpop.f32.mrb[0].mxu0
      %v701 = vadd.f32 %v367, %v700
      %v702 = vpop.f32.mrb[0].mxu0
      %703 = vmatprep.mubr.f32.mxu0 0.0
      %704 = vmatmul.mubr.f32.gmra.mrb[0].mxu0 %v336
      %v705 = vpop.f32.mrb[0].mxu0
      %v706 = vadd.f32 %v367, %v705
      %v707 = vpop.f32.mrb[0].mxu0
      %708 = vmatprep.mubr.f32.mxu0 0.0
      %709 = vmatmul.mubr.f32.gmra.mrb[0].mxu0 %v337
      %v710 = vpop.f32.mrb[0].mxu0
      %v711 = vadd.f32 %v367, %v710
      %v712 = vpop.f32.mrb[0].mxu0
      %713 = vmatprep.mubr.f32.mxu0 0.0
      %714 = vmatmul.mubr.f32.gmra.mrb[0].mxu0 %v338
      %v715 = vpop.f32.mrb[0].mxu0
      %v716 = vadd.f32 %v367, %v715
      %v717 = vpop.f32.mrb[0].mxu0
      %718 = vmatprep.mubr.f32.mxu0 0.0
      %719 = vmatmul.mubr.f32.gmra.mrb[0].mxu0 %v339
      %v720 = vpop.f32.mrb[0].mxu0
      %v721 = vadd.f32 %v367, %v720
      %v722 = vpop.f32.mrb[0].mxu0
      %723 = vmatprep.mubr.f32.mxu0 0.0
      %724 = vmatmul.mubr.f32.gmra.mrb[0].mxu0 %v340
      %v725 = vpop.f32.mrb[0].mxu0
      %v726 = vadd.f32 %v367, %v725
      %v727 = vpop.f32.mrb[0].mxu0
      %728 = vmatprep.mubr.f32.mxu0 0.0
      %729 = vmatmul.mubr.f32.gmra.mrb[0].mxu0 %v341
      %v730 = vpop.f32.mrb[0].mxu0
      %v731 = vadd.f32 %v367, %v730
      %v732 = vpop.f32.mrb[0].mxu0
      %733 = vmatprep.mubr.f32.mxu0 0.0
      %734 = vmatmul.mubr.f32.gmra.mrb[0].mxu0 %v342
      %v735 = vpop.f32.mrb[0].mxu0
      %v736 = vadd.f32 %v367, %v735
      %v737 = vpop.f32.mrb[0].mxu0
      %738 = vmatprep.mubr.f32.mxu0 0.0
      %739 = vmatmul.mubr.f32.gmra.mrb[0].mxu0 %v343
      %v740 = vpop.f32.mrb[0].mxu0
      %v741 = vadd.f32 %v367, %v740
      %v742 = vpop.f32.mrb[0].mxu0
      %743 = vmatprep.mubr.f32.mxu0 0.0
      %744 = vmatmul.mubr.f32.gmra.mrb[0].mxu0 %v344
      %v745 = vpop.f32.mrb[0].mxu0
      %v746 = vadd.f32 %v367, %v745
      %v747 = vpop.f32.mrb[0].mxu0
      %748 = vmatprep.mubr.f32.mxu0 0.0
      %749 = vmatmul.mubr.f32.gmra.mrb[0].mxu0 %v345
      %v750 = vpop.f32.mrb[0].mxu0
      %v751 = vadd.f32 %v367, %v750
      %v752 = vpop.f32.mrb[0].mxu0
      %753 = vdwg.mxu0
      %v754 = vmax.f32 %v436, 0.0
      %v755 = vmax.f32 %v441, 0.0
      %v756 = vmax.f32 %v446, 0.0
      %v757 = vmax.f32 %v451, 0.0
      %v758 = vmax.f32 %v456, 0.0
      %v759 = vmax.f32 %v461, 0.0
      %v760 = vmax.f32 %v466, 0.0
      %v761 = vmax.f32 %v471, 0.0
      %v762 = vmax.f32 %v476, 0.0
      %v763 = vmax.f32 %v481, 0.0
      %v764 = vmax.f32 %v486, 0.0
      %v765 = vmax.f32 %v491, 0.0
      %v766 = vmax.f32 %v496, 0.0
      %v767 = vmax.f32 %v501, 0.0
      %v768 = vmax.f32 %v506, 0.0
      %v769 = vmax.f32 %v511, 0.0
      %v770 = vmax.f32 %v516, 0.0
      %v771 = vmax.f32 %v521, 0.0
      %v772 = vmax.f32 %v526, 0.0
      %v773 = vmax.f32 %v531, 0.0
      %v774 = vmax.f32 %v536, 0.0
      %v775 = vmax.f32 %v541, 0.0
      %v776 = vmax.f32 %v546, 0.0
      %v777 = vmax.f32 %v551, 0.0
      %v778 = vmax.f32 %v556, 0.0
      %v779 = vmax.f32 %v561, 0.0
      %v780 = vmax.f32 %v566, 0.0
      %v781 = vmax.f32 %v571, 0.0
      %v782 = vmax.f32 %v576, 0.0
      %v783 = vmax.f32 %v581, 0.0
      %v784 = vmax.f32 %v586, 0.0
      %v785 = vmax.f32 %v591, 0.0
      %v786 = vmax.f32 %v596, 0.0
      %v787 = vmax.f32 %v601, 0.0
      %v788 = vmax.f32 %v606, 0.0
      %v789 = vmax.f32 %v611, 0.0
      %v790 = vmax.f32 %v616, 0.0
      %v791 = vmax.f32 %v621, 0.0
      %v792 = vmax.f32 %v626, 0.0
      %v793 = vmax.f32 %v631, 0.0
      %v794 = vmax.f32 %v636, 0.0
      %v795 = vmax.f32 %v641, 0.0
      %v796 = vmax.f32 %v646, 0.0
      %v797 = vmax.f32 %v651, 0.0
      %v798 = vmax.f32 %v656, 0.0
      %v799 = vmax.f32 %v661, 0.0
      %v800 = vmax.f32 %v666, 0.0
      %v801 = vmax.f32 %v671, 0.0
      %v802 = vmax.f32 %v676, 0.0
      %v803 = vmax.f32 %v681, 0.0
      %v804 = vmax.f32 %v686, 0.0
      %v805 = vmax.f32 %v691, 0.0
      %v806 = vmax.f32 %v696, 0.0
      %v807 = vmax.f32 %v701, 0.0
      %v808 = vmax.f32 %v706, 0.0
      %v809 = vmax.f32 %v711, 0.0
      %v810 = vmax.f32 %v716, 0.0
      %v811 = vmax.f32 %v721, 0.0
      %v812 = vmax.f32 %v726, 0.0
      %v813 = vmax.f32 %v731, 0.0
      %v814 = vmax.f32 %v736, 0.0
      %v815 = vmax.f32 %v741, 0.0
      %v816 = vmax.f32 %v746, 0.0
      %v817 = vmax.f32 %v751, 0.0
      %v818 = vld [vmem:[%s3] sm:$0xff]
      %v819 = vld [vmem:[%s3 + $0x8] sm:$0xff]
      %v820 = vld [vmem:[%s3 + $0x10] sm:$0xff]
      %v821 = vld [vmem:[%s3 + $0x18] sm:$0xff]
      %v822 = vld [vmem:[%s3 + $0x20] sm:$0xff]
      %v823 = vld [vmem:[%s3 + $0x28] sm:$0xff]
      %v824 = vld [vmem:[%s3 + $0x30] sm:$0xff]
      %v825 = vld [vmem:[%s3 + $0x38] sm:$0xff]
      %v826 = vld [vmem:[%s4] sm:$0x1]
      %v828 = vlaneseq
      %v829 = vshrl.u32 %v828, 7
      %v830 = vsub.s32 0, %v829
      %v831 = vrot.slane %v826, %v830
      %vm833 = vcmask 523264
      %v835 = vsel %vm833, %v754, 0
      %v838 = vsel %vm833, %v755, 0
      %v841 = vsel %vm833, %v756, 0
      %v844 = vsel %vm833, %v757, 0
      %v847 = vsel %vm833, %v758, 0
      %v850 = vsel %vm833, %v759, 0
      %v853 = vsel %vm833, %v760, 0
      %v856 = vsel %vm833, %v761, 0
      %v859 = vsel %vm833, %v762, 0
      %v862 = vsel %vm833, %v763, 0
      %v865 = vsel %vm833, %v764, 0
      %v868 = vsel %vm833, %v765, 0
      %v871 = vsel %vm833, %v766, 0
      %v874 = vsel %vm833, %v767, 0
      %v877 = vsel %vm833, %v768, 0
      %v880 = vsel %vm833, %v769, 0
      %v883 = vsel %vm833, %v770, 0
      %v886 = vsel %vm833, %v771, 0
      %v889 = vsel %vm833, %v772, 0
      %v892 = vsel %vm833, %v773, 0
      %v895 = vsel %vm833, %v774, 0
      %v898 = vsel %vm833, %v775, 0
      %v901 = vsel %vm833, %v776, 0
      %v904 = vsel %vm833, %v777, 0
      %v907 = vsel %vm833, %v778, 0
      %v910 = vsel %vm833, %v779, 0
      %v913 = vsel %vm833, %v780, 0
      %v916 = vsel %vm833, %v781, 0
      %v919 = vsel %vm833, %v782, 0
      %v922 = vsel %vm833, %v783, 0
      %v925 = vsel %vm833, %v784, 0
      %v928 = vsel %vm833, %v785, 0
      %v931 = vsel %vm833, %v786, 0
      %v934 = vsel %vm833, %v787, 0
      %v937 = vsel %vm833, %v788, 0
      %v940 = vsel %vm833, %v789, 0
      %v943 = vsel %vm833, %v790, 0
      %v946 = vsel %vm833, %v791, 0
      %v949 = vsel %vm833, %v792, 0
      %v952 = vsel %vm833, %v793, 0
      %v955 = vsel %vm833, %v794, 0
      %v958 = vsel %vm833, %v795, 0
      %v961 = vsel %vm833, %v796, 0
      %v964 = vsel %vm833, %v797, 0
      %v967 = vsel %vm833, %v798, 0
      %v970 = vsel %vm833, %v799, 0
      %v973 = vsel %vm833, %v800, 0
      %v976 = vsel %vm833, %v801, 0
      %v979 = vsel %vm833, %v802, 0
      %v982 = vsel %vm833, %v803, 0
      %v985 = vsel %vm833, %v804, 0
      %v988 = vsel %vm833, %v805, 0
      %v991 = vsel %vm833, %v806, 0
      %v994 = vsel %vm833, %v807, 0
      %v997 = vsel %vm833, %v808, 0
      %v1000 = vsel %vm833, %v809, 0
      %v1003 = vsel %vm833, %v810, 0
      %v1006 = vsel %vm833, %v811, 0
      %v1009 = vsel %vm833, %v812, 0
      %v1012 = vsel %vm833, %v813, 0
      %v1015 = vsel %vm833, %v814, 0
      %v1018 = vsel %vm833, %v815, 0
      %v1021 = vsel %vm833, %v816, 0
      %v1024 = vsel %vm833, %v817, 0
      %1026 = vmatprep.subr.mxu0 0.0
      %1027 = vmatpush1.msra.mxu0 %v818
      %1028 = vmatprep.subr.mxu0 0.0
      %1029 = vmatpush1.msra.mxu0 %v819
      %1030 = vmatprep.subr.mxu0 0.0
      %1031 = vmatpush1.msra.mxu0 %v820
      %1032 = vmatprep.subr.mxu0 0.0
      %1033 = vmatpush1.msra.mxu0 %v821
      %1034 = vmatprep.subr.mxu0 0.0
      %1035 = vmatpush1.msra.mxu0 %v822
      %1036 = vmatprep.subr.mxu0 0.0
      %1037 = vmatpush1.msra.mxu0 %v823
      %1038 = vmatprep.subr.mxu0 0.0
      %1039 = vmatpush1.msra.mxu0 %v824
      %1040 = vmatprep.subr.mxu0 0.0
      %1041 = vmatpush1.msra.mxu0 %v825
      %1042 = vmatprep.subr.mxu0 0.0
      %1043 = vmatpush1.msra.mxu0 0.0
      %1044 = vmatprep.subr.mxu0 0.0
      %1045 = vmatpush1.msra.mxu0 0.0
      %1046 = vmatprep.subr.mxu0 0.0
      %1047 = vmatpush1.msra.mxu0 0.0
      %1048 = vmatprep.subr.mxu0 0.0
      %1049 = vmatpush1.msra.mxu0 0.0
      %1050 = vmatprep.subr.mxu0 0.0
      %1051 = vmatpush1.msra.mxu0 0.0
      %1052 = vmatprep.subr.mxu0 0.0
      %1053 = vmatpush1.msra.mxu0 0.0
      %1054 = vmatprep.subr.mxu0 0.0
      %1055 = vmatpush1.msra.mxu0 0.0
      %1056 = vmatprep.subr.mxu0 0.0
      %1057 = vmatpush1.msra.mxu0 0.0
      %1058 = vmatprep.subr.mxu0 0.0
      %1059 = vmatpush1.msra.mxu0 0.0
      %1060 = vmatprep.subr.mxu0 0.0
      %1061 = vmatpush1.msra.mxu0 0.0
      %1062 = vmatprep.subr.mxu0 0.0
      %1063 = vmatpush1.msra.mxu0 0.0
      %1064 = vmatprep.subr.mxu0 0.0
      %1065 = vmatpush1.msra.mxu0 0.0
      %1066 = vmatprep.subr.mxu0 0.0
      %1067 = vmatpush1.msra.mxu0 0.0
      %1068 = vmatprep.subr.mxu0 0.0
      %1069 = vmatpush1.msra.mxu0 0.0
      %1070 = vmatprep.subr.mxu0 0.0
      %1071 = vmatpush1.msra.mxu0 0.0
      %1072 = vmatprep.subr.mxu0 0.0
      %1073 = vmatpush1.msra.mxu0 0.0
      %1074 = vmatprep.subr.mxu0 0.0
      %1075 = vmatpush1.msra.mxu0 0.0
      %1076 = vmatprep.subr.mxu0 0.0
      %1077 = vmatpush1.msra.mxu0 0.0
      %1078 = vmatprep.subr.mxu0 0.0
      %1079 = vmatpush1.msra.mxu0 0.0
      %1080 = vmatprep.subr.mxu0 0.0
      %1081 = vmatpush1.msra.mxu0 0.0
      %1082 = vmatprep.subr.mxu0 0.0
      %1083 = vmatpush1.msra.mxu0 0.0
      %1084 = vmatprep.subr.mxu0 0.0
      %1085 = vmatpush1.msra.mxu0 0.0
      %1086 = vmatprep.subr.mxu0 0.0
      %1087 = vmatpush1.msra.mxu0 0.0
      %1088 = vmatprep.subr.mxu0 0.0
      %1089 = vmatpush1.msra.mxu0 0.0
      %1090 = vmatprep.mubr.f32.mxu0 0.0
      %1091 = vmatmul.mubr.f32.gmra.mrb[0].mxu0 %v835
      %v1092 = vpop.f32.mrb[0].mxu0
      %v1093 = vadd.f32 %v831, %v1092
      %v1094 = vpop.f32.mrb[0].mxu0
      %1095 = vmatprep.mubr.f32.mxu0 0.0
      %1096 = vmatmul.mubr.f32.gmra.mrb[0].mxu0 %v838
      %v1097 = vpop.f32.mrb[0].mxu0
      %v1098 = vadd.f32 %v831, %v1097
      %v1099 = vpop.f32.mrb[0].mxu0
      %1100 = vmatprep.mubr.f32.mxu0 0.0
      %1101 = vmatmul.mubr.f32.gmra.mrb[0].mxu0 %v841
      %v1102 = vpop.f32.mrb[0].mxu0
      %v1103 = vadd.f32 %v831, %v1102
      %v1104 = vpop.f32.mrb[0].mxu0
      %1105 = vmatprep.mubr.f32.mxu0 0.0
      %1106 = vmatmul.mubr.f32.gmra.mrb[0].mxu0 %v844
      %v1107 = vpop.f32.mrb[0].mxu0
      %v1108 = vadd.f32 %v831, %v1107
      %v1109 = vpop.f32.mrb[0].mxu0
      %1110 = vmatprep.mubr.f32.mxu0 0.0
      %1111 = vmatmul.mubr.f32.gmra.mrb[0].mxu0 %v847
      %v1112 = vpop.f32.mrb[0].mxu0
      %v1113 = vadd.f32 %v831, %v1112
      %v1114 = vpop.f32.mrb[0].mxu0
      %1115 = vmatprep.mubr.f32.mxu0 0.0
      %1116 = vmatmul.mubr.f32.gmra.mrb[0].mxu0 %v850
      %v1117 = vpop.f32.mrb[0].mxu0
      %v1118 = vadd.f32 %v831, %v1117
      %v1119 = vpop.f32.mrb[0].mxu0
      %1120 = vmatprep.mubr.f32.mxu0 0.0
      %1121 = vmatmul.mubr.f32.gmra.mrb[0].mxu0 %v853
      %v1122 = vpop.f32.mrb[0].mxu0
      %v1123 = vadd.f32 %v831, %v1122
      %v1124 = vpop.f32.mrb[0].mxu0
      %1125 = vmatprep.mubr.f32.mxu0 0.0
      %1126 = vmatmul.mubr.f32.gmra.mrb[0].mxu0 %v856
      %v1127 = vpop.f32.mrb[0].mxu0
      %v1128 = vadd.f32 %v831, %v1127
      %v1129 = vpop.f32.mrb[0].mxu0
      %1130 = vmatprep.mubr.f32.mxu0 0.0
      %1131 = vmatmul.mubr.f32.gmra.mrb[0].mxu0 %v859
      %v1132 = vpop.f32.mrb[0].mxu0
      %v1133 = vadd.f32 %v831, %v1132
      %v1134 = vpop.f32.mrb[0].mxu0
      %1135 = vmatprep.mubr.f32.mxu0 0.0
      %1136 = vmatmul.mubr.f32.gmra.mrb[0].mxu0 %v862
      %v1137 = vpop.f32.mrb[0].mxu0
      %v1138 = vadd.f32 %v831, %v1137
      %v1139 = vpop.f32.mrb[0].mxu0
      %1140 = vmatprep.mubr.f32.mxu0 0.0
      %1141 = vmatmul.mubr.f32.gmra.mrb[0].mxu0 %v865
      %v1142 = vpop.f32.mrb[0].mxu0
      %v1143 = vadd.f32 %v831, %v1142
      %v1144 = vpop.f32.mrb[0].mxu0
      %1145 = vmatprep.mubr.f32.mxu0 0.0
      %1146 = vmatmul.mubr.f32.gmra.mrb[0].mxu0 %v868
      %v1147 = vpop.f32.mrb[0].mxu0
      %v1148 = vadd.f32 %v831, %v1147
      %v1149 = vpop.f32.mrb[0].mxu0
      %1150 = vmatprep.mubr.f32.mxu0 0.0
      %1151 = vmatmul.mubr.f32.gmra.mrb[0].mxu0 %v871
      %v1152 = vpop.f32.mrb[0].mxu0
      %v1153 = vadd.f32 %v831, %v1152
      %v1154 = vpop.f32.mrb[0].mxu0
      %1155 = vmatprep.mubr.f32.mxu0 0.0
      %1156 = vmatmul.mubr.f32.gmra.mrb[0].mxu0 %v874
      %v1157 = vpop.f32.mrb[0].mxu0
      %v1158 = vadd.f32 %v831, %v1157
      %v1159 = vpop.f32.mrb[0].mxu0
      %1160 = vmatprep.mubr.f32.mxu0 0.0
      %1161 = vmatmul.mubr.f32.gmra.mrb[0].mxu0 %v877
      %v1162 = vpop.f32.mrb[0].mxu0
      %v1163 = vadd.f32 %v831, %v1162
      %v1164 = vpop.f32.mrb[0].mxu0
      %1165 = vmatprep.mubr.f32.mxu0 0.0
      %1166 = vmatmul.mubr.f32.gmra.mrb[0].mxu0 %v880
      %v1167 = vpop.f32.mrb[0].mxu0
      %v1168 = vadd.f32 %v831, %v1167
      %v1169 = vpop.f32.mrb[0].mxu0
      %1170 = vmatprep.mubr.f32.mxu0 0.0
      %1171 = vmatmul.mubr.f32.gmra.mrb[0].mxu0 %v883
      %v1172 = vpop.f32.mrb[0].mxu0
      %v1173 = vadd.f32 %v831, %v1172
      %v1174 = vpop.f32.mrb[0].mxu0
      %1175 = vmatprep.mubr.f32.mxu0 0.0
      %1176 = vmatmul.mubr.f32.gmra.mrb[0].mxu0 %v886
      %v1177 = vpop.f32.mrb[0].mxu0
      %v1178 = vadd.f32 %v831, %v1177
      %v1179 = vpop.f32.mrb[0].mxu0
      %1180 = vmatprep.mubr.f32.mxu0 0.0
      %1181 = vmatmul.mubr.f32.gmra.mrb[0].mxu0 %v889
      %v1182 = vpop.f32.mrb[0].mxu0
      %v1183 = vadd.f32 %v831, %v1182
      %v1184 = vpop.f32.mrb[0].mxu0
      %1185 = vmatprep.mubr.f32.mxu0 0.0
      %1186 = vmatmul.mubr.f32.gmra.mrb[0].mxu0 %v892
      %v1187 = vpop.f32.mrb[0].mxu0
      %v1188 = vadd.f32 %v831, %v1187
      %v1189 = vpop.f32.mrb[0].mxu0
      %1190 = vmatprep.mubr.f32.mxu0 0.0
      %1191 = vmatmul.mubr.f32.gmra.mrb[0].mxu0 %v895
      %v1192 = vpop.f32.mrb[0].mxu0
      %v1193 = vadd.f32 %v831, %v1192
      %v1194 = vpop.f32.mrb[0].mxu0
      %1195 = vmatprep.mubr.f32.mxu0 0.0
      %1196 = vmatmul.mubr.f32.gmra.mrb[0].mxu0 %v898
      %v1197 = vpop.f32.mrb[0].mxu0
      %v1198 = vadd.f32 %v831, %v1197
      %v1199 = vpop.f32.mrb[0].mxu0
      %1200 = vmatprep.mubr.f32.mxu0 0.0
      %1201 = vmatmul.mubr.f32.gmra.mrb[0].mxu0 %v901
      %v1202 = vpop.f32.mrb[0].mxu0
      %v1203 = vadd.f32 %v831, %v1202
      %v1204 = vpop.f32.mrb[0].mxu0
      %1205 = vmatprep.mubr.f32.mxu0 0.0
      %1206 = vmatmul.mubr.f32.gmra.mrb[0].mxu0 %v904
      %v1207 = vpop.f32.mrb[0].mxu0
      %v1208 = vadd.f32 %v831, %v1207
      %v1209 = vpop.f32.mrb[0].mxu0
      %1210 = vmatprep.mubr.f32.mxu0 0.0
      %1211 = vmatmul.mubr.f32.gmra.mrb[0].mxu0 %v907
      %v1212 = vpop.f32.mrb[0].mxu0
      %v1213 = vadd.f32 %v831, %v1212
      %v1214 = vpop.f32.mrb[0].mxu0
      %1215 = vmatprep.mubr.f32.mxu0 0.0
      %1216 = vmatmul.mubr.f32.gmra.mrb[0].mxu0 %v910
      %v1217 = vpop.f32.mrb[0].mxu0
      %v1218 = vadd.f32 %v831, %v1217
      %v1219 = vpop.f32.mrb[0].mxu0
      %1220 = vmatprep.mubr.f32.mxu0 0.0
      %1221 = vmatmul.mubr.f32.gmra.mrb[0].mxu0 %v913
      %v1222 = vpop.f32.mrb[0].mxu0
      %v1223 = vadd.f32 %v831, %v1222
      %v1224 = vpop.f32.mrb[0].mxu0
      %1225 = vmatprep.mubr.f32.mxu0 0.0
      %1226 = vmatmul.mubr.f32.gmra.mrb[0].mxu0 %v916
      %v1227 = vpop.f32.mrb[0].mxu0
      %v1228 = vadd.f32 %v831, %v1227
      %v1229 = vpop.f32.mrb[0].mxu0
      %1230 = vmatprep.mubr.f32.mxu0 0.0
      %1231 = vmatmul.mubr.f32.gmra.mrb[0].mxu0 %v919
      %v1232 = vpop.f32.mrb[0].mxu0
      %v1233 = vadd.f32 %v831, %v1232
      %v1234 = vpop.f32.mrb[0].mxu0
      %1235 = vmatprep.mubr.f32.mxu0 0.0
      %1236 = vmatmul.mubr.f32.gmra.mrb[0].mxu0 %v922
      %v1237 = vpop.f32.mrb[0].mxu0
      %v1238 = vadd.f32 %v831, %v1237
      %v1239 = vpop.f32.mrb[0].mxu0
      %1240 = vmatprep.mubr.f32.mxu0 0.0
      %1241 = vmatmul.mubr.f32.gmra.mrb[0].mxu0 %v925
      %v1242 = vpop.f32.mrb[0].mxu0
      %v1243 = vadd.f32 %v831, %v1242
      %v1244 = vpop.f32.mrb[0].mxu0
      %1245 = vmatprep.mubr.f32.mxu0 0.0
      %1246 = vmatmul.mubr.f32.gmra.mrb[0].mxu0 %v928
      %v1247 = vpop.f32.mrb[0].mxu0
      %v1248 = vadd.f32 %v831, %v1247
      %v1249 = vpop.f32.mrb[0].mxu0
      %1250 = vmatprep.mubr.f32.mxu0 0.0
      %1251 = vmatmul.mubr.f32.gmra.mrb[0].mxu0 %v931
      %v1252 = vpop.f32.mrb[0].mxu0
      %v1253 = vadd.f32 %v831, %v1252
      %v1254 = vpop.f32.mrb[0].mxu0
      %1255 = vmatprep.mubr.f32.mxu0 0.0
      %1256 = vmatmul.mubr.f32.gmra.mrb[0].mxu0 %v934
      %v1257 = vpop.f32.mrb[0].mxu0
      %v1258 = vadd.f32 %v831, %v1257
      %v1259 = vpop.f32.mrb[0].mxu0
      %1260 = vmatprep.mubr.f32.mxu0 0.0
      %1261 = vmatmul.mubr.f32.gmra.mrb[0].mxu0 %v937
      %v1262 = vpop.f32.mrb[0].mxu0
      %v1263 = vadd.f32 %v831, %v1262
      %v1264 = vpop.f32.mrb[0].mxu0
      %1265 = vmatprep.mubr.f32.mxu0 0.0
      %1266 = vmatmul.mubr.f32.gmra.mrb[0].mxu0 %v940
      %v1267 = vpop.f32.mrb[0].mxu0
      %v1268 = vadd.f32 %v831, %v1267
      %v1269 = vpop.f32.mrb[0].mxu0
      %1270 = vmatprep.mubr.f32.mxu0 0.0
      %1271 = vmatmul.mubr.f32.gmra.mrb[0].mxu0 %v943
      %v1272 = vpop.f32.mrb[0].mxu0
      %v1273 = vadd.f32 %v831, %v1272
      %v1274 = vpop.f32.mrb[0].mxu0
      %1275 = vmatprep.mubr.f32.mxu0 0.0
      %1276 = vmatmul.mubr.f32.gmra.mrb[0].mxu0 %v946
      %v1277 = vpop.f32.mrb[0].mxu0
      %v1278 = vadd.f32 %v831, %v1277
      %v1279 = vpop.f32.mrb[0].mxu0
      %1280 = vmatprep.mubr.f32.mxu0 0.0
      %1281 = vmatmul.mubr.f32.gmra.mrb[0].mxu0 %v949
      %v1282 = vpop.f32.mrb[0].mxu0
      %v1283 = vadd.f32 %v831, %v1282
      %v1284 = vpop.f32.mrb[0].mxu0
      %1285 = vmatprep.mubr.f32.mxu0 0.0
      %1286 = vmatmul.mubr.f32.gmra.mrb[0].mxu0 %v952
      %v1287 = vpop.f32.mrb[0].mxu0
      %v1288 = vadd.f32 %v831, %v1287
      %v1289 = vpop.f32.mrb[0].mxu0
      %1290 = vmatprep.mubr.f32.mxu0 0.0
      %1291 = vmatmul.mubr.f32.gmra.mrb[0].mxu0 %v955
      %v1292 = vpop.f32.mrb[0].mxu0
      %v1293 = vadd.f32 %v831, %v1292
      %v1294 = vpop.f32.mrb[0].mxu0
      %1295 = vmatprep.mubr.f32.mxu0 0.0
      %1296 = vmatmul.mubr.f32.gmra.mrb[0].mxu0 %v958
      %v1297 = vpop.f32.mrb[0].mxu0
      %v1298 = vadd.f32 %v831, %v1297
      %v1299 = vpop.f32.mrb[0].mxu0
      %1300 = vmatprep.mubr.f32.mxu0 0.0
      %1301 = vmatmul.mubr.f32.gmra.mrb[0].mxu0 %v961
      %v1302 = vpop.f32.mrb[0].mxu0
      %v1303 = vadd.f32 %v831, %v1302
      %v1304 = vpop.f32.mrb[0].mxu0
      %1305 = vmatprep.mubr.f32.mxu0 0.0
      %1306 = vmatmul.mubr.f32.gmra.mrb[0].mxu0 %v964
      %v1307 = vpop.f32.mrb[0].mxu0
      %v1308 = vadd.f32 %v831, %v1307
      %v1309 = vpop.f32.mrb[0].mxu0
      %1310 = vmatprep.mubr.f32.mxu0 0.0
      %1311 = vmatmul.mubr.f32.gmra.mrb[0].mxu0 %v967
      %v1312 = vpop.f32.mrb[0].mxu0
      %v1313 = vadd.f32 %v831, %v1312
      %v1314 = vpop.f32.mrb[0].mxu0
      %1315 = vmatprep.mubr.f32.mxu0 0.0
      %1316 = vmatmul.mubr.f32.gmra.mrb[0].mxu0 %v970
      %v1317 = vpop.f32.mrb[0].mxu0
      %v1318 = vadd.f32 %v831, %v1317
      %v1319 = vpop.f32.mrb[0].mxu0
      %1320 = vmatprep.mubr.f32.mxu0 0.0
      %1321 = vmatmul.mubr.f32.gmra.mrb[0].mxu0 %v973
      %v1322 = vpop.f32.mrb[0].mxu0
      %v1323 = vadd.f32 %v831, %v1322
      %v1324 = vpop.f32.mrb[0].mxu0
      %1325 = vmatprep.mubr.f32.mxu0 0.0
      %1326 = vmatmul.mubr.f32.gmra.mrb[0].mxu0 %v976
      %v1327 = vpop.f32.mrb[0].mxu0
      %v1328 = vadd.f32 %v831, %v1327
      %v1329 = vpop.f32.mrb[0].mxu0
      %1330 = vmatprep.mubr.f32.mxu0 0.0
      %1331 = vmatmul.mubr.f32.gmra.mrb[0].mxu0 %v979
      %v1332 = vpop.f32.mrb[0].mxu0
      %v1333 = vadd.f32 %v831, %v1332
      %v1334 = vpop.f32.mrb[0].mxu0
      %1335 = vmatprep.mubr.f32.mxu0 0.0
      %1336 = vmatmul.mubr.f32.gmra.mrb[0].mxu0 %v982
      %v1337 = vpop.f32.mrb[0].mxu0
      %v1338 = vadd.f32 %v831, %v1337
      %v1339 = vpop.f32.mrb[0].mxu0
      %1340 = vmatprep.mubr.f32.mxu0 0.0
      %1341 = vmatmul.mubr.f32.gmra.mrb[0].mxu0 %v985
      %v1342 = vpop.f32.mrb[0].mxu0
      %v1343 = vadd.f32 %v831, %v1342
      %v1344 = vpop.f32.mrb[0].mxu0
      %1345 = vmatprep.mubr.f32.mxu0 0.0
      %1346 = vmatmul.mubr.f32.gmra.mrb[0].mxu0 %v988
      %v1347 = vpop.f32.mrb[0].mxu0
      %v1348 = vadd.f32 %v831, %v1347
      %v1349 = vpop.f32.mrb[0].mxu0
      %1350 = vmatprep.mubr.f32.mxu0 0.0
      %1351 = vmatmul.mubr.f32.gmra.mrb[0].mxu0 %v991
      %v1352 = vpop.f32.mrb[0].mxu0
      %v1353 = vadd.f32 %v831, %v1352
      %v1354 = vpop.f32.mrb[0].mxu0
      %1355 = vmatprep.mubr.f32.mxu0 0.0
      %1356 = vmatmul.mubr.f32.gmra.mrb[0].mxu0 %v994
      %v1357 = vpop.f32.mrb[0].mxu0
      %v1358 = vadd.f32 %v831, %v1357
      %v1359 = vpop.f32.mrb[0].mxu0
      %1360 = vmatprep.mubr.f32.mxu0 0.0
      %1361 = vmatmul.mubr.f32.gmra.mrb[0].mxu0 %v997
      %v1362 = vpop.f32.mrb[0].mxu0
      %v1363 = vadd.f32 %v831, %v1362
      %v1364 = vpop.f32.mrb[0].mxu0
      %1365 = vmatprep.mubr.f32.mxu0 0.0
      %1366 = vmatmul.mubr.f32.gmra.mrb[0].mxu0 %v1000
      %v1367 = vpop.f32.mrb[0].mxu0
      %v1368 = vadd.f32 %v831, %v1367
      %v1369 = vpop.f32.mrb[0].mxu0
      %1370 = vmatprep.mubr.f32.mxu0 0.0
      %1371 = vmatmul.mubr.f32.gmra.mrb[0].mxu0 %v1003
      %v1372 = vpop.f32.mrb[0].mxu0
      %v1373 = vadd.f32 %v831, %v1372
      %v1374 = vpop.f32.mrb[0].mxu0
      %1375 = vmatprep.mubr.f32.mxu0 0.0
      %1376 = vmatmul.mubr.f32.gmra.mrb[0].mxu0 %v1006
      %v1377 = vpop.f32.mrb[0].mxu0
      %v1378 = vadd.f32 %v831, %v1377
      %v1379 = vpop.f32.mrb[0].mxu0
      %1380 = vmatprep.mubr.f32.mxu0 0.0
      %1381 = vmatmul.mubr.f32.gmra.mrb[0].mxu0 %v1009
      %v1382 = vpop.f32.mrb[0].mxu0
      %v1383 = vadd.f32 %v831, %v1382
      %v1384 = vpop.f32.mrb[0].mxu0
      %1385 = vmatprep.mubr.f32.mxu0 0.0
      %1386 = vmatmul.mubr.f32.gmra.mrb[0].mxu0 %v1012
      %v1387 = vpop.f32.mrb[0].mxu0
      %v1388 = vadd.f32 %v831, %v1387
      %v1389 = vpop.f32.mrb[0].mxu0
      %1390 = vmatprep.mubr.f32.mxu0 0.0
      %1391 = vmatmul.mubr.f32.gmra.mrb[0].mxu0 %v1015
      %v1392 = vpop.f32.mrb[0].mxu0
      %v1393 = vadd.f32 %v831, %v1392
      %v1394 = vpop.f32.mrb[0].mxu0
      %1395 = vmatprep.mubr.f32.mxu0 0.0
      %1396 = vmatmul.mubr.f32.gmra.mrb[0].mxu0 %v1018
      %v1397 = vpop.f32.mrb[0].mxu0
      %v1398 = vadd.f32 %v831, %v1397
      %v1399 = vpop.f32.mrb[0].mxu0
      %1400 = vmatprep.mubr.f32.mxu0 0.0
      %1401 = vmatmul.mubr.f32.gmra.mrb[0].mxu0 %v1021
      %v1402 = vpop.f32.mrb[0].mxu0
      %v1403 = vadd.f32 %v831, %v1402
      %v1404 = vpop.f32.mrb[0].mxu0
      %1405 = vmatprep.mubr.f32.mxu0 0.0
      %1406 = vmatmul.mubr.f32.gmra.mrb[0].mxu0 %v1024
      %v1407 = vpop.f32.mrb[0].mxu0
      %v1408 = vadd.f32 %v831, %v1407
      %v1409 = vpop.f32.mrb[0].mxu0
      %1410 = vdwg.mxu0
      %v1411 = vmax.f32 %v1093, 0.0
      %v1412 = vmax.f32 %v1098, 0.0
      %v1413 = vmax.f32 %v1103, 0.0
      %v1414 = vmax.f32 %v1108, 0.0
      %v1415 = vmax.f32 %v1113, 0.0
      %v1416 = vmax.f32 %v1118, 0.0
      %v1417 = vmax.f32 %v1123, 0.0
      %v1418 = vmax.f32 %v1128, 0.0
      %v1419 = vmax.f32 %v1133, 0.0
      %v1420 = vmax.f32 %v1138, 0.0
      %v1421 = vmax.f32 %v1143, 0.0
      %v1422 = vmax.f32 %v1148, 0.0
      %v1423 = vmax.f32 %v1153, 0.0
      %v1424 = vmax.f32 %v1158, 0.0
      %v1425 = vmax.f32 %v1163, 0.0
      %v1426 = vmax.f32 %v1168, 0.0
      %v1427 = vmax.f32 %v1173, 0.0
      %v1428 = vmax.f32 %v1178, 0.0
      %v1429 = vmax.f32 %v1183, 0.0
      %v1430 = vmax.f32 %v1188, 0.0
      %v1431 = vmax.f32 %v1193, 0.0
      %v1432 = vmax.f32 %v1198, 0.0
      %v1433 = vmax.f32 %v1203, 0.0
      %v1434 = vmax.f32 %v1208, 0.0
      %v1435 = vmax.f32 %v1213, 0.0
      %v1436 = vmax.f32 %v1218, 0.0
      %v1437 = vmax.f32 %v1223, 0.0
      %v1438 = vmax.f32 %v1228, 0.0
      %v1439 = vmax.f32 %v1233, 0.0
      %v1440 = vmax.f32 %v1238, 0.0
      %v1441 = vmax.f32 %v1243, 0.0
      %v1442 = vmax.f32 %v1248, 0.0
      %v1443 = vmax.f32 %v1253, 0.0
      %v1444 = vmax.f32 %v1258, 0.0
      %v1445 = vmax.f32 %v1263, 0.0
      %v1446 = vmax.f32 %v1268, 0.0
      %v1447 = vmax.f32 %v1273, 0.0
      %v1448 = vmax.f32 %v1278, 0.0
      %v1449 = vmax.f32 %v1283, 0.0
      %v1450 = vmax.f32 %v1288, 0.0
      %v1451 = vmax.f32 %v1293, 0.0
      %v1452 = vmax.f32 %v1298, 0.0
      %v1453 = vmax.f32 %v1303, 0.0
      %v1454 = vmax.f32 %v1308, 0.0
      %v1455 = vmax.f32 %v1313, 0.0
      %v1456 = vmax.f32 %v1318, 0.0
      %v1457 = vmax.f32 %v1323, 0.0
      %v1458 = vmax.f32 %v1328, 0.0
      %v1459 = vmax.f32 %v1333, 0.0
      %v1460 = vmax.f32 %v1338, 0.0
      %v1461 = vmax.f32 %v1343, 0.0
      %v1462 = vmax.f32 %v1348, 0.0
      %v1463 = vmax.f32 %v1353, 0.0
      %v1464 = vmax.f32 %v1358, 0.0
      %v1465 = vmax.f32 %v1363, 0.0
      %v1466 = vmax.f32 %v1368, 0.0
      %v1467 = vmax.f32 %v1373, 0.0
      %v1468 = vmax.f32 %v1378, 0.0
      %v1469 = vmax.f32 %v1383, 0.0
      %v1470 = vmax.f32 %v1388, 0.0
      %v1471 = vmax.f32 %v1393, 0.0
      %v1472 = vmax.f32 %v1398, 0.0
      %v1473 = vmax.f32 %v1403, 0.0
      %v1474 = vmax.f32 %v1408, 0.0
      %v1475 = vld [vmem:[%s5] sm:$0xff]
      %v1476 = vld [vmem:[%s5 + $0x8] sm:$0xff]
      %v1477 = vld [vmem:[%s5 + $0x10] sm:$0xff]
      %v1478 = vld [vmem:[%s5 + $0x18] sm:$0xff]
      %v1479 = vld [vmem:[%s6] sm:$0x1]
      %v1481 = vlaneseq
      %v1482 = vshrl.u32 %v1481, 7
      %v1483 = vsub.s32 0, %v1482
      %v1484 = vrot.slane %v1479, %v1483
      %vm1486 = vcmask 261120
      %v1488 = vsel %vm1486, %v1411, 0
      %v1491 = vsel %vm1486, %v1412, 0
      %v1494 = vsel %vm1486, %v1413, 0
      %v1497 = vsel %vm1486, %v1414, 0
      %v1500 = vsel %vm1486, %v1415, 0
      %v1503 = vsel %vm1486, %v1416, 0
      %v1506 = vsel %vm1486, %v1417, 0
      %v1509 = vsel %vm1486, %v1418, 0
      %v1512 = vsel %vm1486, %v1419, 0
      %v1515 = vsel %vm1486, %v1420, 0
      %v1518 = vsel %vm1486, %v1421, 0
      %v1521 = vsel %vm1486, %v1422, 0
      %v1524 = vsel %vm1486, %v1423, 0
      %v1527 = vsel %vm1486, %v1424, 0
      %v1530 = vsel %vm1486, %v1425, 0
      %v1533 = vsel %vm1486, %v1426, 0
      %v1536 = vsel %vm1486, %v1427, 0
      %v1539 = vsel %vm1486, %v1428, 0
      %v1542 = vsel %vm1486, %v1429, 0
      %v1545 = vsel %vm1486, %v1430, 0
      %v1548 = vsel %vm1486, %v1431, 0
      %v1551 = vsel %vm1486, %v1432, 0
      %v1554 = vsel %vm1486, %v1433, 0
      %v1557 = vsel %vm1486, %v1434, 0
      %v1560 = vsel %vm1486, %v1435, 0
      %v1563 = vsel %vm1486, %v1436, 0
      %v1566 = vsel %vm1486, %v1437, 0
      %v1569 = vsel %vm1486, %v1438, 0
      %v1572 = vsel %vm1486, %v1439, 0
      %v1575 = vsel %vm1486, %v1440, 0
      %v1578 = vsel %vm1486, %v1441, 0
      %v1581 = vsel %vm1486, %v1442, 0
      %v1584 = vsel %vm1486, %v1443, 0
      %v1587 = vsel %vm1486, %v1444, 0
      %v1590 = vsel %vm1486, %v1445, 0
      %v1593 = vsel %vm1486, %v1446, 0
      %v1596 = vsel %vm1486, %v1447, 0
      %v1599 = vsel %vm1486, %v1448, 0
      %v1602 = vsel %vm1486, %v1449, 0
      %v1605 = vsel %vm1486, %v1450, 0
      %v1608 = vsel %vm1486, %v1451, 0
      %v1611 = vsel %vm1486, %v1452, 0
      %v1614 = vsel %vm1486, %v1453, 0
      %v1617 = vsel %vm1486, %v1454, 0
      %v1620 = vsel %vm1486, %v1455, 0
      %v1623 = vsel %vm1486, %v1456, 0
      %v1626 = vsel %vm1486, %v1457, 0
      %v1629 = vsel %vm1486, %v1458, 0
      %v1632 = vsel %vm1486, %v1459, 0
      %v1635 = vsel %vm1486, %v1460, 0
      %v1638 = vsel %vm1486, %v1461, 0
      %v1641 = vsel %vm1486, %v1462, 0
      %v1644 = vsel %vm1486, %v1463, 0
      %v1647 = vsel %vm1486, %v1464, 0
      %v1650 = vsel %vm1486, %v1465, 0
      %v1653 = vsel %vm1486, %v1466, 0
      %v1656 = vsel %vm1486, %v1467, 0
      %v1659 = vsel %vm1486, %v1468, 0
      %v1662 = vsel %vm1486, %v1469, 0
      %v1665 = vsel %vm1486, %v1470, 0
      %v1668 = vsel %vm1486, %v1471, 0
      %v1671 = vsel %vm1486, %v1472, 0
      %v1674 = vsel %vm1486, %v1473, 0
      %v1677 = vsel %vm1486, %v1474, 0
      %1679 = vmatprep.subr.mxu0 0.0
      %1680 = vmatpush1.msra.mxu0 %v1475
      %1681 = vmatprep.subr.mxu0 0.0
      %1682 = vmatpush1.msra.mxu0 %v1476
      %1683 = vmatprep.subr.mxu0 0.0
      %1684 = vmatpush1.msra.mxu0 %v1477
      %1685 = vmatprep.subr.mxu0 0.0
      %1686 = vmatpush1.msra.mxu0 %v1478
      %1687 = vmatprep.subr.mxu0 0.0
      %1688 = vmatpush1.msra.mxu0 0.0
      %1689 = vmatprep.subr.mxu0 0.0
      %1690 = vmatpush1.msra.mxu0 0.0
      %1691 = vmatprep.subr.mxu0 0.0
      %1692 = vmatpush1.msra.mxu0 0.0
      %1693 = vmatprep.subr.mxu0 0.0
      %1694 = vmatpush1.msra.mxu0 0.0
      %1695 = vmatprep.subr.mxu0 0.0
      %1696 = vmatpush1.msra.mxu0 0.0
      %1697 = vmatprep.subr.mxu0 0.0
      %1698 = vmatpush1.msra.mxu0 0.0
      %1699 = vmatprep.subr.mxu0 0.0
      %1700 = vmatpush1.msra.mxu0 0.0
      %1701 = vmatprep.subr.mxu0 0.0
      %1702 = vmatpush1.msra.mxu0 0.0
      %1703 = vmatprep.subr.mxu0 0.0
      %1704 = vmatpush1.msra.mxu0 0.0
      %1705 = vmatprep.subr.mxu0 0.0
      %1706 = vmatpush1.msra.mxu0 0.0
      %1707 = vmatprep.subr.mxu0 0.0
      %1708 = vmatpush1.msra.mxu0 0.0
      %1709 = vmatprep.subr.mxu0 0.0
      %1710 = vmatpush1.msra.mxu0 0.0
      %1711 = vmatprep.subr.mxu0 0.0
      %1712 = vmatpush1.msra.mxu0 0.0
      %1713 = vmatprep.subr.mxu0 0.0
      %1714 = vmatpush1.msra.mxu0 0.0
      %1715 = vmatprep.subr.mxu0 0.0
      %1716 = vmatpush1.msra.mxu0 0.0
      %1717 = vmatprep.subr.mxu0 0.0
      %1718 = vmatpush1.msra.mxu0 0.0
      %1719 = vmatprep.subr.mxu0 0.0
      %1720 = vmatpush1.msra.mxu0 0.0
      %1721 = vmatprep.subr.mxu0 0.0
      %1722 = vmatpush1.msra.mxu0 0.0
      %1723 = vmatprep.subr.mxu0 0.0
      %1724 = vmatpush1.msra.mxu0 0.0
      %1725 = vmatprep.subr.mxu0 0.0
      %1726 = vmatpush1.msra.mxu0 0.0
      %1727 = vmatprep.subr.mxu0 0.0
      %1728 = vmatpush1.msra.mxu0 0.0
      %1729 = vmatprep.subr.mxu0 0.0
      %1730 = vmatpush1.msra.mxu0 0.0
      %1731 = vmatprep.subr.mxu0 0.0
      %1732 = vmatpush1.msra.mxu0 0.0
      %1733 = vmatprep.subr.mxu0 0.0
      %1734 = vmatpush1.msra.mxu0 0.0
      %1735 = vmatprep.subr.mxu0 0.0
      %1736 = vmatpush1.msra.mxu0 0.0
      %1737 = vmatprep.subr.mxu0 0.0
      %1738 = vmatpush1.msra.mxu0 0.0
      %1739 = vmatprep.subr.mxu0 0.0
      %1740 = vmatpush1.msra.mxu0 0.0
      %1741 = vmatprep.subr.mxu0 0.0
      %1742 = vmatpush1.msra.mxu0 0.0
      %1743 = vmatprep.mubr.f32.mxu0 0.0
      %1744 = vmatmul.mubr.f32.gmra.mrb[0].mxu0 %v1488
      %v1745 = vpop.f32.mrb[0].mxu0
      %v1746 = vadd.f32 %v1484, %v1745
      %v1747 = vpop.f32.mrb[0].mxu0
      %1748 = vmatprep.mubr.f32.mxu0 0.0
      %1749 = vmatmul.mubr.f32.gmra.mrb[0].mxu0 %v1491
      %v1750 = vpop.f32.mrb[0].mxu0
      %v1751 = vadd.f32 %v1484, %v1750
      %v1752 = vpop.f32.mrb[0].mxu0
      %1753 = vmatprep.mubr.f32.mxu0 0.0
      %1754 = vmatmul.mubr.f32.gmra.mrb[0].mxu0 %v1494
      %v1755 = vpop.f32.mrb[0].mxu0
      %v1756 = vadd.f32 %v1484, %v1755
      %v1757 = vpop.f32.mrb[0].mxu0
      %1758 = vmatprep.mubr.f32.mxu0 0.0
      %1759 = vmatmul.mubr.f32.gmra.mrb[0].mxu0 %v1497
      %v1760 = vpop.f32.mrb[0].mxu0
      %v1761 = vadd.f32 %v1484, %v1760
      %v1762 = vpop.f32.mrb[0].mxu0
      %1763 = vmatprep.mubr.f32.mxu0 0.0
      %1764 = vmatmul.mubr.f32.gmra.mrb[0].mxu0 %v1500
      %v1765 = vpop.f32.mrb[0].mxu0
      %v1766 = vadd.f32 %v1484, %v1765
      %v1767 = vpop.f32.mrb[0].mxu0
      %1768 = vmatprep.mubr.f32.mxu0 0.0
      %1769 = vmatmul.mubr.f32.gmra.mrb[0].mxu0 %v1503
      %v1770 = vpop.f32.mrb[0].mxu0
      %v1771 = vadd.f32 %v1484, %v1770
      %v1772 = vpop.f32.mrb[0].mxu0
      %1773 = vmatprep.mubr.f32.mxu0 0.0
      %1774 = vmatmul.mubr.f32.gmra.mrb[0].mxu0 %v1506
      %v1775 = vpop.f32.mrb[0].mxu0
      %v1776 = vadd.f32 %v1484, %v1775
      %v1777 = vpop.f32.mrb[0].mxu0
      %1778 = vmatprep.mubr.f32.mxu0 0.0
      %1779 = vmatmul.mubr.f32.gmra.mrb[0].mxu0 %v1509
      %v1780 = vpop.f32.mrb[0].mxu0
      %v1781 = vadd.f32 %v1484, %v1780
      %v1782 = vpop.f32.mrb[0].mxu0
      %1783 = vmatprep.mubr.f32.mxu0 0.0
      %1784 = vmatmul.mubr.f32.gmra.mrb[0].mxu0 %v1512
      %v1785 = vpop.f32.mrb[0].mxu0
      %v1786 = vadd.f32 %v1484, %v1785
      %v1787 = vpop.f32.mrb[0].mxu0
      %1788 = vmatprep.mubr.f32.mxu0 0.0
      %1789 = vmatmul.mubr.f32.gmra.mrb[0].mxu0 %v1515
      %v1790 = vpop.f32.mrb[0].mxu0
      %v1791 = vadd.f32 %v1484, %v1790
      %v1792 = vpop.f32.mrb[0].mxu0
      %1793 = vmatprep.mubr.f32.mxu0 0.0
      %1794 = vmatmul.mubr.f32.gmra.mrb[0].mxu0 %v1518
      %v1795 = vpop.f32.mrb[0].mxu0
      %v1796 = vadd.f32 %v1484, %v1795
      %v1797 = vpop.f32.mrb[0].mxu0
      %1798 = vmatprep.mubr.f32.mxu0 0.0
      %1799 = vmatmul.mubr.f32.gmra.mrb[0].mxu0 %v1521
      %v1800 = vpop.f32.mrb[0].mxu0
      %v1801 = vadd.f32 %v1484, %v1800
      %v1802 = vpop.f32.mrb[0].mxu0
      %1803 = vmatprep.mubr.f32.mxu0 0.0
      %1804 = vmatmul.mubr.f32.gmra.mrb[0].mxu0 %v1524
      %v1805 = vpop.f32.mrb[0].mxu0
      %v1806 = vadd.f32 %v1484, %v1805
      %v1807 = vpop.f32.mrb[0].mxu0
      %1808 = vmatprep.mubr.f32.mxu0 0.0
      %1809 = vmatmul.mubr.f32.gmra.mrb[0].mxu0 %v1527
      %v1810 = vpop.f32.mrb[0].mxu0
      %v1811 = vadd.f32 %v1484, %v1810
      %v1812 = vpop.f32.mrb[0].mxu0
      %1813 = vmatprep.mubr.f32.mxu0 0.0
      %1814 = vmatmul.mubr.f32.gmra.mrb[0].mxu0 %v1530
      %v1815 = vpop.f32.mrb[0].mxu0
      %v1816 = vadd.f32 %v1484, %v1815
      %v1817 = vpop.f32.mrb[0].mxu0
      %1818 = vmatprep.mubr.f32.mxu0 0.0
      %1819 = vmatmul.mubr.f32.gmra.mrb[0].mxu0 %v1533
      %v1820 = vpop.f32.mrb[0].mxu0
      %v1821 = vadd.f32 %v1484, %v1820
      %v1822 = vpop.f32.mrb[0].mxu0
      %1823 = vmatprep.mubr.f32.mxu0 0.0
      %1824 = vmatmul.mubr.f32.gmra.mrb[0].mxu0 %v1536
      %v1825 = vpop.f32.mrb[0].mxu0
      %v1826 = vadd.f32 %v1484, %v1825
      %v1827 = vpop.f32.mrb[0].mxu0
      %1828 = vmatprep.mubr.f32.mxu0 0.0
      %1829 = vmatmul.mubr.f32.gmra.mrb[0].mxu0 %v1539
      %v1830 = vpop.f32.mrb[0].mxu0
      %v1831 = vadd.f32 %v1484, %v1830
      %v1832 = vpop.f32.mrb[0].mxu0
      %1833 = vmatprep.mubr.f32.mxu0 0.0
      %1834 = vmatmul.mubr.f32.gmra.mrb[0].mxu0 %v1542
      %v1835 = vpop.f32.mrb[0].mxu0
      %v1836 = vadd.f32 %v1484, %v1835
      %v1837 = vpop.f32.mrb[0].mxu0
      %1838 = vmatprep.mubr.f32.mxu0 0.0
      %1839 = vmatmul.mubr.f32.gmra.mrb[0].mxu0 %v1545
      %v1840 = vpop.f32.mrb[0].mxu0
      %v1841 = vadd.f32 %v1484, %v1840
      %v1842 = vpop.f32.mrb[0].mxu0
      %1843 = vmatprep.mubr.f32.mxu0 0.0
      %1844 = vmatmul.mubr.f32.gmra.mrb[0].mxu0 %v1548
      %v1845 = vpop.f32.mrb[0].mxu0
      %v1846 = vadd.f32 %v1484, %v1845
      %v1847 = vpop.f32.mrb[0].mxu0
      %1848 = vmatprep.mubr.f32.mxu0 0.0
      %1849 = vmatmul.mubr.f32.gmra.mrb[0].mxu0 %v1551
      %v1850 = vpop.f32.mrb[0].mxu0
      %v1851 = vadd.f32 %v1484, %v1850
      %v1852 = vpop.f32.mrb[0].mxu0
      %1853 = vmatprep.mubr.f32.mxu0 0.0
      %1854 = vmatmul.mubr.f32.gmra.mrb[0].mxu0 %v1554
      %v1855 = vpop.f32.mrb[0].mxu0
      %v1856 = vadd.f32 %v1484, %v1855
      %v1857 = vpop.f32.mrb[0].mxu0
      %1858 = vmatprep.mubr.f32.mxu0 0.0
      %1859 = vmatmul.mubr.f32.gmra.mrb[0].mxu0 %v1557
      %v1860 = vpop.f32.mrb[0].mxu0
      %v1861 = vadd.f32 %v1484, %v1860
      %v1862 = vpop.f32.mrb[0].mxu0
      %1863 = vmatprep.mubr.f32.mxu0 0.0
      %1864 = vmatmul.mubr.f32.gmra.mrb[0].mxu0 %v1560
      %v1865 = vpop.f32.mrb[0].mxu0
      %v1866 = vadd.f32 %v1484, %v1865
      %v1867 = vpop.f32.mrb[0].mxu0
      %1868 = vmatprep.mubr.f32.mxu0 0.0
      %1869 = vmatmul.mubr.f32.gmra.mrb[0].mxu0 %v1563
      %v1870 = vpop.f32.mrb[0].mxu0
      %v1871 = vadd.f32 %v1484, %v1870
      %v1872 = vpop.f32.mrb[0].mxu0
      %1873 = vmatprep.mubr.f32.mxu0 0.0
      %1874 = vmatmul.mubr.f32.gmra.mrb[0].mxu0 %v1566
      %v1875 = vpop.f32.mrb[0].mxu0
      %v1876 = vadd.f32 %v1484, %v1875
      %v1877 = vpop.f32.mrb[0].mxu0
      %1878 = vmatprep.mubr.f32.mxu0 0.0
      %1879 = vmatmul.mubr.f32.gmra.mrb[0].mxu0 %v1569
      %v1880 = vpop.f32.mrb[0].mxu0
      %v1881 = vadd.f32 %v1484, %v1880
      %v1882 = vpop.f32.mrb[0].mxu0
      %1883 = vmatprep.mubr.f32.mxu0 0.0
      %1884 = vmatmul.mubr.f32.gmra.mrb[0].mxu0 %v1572
      %v1885 = vpop.f32.mrb[0].mxu0
      %v1886 = vadd.f32 %v1484, %v1885
      %v1887 = vpop.f32.mrb[0].mxu0
      %1888 = vmatprep.mubr.f32.mxu0 0.0
      %1889 = vmatmul.mubr.f32.gmra.mrb[0].mxu0 %v1575
      %v1890 = vpop.f32.mrb[0].mxu0
      %v1891 = vadd.f32 %v1484, %v1890
      %v1892 = vpop.f32.mrb[0].mxu0
      %1893 = vmatprep.mubr.f32.mxu0 0.0
      %1894 = vmatmul.mubr.f32.gmra.mrb[0].mxu0 %v1578
      %v1895 = vpop.f32.mrb[0].mxu0
      %v1896 = vadd.f32 %v1484, %v1895
      %v1897 = vpop.f32.mrb[0].mxu0
      %1898 = vmatprep.mubr.f32.mxu0 0.0
      %1899 = vmatmul.mubr.f32.gmra.mrb[0].mxu0 %v1581
      %v1900 = vpop.f32.mrb[0].mxu0
      %v1901 = vadd.f32 %v1484, %v1900
      %v1902 = vpop.f32.mrb[0].mxu0
      %1903 = vmatprep.mubr.f32.mxu0 0.0
      %1904 = vmatmul.mubr.f32.gmra.mrb[0].mxu0 %v1584
      %v1905 = vpop.f32.mrb[0].mxu0
      %v1906 = vadd.f32 %v1484, %v1905
      %v1907 = vpop.f32.mrb[0].mxu0
      %1908 = vmatprep.mubr.f32.mxu0 0.0
      %1909 = vmatmul.mubr.f32.gmra.mrb[0].mxu0 %v1587
      %v1910 = vpop.f32.mrb[0].mxu0
      %v1911 = vadd.f32 %v1484, %v1910
      %v1912 = vpop.f32.mrb[0].mxu0
      %1913 = vmatprep.mubr.f32.mxu0 0.0
      %1914 = vmatmul.mubr.f32.gmra.mrb[0].mxu0 %v1590
      %v1915 = vpop.f32.mrb[0].mxu0
      %v1916 = vadd.f32 %v1484, %v1915
      %v1917 = vpop.f32.mrb[0].mxu0
      %1918 = vmatprep.mubr.f32.mxu0 0.0
      %1919 = vmatmul.mubr.f32.gmra.mrb[0].mxu0 %v1593
      %v1920 = vpop.f32.mrb[0].mxu0
      %v1921 = vadd.f32 %v1484, %v1920
      %v1922 = vpop.f32.mrb[0].mxu0
      %1923 = vmatprep.mubr.f32.mxu0 0.0
      %1924 = vmatmul.mubr.f32.gmra.mrb[0].mxu0 %v1596
      %v1925 = vpop.f32.mrb[0].mxu0
      %v1926 = vadd.f32 %v1484, %v1925
      %v1927 = vpop.f32.mrb[0].mxu0
      %1928 = vmatprep.mubr.f32.mxu0 0.0
      %1929 = vmatmul.mubr.f32.gmra.mrb[0].mxu0 %v1599
      %v1930 = vpop.f32.mrb[0].mxu0
      %v1931 = vadd.f32 %v1484, %v1930
      %v1932 = vpop.f32.mrb[0].mxu0
      %1933 = vmatprep.mubr.f32.mxu0 0.0
      %1934 = vmatmul.mubr.f32.gmra.mrb[0].mxu0 %v1602
      %v1935 = vpop.f32.mrb[0].mxu0
      %v1936 = vadd.f32 %v1484, %v1935
      %v1937 = vpop.f32.mrb[0].mxu0
      %1938 = vmatprep.mubr.f32.mxu0 0.0
      %1939 = vmatmul.mubr.f32.gmra.mrb[0].mxu0 %v1605
      %v1940 = vpop.f32.mrb[0].mxu0
      %v1941 = vadd.f32 %v1484, %v1940
      %v1942 = vpop.f32.mrb[0].mxu0
      %1943 = vmatprep.mubr.f32.mxu0 0.0
      %1944 = vmatmul.mubr.f32.gmra.mrb[0].mxu0 %v1608
      %v1945 = vpop.f32.mrb[0].mxu0
      %v1946 = vadd.f32 %v1484, %v1945
      %v1947 = vpop.f32.mrb[0].mxu0
      %1948 = vmatprep.mubr.f32.mxu0 0.0
      %1949 = vmatmul.mubr.f32.gmra.mrb[0].mxu0 %v1611
      %v1950 = vpop.f32.mrb[0].mxu0
      %v1951 = vadd.f32 %v1484, %v1950
      %v1952 = vpop.f32.mrb[0].mxu0
      %1953 = vmatprep.mubr.f32.mxu0 0.0
      %1954 = vmatmul.mubr.f32.gmra.mrb[0].mxu0 %v1614
      %v1955 = vpop.f32.mrb[0].mxu0
      %v1956 = vadd.f32 %v1484, %v1955
      %v1957 = vpop.f32.mrb[0].mxu0
      %1958 = vmatprep.mubr.f32.mxu0 0.0
      %1959 = vmatmul.mubr.f32.gmra.mrb[0].mxu0 %v1617
      %v1960 = vpop.f32.mrb[0].mxu0
      %v1961 = vadd.f32 %v1484, %v1960
      %v1962 = vpop.f32.mrb[0].mxu0
      %1963 = vmatprep.mubr.f32.mxu0 0.0
      %1964 = vmatmul.mubr.f32.gmra.mrb[0].mxu0 %v1620
      %v1965 = vpop.f32.mrb[0].mxu0
      %v1966 = vadd.f32 %v1484, %v1965
      %v1967 = vpop.f32.mrb[0].mxu0
      %1968 = vmatprep.mubr.f32.mxu0 0.0
      %1969 = vmatmul.mubr.f32.gmra.mrb[0].mxu0 %v1623
      %v1970 = vpop.f32.mrb[0].mxu0
      %v1971 = vadd.f32 %v1484, %v1970
      %v1972 = vpop.f32.mrb[0].mxu0
      %1973 = vmatprep.mubr.f32.mxu0 0.0
      %1974 = vmatmul.mubr.f32.gmra.mrb[0].mxu0 %v1626
      %v1975 = vpop.f32.mrb[0].mxu0
      %v1976 = vadd.f32 %v1484, %v1975
      %v1977 = vpop.f32.mrb[0].mxu0
      %1978 = vmatprep.mubr.f32.mxu0 0.0
      %1979 = vmatmul.mubr.f32.gmra.mrb[0].mxu0 %v1629
      %v1980 = vpop.f32.mrb[0].mxu0
      %v1981 = vadd.f32 %v1484, %v1980
      %v1982 = vpop.f32.mrb[0].mxu0
      %1983 = vmatprep.mubr.f32.mxu0 0.0
      %1984 = vmatmul.mubr.f32.gmra.mrb[0].mxu0 %v1632
      %v1985 = vpop.f32.mrb[0].mxu0
      %v1986 = vadd.f32 %v1484, %v1985
      %v1987 = vpop.f32.mrb[0].mxu0
      %1988 = vmatprep.mubr.f32.mxu0 0.0
      %1989 = vmatmul.mubr.f32.gmra.mrb[0].mxu0 %v1635
      %v1990 = vpop.f32.mrb[0].mxu0
      %v1991 = vadd.f32 %v1484, %v1990
      %v1992 = vpop.f32.mrb[0].mxu0
      %1993 = vmatprep.mubr.f32.mxu0 0.0
      %1994 = vmatmul.mubr.f32.gmra.mrb[0].mxu0 %v1638
      %v1995 = vpop.f32.mrb[0].mxu0
      %v1996 = vadd.f32 %v1484, %v1995
      %v1997 = vpop.f32.mrb[0].mxu0
      %1998 = vmatprep.mubr.f32.mxu0 0.0
      %1999 = vmatmul.mubr.f32.gmra.mrb[0].mxu0 %v1641
      %v2000 = vpop.f32.mrb[0].mxu0
      %v2001 = vadd.f32 %v1484, %v2000
      %v2002 = vpop.f32.mrb[0].mxu0
      %2003 = vmatprep.mubr.f32.mxu0 0.0
      %2004 = vmatmul.mubr.f32.gmra.mrb[0].mxu0 %v1644
      %v2005 = vpop.f32.mrb[0].mxu0
      %v2006 = vadd.f32 %v1484, %v2005
      %v2007 = vpop.f32.mrb[0].mxu0
      %2008 = vmatprep.mubr.f32.mxu0 0.0
      %2009 = vmatmul.mubr.f32.gmra.mrb[0].mxu0 %v1647
      %v2010 = vpop.f32.mrb[0].mxu0
      %v2011 = vadd.f32 %v1484, %v2010
      %v2012 = vpop.f32.mrb[0].mxu0
      %2013 = vmatprep.mubr.f32.mxu0 0.0
      %2014 = vmatmul.mubr.f32.gmra.mrb[0].mxu0 %v1650
      %v2015 = vpop.f32.mrb[0].mxu0
      %v2016 = vadd.f32 %v1484, %v2015
      %v2017 = vpop.f32.mrb[0].mxu0
      %2018 = vmatprep.mubr.f32.mxu0 0.0
      %2019 = vmatmul.mubr.f32.gmra.mrb[0].mxu0 %v1653
      %v2020 = vpop.f32.mrb[0].mxu0
      %v2021 = vadd.f32 %v1484, %v2020
      %v2022 = vpop.f32.mrb[0].mxu0
      %2023 = vmatprep.mubr.f32.mxu0 0.0
      %2024 = vmatmul.mubr.f32.gmra.mrb[0].mxu0 %v1656
      %v2025 = vpop.f32.mrb[0].mxu0
      %v2026 = vadd.f32 %v1484, %v2025
      %v2027 = vpop.f32.mrb[0].mxu0
      %2028 = vmatprep.mubr.f32.mxu0 0.0
      %2029 = vmatmul.mubr.f32.gmra.mrb[0].mxu0 %v1659
      %v2030 = vpop.f32.mrb[0].mxu0
      %v2031 = vadd.f32 %v1484, %v2030
      %v2032 = vpop.f32.mrb[0].mxu0
      %2033 = vmatprep.mubr.f32.mxu0 0.0
      %2034 = vmatmul.mubr.f32.gmra.mrb[0].mxu0 %v1662
      %v2035 = vpop.f32.mrb[0].mxu0
      %v2036 = vadd.f32 %v1484, %v2035
      %v2037 = vpop.f32.mrb[0].mxu0
      %2038 = vmatprep.mubr.f32.mxu0 0.0
      %2039 = vmatmul.mubr.f32.gmra.mrb[0].mxu0 %v1665
      %v2040 = vpop.f32.mrb[0].mxu0
      %v2041 = vadd.f32 %v1484, %v2040
      %v2042 = vpop.f32.mrb[0].mxu0
      %2043 = vmatprep.mubr.f32.mxu0 0.0
      %2044 = vmatmul.mubr.f32.gmra.mrb[0].mxu0 %v1668
      %v2045 = vpop.f32.mrb[0].mxu0
      %v2046 = vadd.f32 %v1484, %v2045
      %v2047 = vpop.f32.mrb[0].mxu0
      %2048 = vmatprep.mubr.f32.mxu0 0.0
      %2049 = vmatmul.mubr.f32.gmra.mrb[0].mxu0 %v1671
      %v2050 = vpop.f32.mrb[0].mxu0
      %v2051 = vadd.f32 %v1484, %v2050
      %v2052 = vpop.f32.mrb[0].mxu0
      %2053 = vmatprep.mubr.f32.mxu0 0.0
      %2054 = vmatmul.mubr.f32.gmra.mrb[0].mxu0 %v1674
      %v2055 = vpop.f32.mrb[0].mxu0
      %v2056 = vadd.f32 %v1484, %v2055
      %v2057 = vpop.f32.mrb[0].mxu0
      %2058 = vmatprep.mubr.f32.mxu0 0.0
      %2059 = vmatmul.mubr.f32.gmra.mrb[0].mxu0 %v1677
      %v2060 = vpop.f32.mrb[0].mxu0
      %v2061 = vadd.f32 %v1484, %v2060
      %v2062 = vpop.f32.mrb[0].mxu0
      %2063 = vdwg.mxu0
      %v2064 = vtanh.pop %v1746
      %v2065 = vtanh.pop %v1751
      %v2066 = vtanh.pop %v1756
      %v2067 = vtanh.pop %v1761
      %v2068 = vtanh.pop %v1766
      %v2069 = vtanh.pop %v1771
      %v2070 = vtanh.pop %v1776
      %v2071 = vtanh.pop %v1781
      %v2072 = vtanh.pop %v1786
      %v2073 = vtanh.pop %v1791
      %v2074 = vtanh.pop %v1796
      %v2075 = vtanh.pop %v1801
      %v2076 = vtanh.pop %v1806
      %v2077 = vtanh.pop %v1811
      %v2078 = vtanh.pop %v1816
      %v2079 = vtanh.pop %v1821
      %v2080 = vtanh.pop %v1826
      %v2081 = vtanh.pop %v1831
      %v2082 = vtanh.pop %v1836
      %v2083 = vtanh.pop %v1841
      %v2084 = vtanh.pop %v1846
      %v2085 = vtanh.pop %v1851
      %v2086 = vtanh.pop %v1856
      %v2087 = vtanh.pop %v1861
      %v2088 = vtanh.pop %v1866
      %v2089 = vtanh.pop %v1871
      %v2090 = vtanh.pop %v1876
      %v2091 = vtanh.pop %v1881
      %v2092 = vtanh.pop %v1886
      %v2093 = vtanh.pop %v1891
      %v2094 = vtanh.pop %v1896
      %v2095 = vtanh.pop %v1901
      %v2096 = vtanh.pop %v1906
      %v2097 = vtanh.pop %v1911
      %v2098 = vtanh.pop %v1916
      %v2099 = vtanh.pop %v1921
      %v2100 = vtanh.pop %v1926
      %v2101 = vtanh.pop %v1931
      %v2102 = vtanh.pop %v1936
      %v2103 = vtanh.pop %v1941
      %v2104 = vtanh.pop %v1946
      %v2105 = vtanh.pop %v1951
      %v2106 = vtanh.pop %v1956
      %v2107 = vtanh.pop %v1961
      %v2108 = vtanh.pop %v1966
      %v2109 = vtanh.pop %v1971
      %v2110 = vtanh.pop %v1976
      %v2111 = vtanh.pop %v1981
      %v2112 = vtanh.pop %v1986
      %v2113 = vtanh.pop %v1991
      %v2114 = vtanh.pop %v1996
      %v2115 = vtanh.pop %v2001
      %v2116 = vtanh.pop %v2006
      %v2117 = vtanh.pop %v2011
      %v2118 = vtanh.pop %v2016
      %v2119 = vtanh.pop %v2021
      %v2120 = vtanh.pop %v2026
      %v2121 = vtanh.pop %v2031
      %v2122 = vtanh.pop %v2036
      %v2123 = vtanh.pop %v2041
      %v2124 = vtanh.pop %v2046
      %v2125 = vtanh.pop %v2051
      %v2126 = vtanh.pop %v2056
      %v2127 = vtanh.pop %v2061
      %v2128 = vtanh.pop %v2064
      %v2129 = vtanh.pop %v2065
      %v2130 = vtanh.pop %v2066
      %v2131 = vtanh.pop %v2067
      %v2132 = vtanh.pop %v2068
      %v2133 = vtanh.pop %v2069
      %v2134 = vtanh.pop %v2070
      %v2135 = vtanh.pop %v2071
      %v2136 = vtanh.pop %v2072
      %v2137 = vtanh.pop %v2073
      %v2138 = vtanh.pop %v2074
      %v2139 = vtanh.pop %v2075
      %v2140 = vtanh.pop %v2076
      %v2141 = vtanh.pop %v2077
      %v2142 = vtanh.pop %v2078
      %v2143 = vtanh.pop %v2079
      %v2144 = vtanh.pop %v2080
      %v2145 = vtanh.pop %v2081
      %v2146 = vtanh.pop %v2082
      %v2147 = vtanh.pop %v2083
      %v2148 = vtanh.pop %v2084
      %v2149 = vtanh.pop %v2085
      %v2150 = vtanh.pop %v2086
      %v2151 = vtanh.pop %v2087
      %v2152 = vtanh.pop %v2088
      %v2153 = vtanh.pop %v2089
      %v2154 = vtanh.pop %v2090
      %v2155 = vtanh.pop %v2091
      %v2156 = vtanh.pop %v2092
      %v2157 = vtanh.pop %v2093
      %v2158 = vtanh.pop %v2094
      %v2159 = vtanh.pop %v2095
      %v2160 = vtanh.pop %v2096
      %v2161 = vtanh.pop %v2097
      %v2162 = vtanh.pop %v2098
      %v2163 = vtanh.pop %v2099
      %v2164 = vtanh.pop %v2100
      %v2165 = vtanh.pop %v2101
      %v2166 = vtanh.pop %v2102
      %v2167 = vtanh.pop %v2103
      %v2168 = vtanh.pop %v2104
      %v2169 = vtanh.pop %v2105
      %v2170 = vtanh.pop %v2106
      %v2171 = vtanh.pop %v2107
      %v2172 = vtanh.pop %v2108
      %v2173 = vtanh.pop %v2109
      %v2174 = vtanh.pop %v2110
      %v2175 = vtanh.pop %v2111
      %v2176 = vtanh.pop %v2112
      %v2177 = vtanh.pop %v2113
      %v2178 = vtanh.pop %v2114
      %v2179 = vtanh.pop %v2115
      %v2180 = vtanh.pop %v2116
      %v2181 = vtanh.pop %v2117
      %v2182 = vtanh.pop %v2118
      %v2183 = vtanh.pop %v2119
      %v2184 = vtanh.pop %v2120
      %v2185 = vtanh.pop %v2121
      %v2186 = vtanh.pop %v2122
      %v2187 = vtanh.pop %v2123
      %v2188 = vtanh.pop %v2124
      %v2189 = vtanh.pop %v2125
      %v2190 = vtanh.pop %v2126
      %v2191 = vtanh.pop %v2127
      %vm2192 = vcmask 23552
      %2193 = vst.msk [vmem:[%s280] sm:$0xff] %vm2192, %v2128
      %2194 = vst.msk [vmem:[%s280 + $0x8] sm:$0xff] %vm2192, %v2129
      %2195 = vst.msk [vmem:[%s280 + $0x10] sm:$0xff] %vm2192, %v2130
      %2196 = vst.msk [vmem:[%s280 + $0x18] sm:$0xff] %vm2192, %v2131
      %2197 = vst.msk [vmem:[%s280 + $0x20] sm:$0xff] %vm2192, %v2132
      %2198 = vst.msk [vmem:[%s280 + $0x28] sm:$0xff] %vm2192, %v2133
      %2199 = vst.msk [vmem:[%s280 + $0x30] sm:$0xff] %vm2192, %v2134
      %2200 = vst.msk [vmem:[%s280 + $0x38] sm:$0xff] %vm2192, %v2135
      %2201 = vst.msk [vmem:[%s280 + $0x40] sm:$0xff] %vm2192, %v2136
      %2202 = vst.msk [vmem:[%s280 + $0x48] sm:$0xff] %vm2192, %v2137
      %2203 = vst.msk [vmem:[%s280 + $0x50] sm:$0xff] %vm2192, %v2138
      %2204 = vst.msk [vmem:[%s280 + $0x58] sm:$0xff] %vm2192, %v2139
      %2205 = vst.msk [vmem:[%s280 + $0x60] sm:$0xff] %vm2192, %v2140
      %2206 = vst.msk [vmem:[%s280 + $0x68] sm:$0xff] %vm2192, %v2141
      %2207 = vst.msk [vmem:[%s280 + $0x70] sm:$0xff] %vm2192, %v2142
      %2208 = vst.msk [vmem:[%s280 + $0x78] sm:$0xff] %vm2192, %v2143
      %2209 = vst.msk [vmem:[%s280 + $0x80] sm:$0xff] %vm2192, %v2144
      %2210 = vst.msk [vmem:[%s280 + $0x88] sm:$0xff] %vm2192, %v2145
      %2211 = vst.msk [vmem:[%s280 + $0x90] sm:$0xff] %vm2192, %v2146
      %2212 = vst.msk [vmem:[%s280 + $0x98] sm:$0xff] %vm2192, %v2147
      %2213 = vst.msk [vmem:[%s280 + $0xa0] sm:$0xff] %vm2192, %v2148
      %2214 = vst.msk [vmem:[%s280 + $0xa8] sm:$0xff] %vm2192, %v2149
      %2215 = vst.msk [vmem:[%s280 + $0xb0] sm:$0xff] %vm2192, %v2150
      %2216 = vst.msk [vmem:[%s280 + $0xb8] sm:$0xff] %vm2192, %v2151
      %2217 = vst.msk [vmem:[%s280 + $0xc0] sm:$0xff] %vm2192, %v2152
      %2218 = vst.msk [vmem:[%s280 + $0xc8] sm:$0xff] %vm2192, %v2153
      %2219 = vst.msk [vmem:[%s280 + $0xd0] sm:$0xff] %vm2192, %v2154
      %2220 = vst.msk [vmem:[%s280 + $0xd8] sm:$0xff] %vm2192, %v2155
      %2221 = vst.msk [vmem:[%s280 + $0xe0] sm:$0xff] %vm2192, %v2156
      %2222 = vst.msk [vmem:[%s280 + $0xe8] sm:$0xff] %vm2192, %v2157
      %2223 = vst.msk [vmem:[%s280 + $0xf0] sm:$0xff] %vm2192, %v2158
      %2224 = vst.msk [vmem:[%s280 + $0xf8] sm:$0xff] %vm2192, %v2159
      %2225 = vst.msk [vmem:[%s280 + $0x100] sm:$0xff] %vm2192, %v2160
      %2226 = vst.msk [vmem:[%s280 + $0x108] sm:$0xff] %vm2192, %v2161
      %2227 = vst.msk [vmem:[%s280 + $0x110] sm:$0xff] %vm2192, %v2162
      %2228 = vst.msk [vmem:[%s280 + $0x118] sm:$0xff] %vm2192, %v2163
      %2229 = vst.msk [vmem:[%s280 + $0x120] sm:$0xff] %vm2192, %v2164
      %2230 = vst.msk [vmem:[%s280 + $0x128] sm:$0xff] %vm2192, %v2165
      %2231 = vst.msk [vmem:[%s280 + $0x130] sm:$0xff] %vm2192, %v2166
      %2232 = vst.msk [vmem:[%s280 + $0x138] sm:$0xff] %vm2192, %v2167
      %2233 = vst.msk [vmem:[%s280 + $0x140] sm:$0xff] %vm2192, %v2168
      %2234 = vst.msk [vmem:[%s280 + $0x148] sm:$0xff] %vm2192, %v2169
      %2235 = vst.msk [vmem:[%s280 + $0x150] sm:$0xff] %vm2192, %v2170
      %2236 = vst.msk [vmem:[%s280 + $0x158] sm:$0xff] %vm2192, %v2171
      %2237 = vst.msk [vmem:[%s280 + $0x160] sm:$0xff] %vm2192, %v2172
      %2238 = vst.msk [vmem:[%s280 + $0x168] sm:$0xff] %vm2192, %v2173
      %2239 = vst.msk [vmem:[%s280 + $0x170] sm:$0xff] %vm2192, %v2174
      %2240 = vst.msk [vmem:[%s280 + $0x178] sm:$0xff] %vm2192, %v2175
      %2241 = vst.msk [vmem:[%s280 + $0x180] sm:$0xff] %vm2192, %v2176
      %2242 = vst.msk [vmem:[%s280 + $0x188] sm:$0xff] %vm2192, %v2177
      %2243 = vst.msk [vmem:[%s280 + $0x190] sm:$0xff] %vm2192, %v2178
      %2244 = vst.msk [vmem:[%s280 + $0x198] sm:$0xff] %vm2192, %v2179
      %2245 = vst.msk [vmem:[%s280 + $0x1a0] sm:$0xff] %vm2192, %v2180
      %2246 = vst.msk [vmem:[%s280 + $0x1a8] sm:$0xff] %vm2192, %v2181
      %2247 = vst.msk [vmem:[%s280 + $0x1b0] sm:$0xff] %vm2192, %v2182
      %2248 = vst.msk [vmem:[%s280 + $0x1b8] sm:$0xff] %vm2192, %v2183
      %2249 = vst.msk [vmem:[%s280 + $0x1c0] sm:$0xff] %vm2192, %v2184
      %2250 = vst.msk [vmem:[%s280 + $0x1c8] sm:$0xff] %vm2192, %v2185
      %2251 = vst.msk [vmem:[%s280 + $0x1d0] sm:$0xff] %vm2192, %v2186
      %2252 = vst.msk [vmem:[%s280 + $0x1d8] sm:$0xff] %vm2192, %v2187
      %2253 = vst.msk [vmem:[%s280 + $0x1e0] sm:$0xff] %vm2192, %v2188
      %2254 = vst.msk [vmem:[%s280 + $0x1e8] sm:$0xff] %vm2192, %v2189
      %2255 = vst.msk [vmem:[%s280 + $0x1f0] sm:$0xff] %vm2192, %v2190
      %2256 = vst.msk [vmem:[%s280 + $0x1f8] sm:$0xff] %vm2192, %v2191
      %s2257 = smul.u32 64, %s18
      %p2258 = scmp.lt.s32.totalorder %s2257, 127
      %s2259 = scalar_select %p2258, %s2257, 127
      %s2260 = smul.addr %s2259, 8
      %s2261 = scalar_lea.vmem %s7, %s2260
      // Predicated region
      $region49: #{image_decoder_forward.5} parent=47 // pred_check
        %p2262 = pneg %p188
      $region50: #{image_decoder_forward.5} parent=47 // pred_check_branch
        %2264 = sbr.rel (%p2262) target = $region52
      $region51: #{image_decoder_forward.5} parent=47 // pred_region
        %s2265 = smul.u32 64, %s18
      $region52: #{image_decoder_forward.5} parent=47 // pred_fallthru
        _
    $region48: #{image_decoder_forward.5} parent=5 // pred_fallthru
      _
    %p2266 = scmp.le.s32.totalorder 2, %s13
    // Predicated region
    $region53: #{image_decoder_forward.5} parent=5 // pred_check
      %p2267 = pneg %p2266
    $region54: #{image_decoder_forward.5} parent=5 // pred_check_branch
      %2269 = sbr.rel (%p2267) target = $region56
    $region55: #{image_decoder_forward.5} parent=5 // pred_region
      %s2270 = ssub.s32 %s13, 2
      // Predicated region
      $region57: #{image_decoder_forward.5} parent=55 // pred_check
        %p2271 = pneg %p194
      $region58: #{image_decoder_forward.5} parent=55 // pred_check_branch
        %2273 = sbr.rel (%p2271) target = $region60
      $region59: #{image_decoder_forward.5} parent=55 // pred_region
        %s2274 = smul.u32 64, %s19
        %p2275 = scmp.lt.s32.totalorder %s2274, 127
        %s2276 = scalar_select %p2275, %s2274, 127
        %s2277 = smul.addr %s2276, 8
        %s2278 = scalar_lea.vmem %s7, %s2277
      $region60: #{image_decoder_forward.5} parent=55 // pred_fallthru
        _
    $region56: #{image_decoder_forward.5} parent=5 // pred_fallthru
      _
  $region6: #{image_decoder_forward.5} parent=0 // loop_footer
    %s17 = sadd.s32 1, %s13
  $region7: #{image_decoder_forward.5} parent=0 // loop_footer_branch
    %12 = sbr.rel target = $region3
  $region8: #{image_decoder_forward.5} parent=0 // loop_exit
    _

</llo_original>
